<compile_context>
chip_gen: v6e
topology: v6e:2x2x1
jax: 0.10.0
libtpu: 0.0.40
codegen_flags: <defaults>
</compile_context>

<pallas_src>
import math

import jax
import jax.numpy as jnp
from jax.experimental import pallas as pl
from jax.experimental.pallas import tpu as pltpu

K = 5             # causal conv kernel_size
NEG_SLOPE = 0.01  # LeakyReLU negative slope (PyTorch default in the module)


# ----------------------------- Pallas kernel ------------------------------ #
def _sciblock_kernel(x_ref, w1_ref, b1_ref, w2_ref, b2_ref, o_ref):
    # x_ref : (1, L, 2*D)  lanes [:D] = even time steps, [D:] = odd time steps
    # w1/w2 : (4, K, D, D) per-tap conv weights, (C_in, C_out) per tap
    # b1/b2 : (4, 1, D)    biases
    # o_ref : (1, L, 2*D)  lanes [:D] = even update, [D:] = odd update
    _, L, twoD = x_ref.shape
    D = twoD // 2

    x = x_ref[0].astype(jnp.float32)        # (L, 2*D)
    # TODO(synk): for production D not a multiple of 128, pre-split / pad the
    # lane axis in the wrapper instead of this in-kernel lane-offset slice.
    xe = x[:, :D]                           # (L, D) even time steps
    xo = x[:, D:]                           # (L, D) odd  time steps

    def conv(xp, w_ref, b_ref, idx):
        # Per-tap conv:  y[t, :] = sum_k xp[t + k, :] @ W_k  + b
        # Same un-shifted LHS for every tap; only the tiny result is shifted.
        rows_out = xp.shape[0] - (K - 1)
        acc = None
        for k in range(K):
            a = jnp.dot(xp, w_ref[idx, k],
                        preferred_element_type=jnp.float32)   # (rows_in, D)
            a = a[k:k + rows_out, :]                           # sublane shift
            acc = a if acc is None else acc + a
        return acc + b_ref[idx]                                # (rows_out, D)

    def causal_block(xc, idx):
        # CausalConvBlock: ReplicationPad1d -> Conv1d -> LeakyReLU
        #                  -> Dropout(0.0) -> Conv1d -> Tanh.
        left = jnp.broadcast_to(xc[:1, :], (K - 1, D))
        right = jnp.broadcast_to(xc[L - 1:, :], (K - 1, D))
        xp = jnp.concatenate([left, xc, right], axis=0)        # (L+2(K-1), D)
        h = conv(xp, w1_ref, b1_ref, idx)                      # (L+K-1, D)
        h = jnp.where(h >= 0, h, NEG_SLOPE * h)                # LeakyReLU; Dropout(0)=id
        y = conv(h, w2_ref, b2_ref, idx)                       # (L, D)
        return jnp.tanh(y)

    xe_tmp = xe * jnp.exp(causal_block(xo, 0))   # modules_even(x_odd)
    xo_tmp = xo * jnp.exp(causal_block(xe, 1))   # modules_odd(x_even)
    oe = xe_tmp + causal_block(xo_tmp, 2)        # interactor_even
    oo = xo_tmp - causal_block(xe_tmp, 3)        # interactor_odd

    # Single lane-dense store.
    o_ref[0] = jnp.concatenate([oe, oo], axis=-1).astype(o_ref.dtype)


# ------------------------------- wrapper ----------------------------------- #
def sciblock_forward(x, kernel_params):
    """x: (B, T, D) -> (x_even_update, x_odd_update), each (B, T//2, D)."""
    B, T, D = x.shape
    assert T % 2 == 0, "SCIBlock requires an even sequence length"
    L = T // 2

    # Free reshape: (B, T, D) -> (B, L, 2*D); lanes [:D] = even steps,
    # lanes [D:] = odd steps.  No strided HBM copies before the pallas_call.
    xr = x.reshape(B, L, 2 * D)

    w1, b1, w2, b2 = kernel_params   # (4,K,D,D), (4,1,D), (4,K,D,D), (4,1,D)

    x_spec = pl.BlockSpec((1, L, 2 * D), lambda i: (i, 0, 0))
    o_spec = pl.BlockSpec((1, L, 2 * D), lambda i: (i, 0, 0))
    # Constants: whole array resident in VMEM, single-buffered (no pipelining).
    const_spec = pl.BlockSpec(memory_space=pltpu.MemorySpace.VMEM)

    out = pl.pallas_call(
        _sciblock_kernel,
        out_shape=jax.ShapeDtypeStruct((B, L, 2 * D), x.dtype),
        grid=(B,),
        in_specs=[x_spec, const_spec, const_spec, const_spec, const_spec],
        out_specs=o_spec,
        compiler_params=pltpu.CompilerParams(
            dimension_semantics=("parallel",),
            vmem_limit_bytes=32 * 1024 * 1024),
    )(xr, w1, b1, w2, b2)

    # Split the lane-dense kernel output back into the module's two outputs.
    return out[..., :D], out[..., D:]


# --------------------- deterministic parameter init ----------------------- #
def init_params(key, d_model):
    """Returns (torch_layout_params, kernel_layout_params).

    torch layout per conv: weight (C_out, C_in, K), bias (C_out,)
    kernel layout: per-tap W (4, K, C_in, C_out), bias (4, 1, C_out)
    """
    keys = jax.random.split(key, 16)
    bound = 1.0 / math.sqrt(d_model * K)   # PyTorch Conv1d default init bound
    torch_params = []
    i = 0
    for _ in range(4):
        w1 = jax.random.uniform(keys[i], (d_model, d_model, K), jnp.float32,
                                -bound, bound); i += 1
        b1 = jax.random.uniform(keys[i], (d_model,), jnp.float32,
                                -bound, bound); i += 1
        w2 = jax.random.uniform(keys[i], (d_model, d_model, K), jnp.float32,
                                -bound, bound); i += 1
        b2 = jax.random.uniform(keys[i], (d_model,), jnp.float32,
                                -bound, bound); i += 1
        torch_params.append((w1, b1, w2, b2))

    def fold(w_torch):  # (C_out, C_in, K) -> (K, C_in, C_out)
        return jnp.transpose(w_torch, (2, 1, 0))

    W1 = jnp.stack([fold(p[0]) for p in torch_params])        # (4, K, D, D)
    B1 = jnp.stack([p[1][None, :] for p in torch_params])     # (4, 1, D)
    W2 = jnp.stack([fold(p[2]) for p in torch_params])
    B2 = jnp.stack([p[3][None, :] for p in torch_params])
    return torch_params, (W1, B1, W2, B2)


# ----------------------- pure-JAX reference (check) ----------------------- #
def _causal_block_ref(x_bdl, w1, b1, w2, b2):
    pad = K - 1
    xp = jnp.concatenate([jnp.repeat(x_bdl[:, :, :1], pad, axis=2), x_bdl,
                          jnp.repeat(x_bdl[:, :, -1:], pad, axis=2)], axis=2)
    dn = ("NCH", "OIH", "NCH")
    h = jax.lax.conv_general_dilated(xp, w1, (1,), "VALID",
                                     dimension_numbers=dn) + b1[None, :, None]
    h = jnp.where(h >= 0, h, NEG_SLOPE * h)
    h = jax.lax.conv_general_dilated(h, w2, (1,), "VALID",
                                     dimension_numbers=dn) + b2[None, :, None]
    return jnp.tanh(h)


def sciblock_ref(x, torch_params):
    x_even = jnp.transpose(x[:, ::2, :], (0, 2, 1))   # (B, D, L)
    x_odd = jnp.transpose(x[:, 1::2, :], (0, 2, 1))
    me, mo, ie, io = torch_params
    xe_t = x_even * jnp.exp(_causal_block_ref(x_odd, *me))
    xo_t = x_odd * jnp.exp(_causal_block_ref(x_even, *mo))
    xe_u = xe_t + _causal_block_ref(xo_t, *ie)
    xo_u = xo_t - _causal_block_ref(xe_t, *io)
    return jnp.transpose(xe_u, (0, 2, 1)), jnp.transpose(xo_u, (0, 2, 1))


# --------------------------------- main ------------------------------------ #
if __name__ == "__main__":
    B, T, D = 2, 16, 32   # batch, sequence length (even), d_model
    root = jax.random.PRNGKey(0)
    kx, kp = jax.random.split(root)
    x = jax.random.normal(kx, (B, T, D), dtype=jnp.float32)

    torch_params, kernel_params = init_params(kp, D)

    out_even, out_odd = sciblock_forward(x, kernel_params)
    jax.block_until_ready((out_even, out_odd))

    ref_even, ref_odd = sciblock_ref(x, torch_params)
    assert out_even.shape == (B, T // 2, D) and out_odd.shape == (B, T // 2, D)
    assert jnp.allclose(out_even, ref_even, atol=1e-4, rtol=1e-4)
    assert jnp.allclose(out_odd, ref_odd, atol=1e-4, rtol=1e-4)

    print("KERNEL_OK")
</pallas_src>

<mosaic_0001>
module attributes {stable_mosaic.version = 11 : i64} {
  func.func @_sciblock_kernel(%arg0: i32, %arg1: memref<1x8x64xf32, #tpu.memory_space<vmem>>, %arg2: memref<4x5x32x32xf32, #tpu.memory_space<vmem>>, %arg3: memref<4x1x32xf32, #tpu.memory_space<vmem>>, %arg4: memref<4x5x32x32xf32, #tpu.memory_space<vmem>>, %arg5: memref<4x1x32xf32, #tpu.memory_space<vmem>>, %arg6: memref<1x8x64xf32, #tpu.memory_space<vmem>>) attributes {dimension_semantics = [#tpu.dimension_semantics<parallel>], iteration_bounds = array<i64: 2>, scalar_prefetch = 0 : i64, scratch_operands = 0 : i64, tpu.core_type = #tpu.core_type<tc>, window_params = [{transform_indices = @transform_0, window_bounds = array<i64: 1, 8, 64>}, {pipeline_mode = #tpu.pipeline_mode<synchronous>, transform_indices = @transform_1, window_bounds = array<i64: 4, 5, 32, 32>}, {pipeline_mode = #tpu.pipeline_mode<synchronous>, transform_indices = @transform_2, window_bounds = array<i64: 4, 1, 32>}, {pipeline_mode = #tpu.pipeline_mode<synchronous>, transform_indices = @transform_3, window_bounds = array<i64: 4, 5, 32, 32>}, {pipeline_mode = #tpu.pipeline_mode<synchronous>, transform_indices = @transform_4, window_bounds = array<i64: 4, 1, 32>}, {transform_indices = @transform_5, window_bounds = array<i64: 1, 8, 64>}]} {
    %c0 = arith.constant 0 : index
    %c0_0 = arith.constant 0 : index
    %c0_1 = arith.constant 0 : index
    %0 = vector.load %arg1[%c0, %c0_0, %c0_1] : memref<1x8x64xf32, #tpu.memory_space<vmem>>, vector<1x8x64xf32>
    %1 = vector.shape_cast %0 : vector<1x8x64xf32> to vector<8x64xf32>
    %2 = vector.extract_strided_slice %1 {offsets = [0, 0], sizes = [8, 32], strides = [1, 1]} : vector<8x64xf32> to vector<8x32xf32>
    %3 = vector.extract_strided_slice %1 {offsets = [0, 32], sizes = [8, 32], strides = [1, 1]} : vector<8x64xf32> to vector<8x32xf32>
    %4 = vector.extract_strided_slice %3 {offsets = [0, 0], sizes = [1, 32], strides = [1, 1]} : vector<8x32xf32> to vector<1x32xf32>
    %5 = vector.shape_cast %4 : vector<1x32xf32> to vector<1x32xf32>
    %6 = vector.broadcast %5 : vector<1x32xf32> to vector<4x32xf32>
    %7 = vector.extract_strided_slice %3 {offsets = [7, 0], sizes = [1, 32], strides = [1, 1]} : vector<8x32xf32> to vector<1x32xf32>
    %8 = vector.shape_cast %7 : vector<1x32xf32> to vector<1x32xf32>
    %9 = vector.broadcast %8 : vector<1x32xf32> to vector<4x32xf32>
    %10 = tpu.concatenate %6, %3, %9 in 0 : vector<4x32xf32>, vector<8x32xf32>, vector<4x32xf32> -> vector<16x32xf32>
    %c0_2 = arith.constant 0 : index
    %c0_3 = arith.constant 0 : index
    %c0_4 = arith.constant 0 : index
    %c0_5 = arith.constant 0 : index
    %11 = vector.load %arg2[%c0_2, %c0_3, %c0_4, %c0_5] : memref<4x5x32x32xf32, #tpu.memory_space<vmem>>, vector<1x1x32x32xf32>
    %12 = vector.shape_cast %11 : vector<1x1x32x32xf32> to vector<32x32xf32>
    %cst = arith.constant dense<0.000000e+00> : vector<16x32xf32>
    %13 = tpu.matmul %10, %12, %cst {dimension_numbers = #tpu.dot_dimension_numbers<[1], [0], [0], [1], [0, 0, 1, 1], [], []>} : vector<16x32xf32>, vector<32x32xf32>, vector<16x32xf32> -> vector<16x32xf32>
    %14 = vector.extract_strided_slice %13 {offsets = [0, 0], sizes = [12, 32], strides = [1, 1]} : vector<16x32xf32> to vector<12x32xf32>
    %c0_6 = arith.constant 0 : index
    %c1 = arith.constant 1 : index
    %c0_7 = arith.constant 0 : index
    %c0_8 = arith.constant 0 : index
    %15 = vector.load %arg2[%c0_6, %c1, %c0_7, %c0_8] : memref<4x5x32x32xf32, #tpu.memory_space<vmem>>, vector<1x1x32x32xf32>
    %16 = vector.shape_cast %15 : vector<1x1x32x32xf32> to vector<32x32xf32>
    %cst_9 = arith.constant dense<0.000000e+00> : vector<16x32xf32>
    %17 = tpu.matmul %10, %16, %cst_9 {dimension_numbers = #tpu.dot_dimension_numbers<[1], [0], [0], [1], [0, 0, 1, 1], [], []>} : vector<16x32xf32>, vector<32x32xf32>, vector<16x32xf32> -> vector<16x32xf32>
    %18 = vector.extract_strided_slice %17 {offsets = [1, 0], sizes = [12, 32], strides = [1, 1]} : vector<16x32xf32> to vector<12x32xf32>
    %19 = arith.addf %14, %18 : vector<12x32xf32>
    %c0_10 = arith.constant 0 : index
    %c2 = arith.constant 2 : index
    %c0_11 = arith.constant 0 : index
    %c0_12 = arith.constant 0 : index
    %20 = vector.load %arg2[%c0_10, %c2, %c0_11, %c0_12] : memref<4x5x32x32xf32, #tpu.memory_space<vmem>>, vector<1x1x32x32xf32>
    %21 = vector.shape_cast %20 : vector<1x1x32x32xf32> to vector<32x32xf32>
    %cst_13 = arith.constant dense<0.000000e+00> : vector<16x32xf32>
    %22 = tpu.matmul %10, %21, %cst_13 {dimension_numbers = #tpu.dot_dimension_numbers<[1], [0], [0], [1], [0, 0, 1, 1], [], []>} : vector<16x32xf32>, vector<32x32xf32>, vector<16x32xf32> -> vector<16x32xf32>
    %23 = vector.extract_strided_slice %22 {offsets = [2, 0], sizes = [12, 32], strides = [1, 1]} : vector<16x32xf32> to vector<12x32xf32>
    %24 = arith.addf %19, %23 : vector<12x32xf32>
    %c0_14 = arith.constant 0 : index
    %c3 = arith.constant 3 : index
    %c0_15 = arith.constant 0 : index
    %c0_16 = arith.constant 0 : index
    %25 = vector.load %arg2[%c0_14, %c3, %c0_15, %c0_16] : memref<4x5x32x32xf32, #tpu.memory_space<vmem>>, vector<1x1x32x32xf32>
    %26 = vector.shape_cast %25 : vector<1x1x32x32xf32> to vector<32x32xf32>
    %cst_17 = arith.constant dense<0.000000e+00> : vector<16x32xf32>
    %27 = tpu.matmul %10, %26, %cst_17 {dimension_numbers = #tpu.dot_dimension_numbers<[1], [0], [0], [1], [0, 0, 1, 1], [], []>} : vector<16x32xf32>, vector<32x32xf32>, vector<16x32xf32> -> vector<16x32xf32>
    %28 = vector.extract_strided_slice %27 {offsets = [3, 0], sizes = [12, 32], strides = [1, 1]} : vector<16x32xf32> to vector<12x32xf32>
    %29 = arith.addf %24, %28 : vector<12x32xf32>
    %c0_18 = arith.constant 0 : index
    %c4 = arith.constant 4 : index
    %c0_19 = arith.constant 0 : index
    %c0_20 = arith.constant 0 : index
    %30 = vector.load %arg2[%c0_18, %c4, %c0_19, %c0_20] : memref<4x5x32x32xf32, #tpu.memory_space<vmem>>, vector<1x1x32x32xf32>
    %31 = vector.shape_cast %30 : vector<1x1x32x32xf32> to vector<32x32xf32>
    %cst_21 = arith.constant dense<0.000000e+00> : vector<16x32xf32>
    %32 = tpu.matmul %10, %31, %cst_21 {dimension_numbers = #tpu.dot_dimension_numbers<[1], [0], [0], [1], [0, 0, 1, 1], [], []>} : vector<16x32xf32>, vector<32x32xf32>, vector<16x32xf32> -> vector<16x32xf32>
    %33 = vector.extract_strided_slice %32 {offsets = [4, 0], sizes = [12, 32], strides = [1, 1]} : vector<16x32xf32> to vector<12x32xf32>
    %34 = arith.addf %29, %33 : vector<12x32xf32>
    %c0_22 = arith.constant 0 : index
    %c0_23 = arith.constant 0 : index
    %c0_24 = arith.constant 0 : index
    %35 = vector.load %arg3[%c0_22, %c0_23, %c0_24] : memref<4x1x32xf32, #tpu.memory_space<vmem>>, vector<1x1x32xf32>
    %36 = vector.shape_cast %35 : vector<1x1x32xf32> to vector<1x32xf32>
    %37 = vector.broadcast %36 : vector<1x32xf32> to vector<12x32xf32>
    %38 = arith.addf %34, %37 : vector<12x32xf32>
    %cst_25 = arith.constant 0.000000e+00 : f32
    %39 = vector.broadcast %cst_25 : f32 to vector<12x32xf32>
    %40 = arith.cmpf oge, %38, %39 : vector<12x32xf32>
    %cst_26 = arith.constant 0.00999999977 : f32
    %41 = vector.broadcast %cst_26 : f32 to vector<12x32xf32>
    %42 = arith.mulf %41, %38 : vector<12x32xf32>
    %43 = arith.select %40, %38, %42 : vector<12x32xi1>, vector<12x32xf32>
    %c0_27 = arith.constant 0 : index
    %c0_28 = arith.constant 0 : index
    %c0_29 = arith.constant 0 : index
    %c0_30 = arith.constant 0 : index
    %44 = vector.load %arg4[%c0_27, %c0_28, %c0_29, %c0_30] : memref<4x5x32x32xf32, #tpu.memory_space<vmem>>, vector<1x1x32x32xf32>
    %45 = vector.shape_cast %44 : vector<1x1x32x32xf32> to vector<32x32xf32>
    %cst_31 = arith.constant dense<0.000000e+00> : vector<12x32xf32>
    %46 = tpu.matmul %43, %45, %cst_31 {dimension_numbers = #tpu.dot_dimension_numbers<[1], [0], [0], [1], [0, 0, 1, 1], [], []>} : vector<12x32xf32>, vector<32x32xf32>, vector<12x32xf32> -> vector<12x32xf32>
    %47 = vector.extract_strided_slice %46 {offsets = [0, 0], sizes = [8, 32], strides = [1, 1]} : vector<12x32xf32> to vector<8x32xf32>
    %c0_32 = arith.constant 0 : index
    %c1_33 = arith.constant 1 : index
    %c0_34 = arith.constant 0 : index
    %c0_35 = arith.constant 0 : index
    %48 = vector.load %arg4[%c0_32, %c1_33, %c0_34, %c0_35] : memref<4x5x32x32xf32, #tpu.memory_space<vmem>>, vector<1x1x32x32xf32>
    %49 = vector.shape_cast %48 : vector<1x1x32x32xf32> to vector<32x32xf32>
    %cst_36 = arith.constant dense<0.000000e+00> : vector<12x32xf32>
    %50 = tpu.matmul %43, %49, %cst_36 {dimension_numbers = #tpu.dot_dimension_numbers<[1], [0], [0], [1], [0, 0, 1, 1], [], []>} : vector<12x32xf32>, vector<32x32xf32>, vector<12x32xf32> -> vector<12x32xf32>
    %51 = vector.extract_strided_slice %50 {offsets = [1, 0], sizes = [8, 32], strides = [1, 1]} : vector<12x32xf32> to vector<8x32xf32>
    %52 = arith.addf %47, %51 : vector<8x32xf32>
    %c0_37 = arith.constant 0 : index
    %c2_38 = arith.constant 2 : index
    %c0_39 = arith.constant 0 : index
    %c0_40 = arith.constant 0 : index
    %53 = vector.load %arg4[%c0_37, %c2_38, %c0_39, %c0_40] : memref<4x5x32x32xf32, #tpu.memory_space<vmem>>, vector<1x1x32x32xf32>
    %54 = vector.shape_cast %53 : vector<1x1x32x32xf32> to vector<32x32xf32>
    %cst_41 = arith.constant dense<0.000000e+00> : vector<12x32xf32>
    %55 = tpu.matmul %43, %54, %cst_41 {dimension_numbers = #tpu.dot_dimension_numbers<[1], [0], [0], [1], [0, 0, 1, 1], [], []>} : vector<12x32xf32>, vector<32x32xf32>, vector<12x32xf32> -> vector<12x32xf32>
    %56 = vector.extract_strided_slice %55 {offsets = [2, 0], sizes = [8, 32], strides = [1, 1]} : vector<12x32xf32> to vector<8x32xf32>
    %57 = arith.addf %52, %56 : vector<8x32xf32>
    %c0_42 = arith.constant 0 : index
    %c3_43 = arith.constant 3 : index
    %c0_44 = arith.constant 0 : index
    %c0_45 = arith.constant 0 : index
    %58 = vector.load %arg4[%c0_42, %c3_43, %c0_44, %c0_45] : memref<4x5x32x32xf32, #tpu.memory_space<vmem>>, vector<1x1x32x32xf32>
    %59 = vector.shape_cast %58 : vector<1x1x32x32xf32> to vector<32x32xf32>
    %cst_46 = arith.constant dense<0.000000e+00> : vector<12x32xf32>
    %60 = tpu.matmul %43, %59, %cst_46 {dimension_numbers = #tpu.dot_dimension_numbers<[1], [0], [0], [1], [0, 0, 1, 1], [], []>} : vector<12x32xf32>, vector<32x32xf32>, vector<12x32xf32> -> vector<12x32xf32>
    %61 = vector.extract_strided_slice %60 {offsets = [3, 0], sizes = [8, 32], strides = [1, 1]} : vector<12x32xf32> to vector<8x32xf32>
    %62 = arith.addf %57, %61 : vector<8x32xf32>
    %c0_47 = arith.constant 0 : index
    %c4_48 = arith.constant 4 : index
    %c0_49 = arith.constant 0 : index
    %c0_50 = arith.constant 0 : index
    %63 = vector.load %arg4[%c0_47, %c4_48, %c0_49, %c0_50] : memref<4x5x32x32xf32, #tpu.memory_space<vmem>>, vector<1x1x32x32xf32>
    %64 = vector.shape_cast %63 : vector<1x1x32x32xf32> to vector<32x32xf32>
    %cst_51 = arith.constant dense<0.000000e+00> : vector<12x32xf32>
    %65 = tpu.matmul %43, %64, %cst_51 {dimension_numbers = #tpu.dot_dimension_numbers<[1], [0], [0], [1], [0, 0, 1, 1], [], []>} : vector<12x32xf32>, vector<32x32xf32>, vector<12x32xf32> -> vector<12x32xf32>
    %66 = vector.extract_strided_slice %65 {offsets = [4, 0], sizes = [8, 32], strides = [1, 1]} : vector<12x32xf32> to vector<8x32xf32>
    %67 = arith.addf %62, %66 : vector<8x32xf32>
    %c0_52 = arith.constant 0 : index
    %c0_53 = arith.constant 0 : index
    %c0_54 = arith.constant 0 : index
    %68 = vector.load %arg5[%c0_52, %c0_53, %c0_54] : memref<4x1x32xf32, #tpu.memory_space<vmem>>, vector<1x1x32xf32>
    %69 = vector.shape_cast %68 : vector<1x1x32xf32> to vector<1x32xf32>
    %70 = vector.broadcast %69 : vector<1x32xf32> to vector<8x32xf32>
    %71 = arith.addf %67, %70 : vector<8x32xf32>
    %72 = math.tanh %71 : vector<8x32xf32>
    %73 = math.exp %72 : vector<8x32xf32>
    %74 = arith.mulf %2, %73 : vector<8x32xf32>
    %75 = vector.extract_strided_slice %2 {offsets = [0, 0], sizes = [1, 32], strides = [1, 1]} : vector<8x32xf32> to vector<1x32xf32>
    %76 = vector.shape_cast %75 : vector<1x32xf32> to vector<1x32xf32>
    %77 = vector.broadcast %76 : vector<1x32xf32> to vector<4x32xf32>
    %78 = vector.extract_strided_slice %2 {offsets = [7, 0], sizes = [1, 32], strides = [1, 1]} : vector<8x32xf32> to vector<1x32xf32>
    %79 = vector.shape_cast %78 : vector<1x32xf32> to vector<1x32xf32>
    %80 = vector.broadcast %79 : vector<1x32xf32> to vector<4x32xf32>
    %81 = tpu.concatenate %77, %2, %80 in 0 : vector<4x32xf32>, vector<8x32xf32>, vector<4x32xf32> -> vector<16x32xf32>
    %c1_55 = arith.constant 1 : index
    %c0_56 = arith.constant 0 : index
    %c0_57 = arith.constant 0 : index
    %c0_58 = arith.constant 0 : index
    %82 = vector.load %arg2[%c1_55, %c0_56, %c0_57, %c0_58] : memref<4x5x32x32xf32, #tpu.memory_space<vmem>>, vector<1x1x32x32xf32>
    %83 = vector.shape_cast %82 : vector<1x1x32x32xf32> to vector<32x32xf32>
    %cst_59 = arith.constant dense<0.000000e+00> : vector<16x32xf32>
    %84 = tpu.matmul %81, %83, %cst_59 {dimension_numbers = #tpu.dot_dimension_numbers<[1], [0], [0], [1], [0, 0, 1, 1], [], []>} : vector<16x32xf32>, vector<32x32xf32>, vector<16x32xf32> -> vector<16x32xf32>
    %85 = vector.extract_strided_slice %84 {offsets = [0, 0], sizes = [12, 32], strides = [1, 1]} : vector<16x32xf32> to vector<12x32xf32>
    %c1_60 = arith.constant 1 : index
    %c1_61 = arith.constant 1 : index
    %c0_62 = arith.constant 0 : index
    %c0_63 = arith.constant 0 : index
    %86 = vector.load %arg2[%c1_60, %c1_61, %c0_62, %c0_63] : memref<4x5x32x32xf32, #tpu.memory_space<vmem>>, vector<1x1x32x32xf32>
    %87 = vector.shape_cast %86 : vector<1x1x32x32xf32> to vector<32x32xf32>
    %cst_64 = arith.constant dense<0.000000e+00> : vector<16x32xf32>
    %88 = tpu.matmul %81, %87, %cst_64 {dimension_numbers = #tpu.dot_dimension_numbers<[1], [0], [0], [1], [0, 0, 1, 1], [], []>} : vector<16x32xf32>, vector<32x32xf32>, vector<16x32xf32> -> vector<16x32xf32>
    %89 = vector.extract_strided_slice %88 {offsets = [1, 0], sizes = [12, 32], strides = [1, 1]} : vector<16x32xf32> to vector<12x32xf32>
    %90 = arith.addf %85, %89 : vector<12x32xf32>
    %c1_65 = arith.constant 1 : index
    %c2_66 = arith.constant 2 : index
    %c0_67 = arith.constant 0 : index
    %c0_68 = arith.constant 0 : index
    %91 = vector.load %arg2[%c1_65, %c2_66, %c0_67, %c0_68] : memref<4x5x32x32xf32, #tpu.memory_space<vmem>>, vector<1x1x32x32xf32>
    %92 = vector.shape_cast %91 : vector<1x1x32x32xf32> to vector<32x32xf32>
    %cst_69 = arith.constant dense<0.000000e+00> : vector<16x32xf32>
    %93 = tpu.matmul %81, %92, %cst_69 {dimension_numbers = #tpu.dot_dimension_numbers<[1], [0], [0], [1], [0, 0, 1, 1], [], []>} : vector<16x32xf32>, vector<32x32xf32>, vector<16x32xf32> -> vector<16x32xf32>
    %94 = vector.extract_strided_slice %93 {offsets = [2, 0], sizes = [12, 32], strides = [1, 1]} : vector<16x32xf32> to vector<12x32xf32>
    %95 = arith.addf %90, %94 : vector<12x32xf32>
    %c1_70 = arith.constant 1 : index
    %c3_71 = arith.constant 3 : index
    %c0_72 = arith.constant 0 : index
    %c0_73 = arith.constant 0 : index
    %96 = vector.load %arg2[%c1_70, %c3_71, %c0_72, %c0_73] : memref<4x5x32x32xf32, #tpu.memory_space<vmem>>, vector<1x1x32x32xf32>
    %97 = vector.shape_cast %96 : vector<1x1x32x32xf32> to vector<32x32xf32>
    %cst_74 = arith.constant dense<0.000000e+00> : vector<16x32xf32>
    %98 = tpu.matmul %81, %97, %cst_74 {dimension_numbers = #tpu.dot_dimension_numbers<[1], [0], [0], [1], [0, 0, 1, 1], [], []>} : vector<16x32xf32>, vector<32x32xf32>, vector<16x32xf32> -> vector<16x32xf32>
    %99 = vector.extract_strided_slice %98 {offsets = [3, 0], sizes = [12, 32], strides = [1, 1]} : vector<16x32xf32> to vector<12x32xf32>
    %100 = arith.addf %95, %99 : vector<12x32xf32>
    %c1_75 = arith.constant 1 : index
    %c4_76 = arith.constant 4 : index
    %c0_77 = arith.constant 0 : index
    %c0_78 = arith.constant 0 : index
    %101 = vector.load %arg2[%c1_75, %c4_76, %c0_77, %c0_78] : memref<4x5x32x32xf32, #tpu.memory_space<vmem>>, vector<1x1x32x32xf32>
    %102 = vector.shape_cast %101 : vector<1x1x32x32xf32> to vector<32x32xf32>
    %cst_79 = arith.constant dense<0.000000e+00> : vector<16x32xf32>
    %103 = tpu.matmul %81, %102, %cst_79 {dimension_numbers = #tpu.dot_dimension_numbers<[1], [0], [0], [1], [0, 0, 1, 1], [], []>} : vector<16x32xf32>, vector<32x32xf32>, vector<16x32xf32> -> vector<16x32xf32>
    %104 = vector.extract_strided_slice %103 {offsets = [4, 0], sizes = [12, 32], strides = [1, 1]} : vector<16x32xf32> to vector<12x32xf32>
    %105 = arith.addf %100, %104 : vector<12x32xf32>
    %c1_80 = arith.constant 1 : index
    %c0_81 = arith.constant 0 : index
    %c0_82 = arith.constant 0 : index
    %106 = vector.load %arg3[%c1_80, %c0_81, %c0_82] : memref<4x1x32xf32, #tpu.memory_space<vmem>>, vector<1x1x32xf32>
    %107 = vector.shape_cast %106 : vector<1x1x32xf32> to vector<1x32xf32>
    %108 = vector.broadcast %107 : vector<1x32xf32> to vector<12x32xf32>
    %109 = arith.addf %105, %108 : vector<12x32xf32>
    %cst_83 = arith.constant 0.000000e+00 : f32
    %110 = vector.broadcast %cst_83 : f32 to vector<12x32xf32>
    %111 = arith.cmpf oge, %109, %110 : vector<12x32xf32>
    %cst_84 = arith.constant 0.00999999977 : f32
    %112 = vector.broadcast %cst_84 : f32 to vector<12x32xf32>
    %113 = arith.mulf %112, %109 : vector<12x32xf32>
    %114 = arith.select %111, %109, %113 : vector<12x32xi1>, vector<12x32xf32>
    %c1_85 = arith.constant 1 : index
    %c0_86 = arith.constant 0 : index
    %c0_87 = arith.constant 0 : index
    %c0_88 = arith.constant 0 : index
    %115 = vector.load %arg4[%c1_85, %c0_86, %c0_87, %c0_88] : memref<4x5x32x32xf32, #tpu.memory_space<vmem>>, vector<1x1x32x32xf32>
    %116 = vector.shape_cast %115 : vector<1x1x32x32xf32> to vector<32x32xf32>
    %cst_89 = arith.constant dense<0.000000e+00> : vector<12x32xf32>
    %117 = tpu.matmul %114, %116, %cst_89 {dimension_numbers = #tpu.dot_dimension_numbers<[1], [0], [0], [1], [0, 0, 1, 1], [], []>} : vector<12x32xf32>, vector<32x32xf32>, vector<12x32xf32> -> vector<12x32xf32>
    %118 = vector.extract_strided_slice %117 {offsets = [0, 0], sizes = [8, 32], strides = [1, 1]} : vector<12x32xf32> to vector<8x32xf32>
    %c1_90 = arith.constant 1 : index
    %c1_91 = arith.constant 1 : index
    %c0_92 = arith.constant 0 : index
    %c0_93 = arith.constant 0 : index
    %119 = vector.load %arg4[%c1_90, %c1_91, %c0_92, %c0_93] : memref<4x5x32x32xf32, #tpu.memory_space<vmem>>, vector<1x1x32x32xf32>
    %120 = vector.shape_cast %119 : vector<1x1x32x32xf32> to vector<32x32xf32>
    %cst_94 = arith.constant dense<0.000000e+00> : vector<12x32xf32>
    %121 = tpu.matmul %114, %120, %cst_94 {dimension_numbers = #tpu.dot_dimension_numbers<[1], [0], [0], [1], [0, 0, 1, 1], [], []>} : vector<12x32xf32>, vector<32x32xf32>, vector<12x32xf32> -> vector<12x32xf32>
    %122 = vector.extract_strided_slice %121 {offsets = [1, 0], sizes = [8, 32], strides = [1, 1]} : vector<12x32xf32> to vector<8x32xf32>
    %123 = arith.addf %118, %122 : vector<8x32xf32>
    %c1_95 = arith.constant 1 : index
    %c2_96 = arith.constant 2 : index
    %c0_97 = arith.constant 0 : index
    %c0_98 = arith.constant 0 : index
    %124 = vector.load %arg4[%c1_95, %c2_96, %c0_97, %c0_98] : memref<4x5x32x32xf32, #tpu.memory_space<vmem>>, vector<1x1x32x32xf32>
    %125 = vector.shape_cast %124 : vector<1x1x32x32xf32> to vector<32x32xf32>
    %cst_99 = arith.constant dense<0.000000e+00> : vector<12x32xf32>
    %126 = tpu.matmul %114, %125, %cst_99 {dimension_numbers = #tpu.dot_dimension_numbers<[1], [0], [0], [1], [0, 0, 1, 1], [], []>} : vector<12x32xf32>, vector<32x32xf32>, vector<12x32xf32> -> vector<12x32xf32>
    %127 = vector.extract_strided_slice %126 {offsets = [2, 0], sizes = [8, 32], strides = [1, 1]} : vector<12x32xf32> to vector<8x32xf32>
    %128 = arith.addf %123, %127 : vector<8x32xf32>
    %c1_100 = arith.constant 1 : index
    %c3_101 = arith.constant 3 : index
    %c0_102 = arith.constant 0 : index
    %c0_103 = arith.constant 0 : index
    %129 = vector.load %arg4[%c1_100, %c3_101, %c0_102, %c0_103] : memref<4x5x32x32xf32, #tpu.memory_space<vmem>>, vector<1x1x32x32xf32>
    %130 = vector.shape_cast %129 : vector<1x1x32x32xf32> to vector<32x32xf32>
    %cst_104 = arith.constant dense<0.000000e+00> : vector<12x32xf32>
    %131 = tpu.matmul %114, %130, %cst_104 {dimension_numbers = #tpu.dot_dimension_numbers<[1], [0], [0], [1], [0, 0, 1, 1], [], []>} : vector<12x32xf32>, vector<32x32xf32>, vector<12x32xf32> -> vector<12x32xf32>
    %132 = vector.extract_strided_slice %131 {offsets = [3, 0], sizes = [8, 32], strides = [1, 1]} : vector<12x32xf32> to vector<8x32xf32>
    %133 = arith.addf %128, %132 : vector<8x32xf32>
    %c1_105 = arith.constant 1 : index
    %c4_106 = arith.constant 4 : index
    %c0_107 = arith.constant 0 : index
    %c0_108 = arith.constant 0 : index
    %134 = vector.load %arg4[%c1_105, %c4_106, %c0_107, %c0_108] : memref<4x5x32x32xf32, #tpu.memory_space<vmem>>, vector<1x1x32x32xf32>
    %135 = vector.shape_cast %134 : vector<1x1x32x32xf32> to vector<32x32xf32>
    %cst_109 = arith.constant dense<0.000000e+00> : vector<12x32xf32>
    %136 = tpu.matmul %114, %135, %cst_109 {dimension_numbers = #tpu.dot_dimension_numbers<[1], [0], [0], [1], [0, 0, 1, 1], [], []>} : vector<12x32xf32>, vector<32x32xf32>, vector<12x32xf32> -> vector<12x32xf32>
    %137 = vector.extract_strided_slice %136 {offsets = [4, 0], sizes = [8, 32], strides = [1, 1]} : vector<12x32xf32> to vector<8x32xf32>
    %138 = arith.addf %133, %137 : vector<8x32xf32>
    %c1_110 = arith.constant 1 : index
    %c0_111 = arith.constant 0 : index
    %c0_112 = arith.constant 0 : index
    %139 = vector.load %arg5[%c1_110, %c0_111, %c0_112] : memref<4x1x32xf32, #tpu.memory_space<vmem>>, vector<1x1x32xf32>
    %140 = vector.shape_cast %139 : vector<1x1x32xf32> to vector<1x32xf32>
    %141 = vector.broadcast %140 : vector<1x32xf32> to vector<8x32xf32>
    %142 = arith.addf %138, %141 : vector<8x32xf32>
    %143 = math.tanh %142 : vector<8x32xf32>
    %144 = math.exp %143 : vector<8x32xf32>
    %145 = arith.mulf %3, %144 : vector<8x32xf32>
    %146 = vector.extract_strided_slice %145 {offsets = [0, 0], sizes = [1, 32], strides = [1, 1]} : vector<8x32xf32> to vector<1x32xf32>
    %147 = vector.shape_cast %146 : vector<1x32xf32> to vector<1x32xf32>
    %148 = vector.broadcast %147 : vector<1x32xf32> to vector<4x32xf32>
    %149 = vector.extract_strided_slice %145 {offsets = [7, 0], sizes = [1, 32], strides = [1, 1]} : vector<8x32xf32> to vector<1x32xf32>
    %150 = vector.shape_cast %149 : vector<1x32xf32> to vector<1x32xf32>
    %151 = vector.broadcast %150 : vector<1x32xf32> to vector<4x32xf32>
    %152 = tpu.concatenate %148, %145, %151 in 0 : vector<4x32xf32>, vector<8x32xf32>, vector<4x32xf32> -> vector<16x32xf32>
    %c2_113 = arith.constant 2 : index
    %c0_114 = arith.constant 0 : index
    %c0_115 = arith.constant 0 : index
    %c0_116 = arith.constant 0 : index
    %153 = vector.load %arg2[%c2_113, %c0_114, %c0_115, %c0_116] : memref<4x5x32x32xf32, #tpu.memory_space<vmem>>, vector<1x1x32x32xf32>
    %154 = vector.shape_cast %153 : vector<1x1x32x32xf32> to vector<32x32xf32>
    %cst_117 = arith.constant dense<0.000000e+00> : vector<16x32xf32>
    %155 = tpu.matmul %152, %154, %cst_117 {dimension_numbers = #tpu.dot_dimension_numbers<[1], [0], [0], [1], [0, 0, 1, 1], [], []>} : vector<16x32xf32>, vector<32x32xf32>, vector<16x32xf32> -> vector<16x32xf32>
    %156 = vector.extract_strided_slice %155 {offsets = [0, 0], sizes = [12, 32], strides = [1, 1]} : vector<16x32xf32> to vector<12x32xf32>
    %c2_118 = arith.constant 2 : index
    %c1_119 = arith.constant 1 : index
    %c0_120 = arith.constant 0 : index
    %c0_121 = arith.constant 0 : index
    %157 = vector.load %arg2[%c2_118, %c1_119, %c0_120, %c0_121] : memref<4x5x32x32xf32, #tpu.memory_space<vmem>>, vector<1x1x32x32xf32>
    %158 = vector.shape_cast %157 : vector<1x1x32x32xf32> to vector<32x32xf32>
    %cst_122 = arith.constant dense<0.000000e+00> : vector<16x32xf32>
    %159 = tpu.matmul %152, %158, %cst_122 {dimension_numbers = #tpu.dot_dimension_numbers<[1], [0], [0], [1], [0, 0, 1, 1], [], []>} : vector<16x32xf32>, vector<32x32xf32>, vector<16x32xf32> -> vector<16x32xf32>
    %160 = vector.extract_strided_slice %159 {offsets = [1, 0], sizes = [12, 32], strides = [1, 1]} : vector<16x32xf32> to vector<12x32xf32>
    %161 = arith.addf %156, %160 : vector<12x32xf32>
    %c2_123 = arith.constant 2 : index
    %c2_124 = arith.constant 2 : index
    %c0_125 = arith.constant 0 : index
    %c0_126 = arith.constant 0 : index
    %162 = vector.load %arg2[%c2_123, %c2_124, %c0_125, %c0_126] : memref<4x5x32x32xf32, #tpu.memory_space<vmem>>, vector<1x1x32x32xf32>
    %163 = vector.shape_cast %162 : vector<1x1x32x32xf32> to vector<32x32xf32>
    %cst_127 = arith.constant dense<0.000000e+00> : vector<16x32xf32>
    %164 = tpu.matmul %152, %163, %cst_127 {dimension_numbers = #tpu.dot_dimension_numbers<[1], [0], [0], [1], [0, 0, 1, 1], [], []>} : vector<16x32xf32>, vector<32x32xf32>, vector<16x32xf32> -> vector<16x32xf32>
    %165 = vector.extract_strided_slice %164 {offsets = [2, 0], sizes = [12, 32], strides = [1, 1]} : vector<16x32xf32> to vector<12x32xf32>
    %166 = arith.addf %161, %165 : vector<12x32xf32>
    %c2_128 = arith.constant 2 : index
    %c3_129 = arith.constant 3 : index
    %c0_130 = arith.constant 0 : index
    %c0_131 = arith.constant 0 : index
    %167 = vector.load %arg2[%c2_128, %c3_129, %c0_130, %c0_131] : memref<4x5x32x32xf32, #tpu.memory_space<vmem>>, vector<1x1x32x32xf32>
    %168 = vector.shape_cast %167 : vector<1x1x32x32xf32> to vector<32x32xf32>
    %cst_132 = arith.constant dense<0.000000e+00> : vector<16x32xf32>
    %169 = tpu.matmul %152, %168, %cst_132 {dimension_numbers = #tpu.dot_dimension_numbers<[1], [0], [0], [1], [0, 0, 1, 1], [], []>} : vector<16x32xf32>, vector<32x32xf32>, vector<16x32xf32> -> vector<16x32xf32>
    %170 = vector.extract_strided_slice %169 {offsets = [3, 0], sizes = [12, 32], strides = [1, 1]} : vector<16x32xf32> to vector<12x32xf32>
    %171 = arith.addf %166, %170 : vector<12x32xf32>
    %c2_133 = arith.constant 2 : index
    %c4_134 = arith.constant 4 : index
    %c0_135 = arith.constant 0 : index
    %c0_136 = arith.constant 0 : index
    %172 = vector.load %arg2[%c2_133, %c4_134, %c0_135, %c0_136] : memref<4x5x32x32xf32, #tpu.memory_space<vmem>>, vector<1x1x32x32xf32>
    %173 = vector.shape_cast %172 : vector<1x1x32x32xf32> to vector<32x32xf32>
    %cst_137 = arith.constant dense<0.000000e+00> : vector<16x32xf32>
    %174 = tpu.matmul %152, %173, %cst_137 {dimension_numbers = #tpu.dot_dimension_numbers<[1], [0], [0], [1], [0, 0, 1, 1], [], []>} : vector<16x32xf32>, vector<32x32xf32>, vector<16x32xf32> -> vector<16x32xf32>
    %175 = vector.extract_strided_slice %174 {offsets = [4, 0], sizes = [12, 32], strides = [1, 1]} : vector<16x32xf32> to vector<12x32xf32>
    %176 = arith.addf %171, %175 : vector<12x32xf32>
    %c2_138 = arith.constant 2 : index
    %c0_139 = arith.constant 0 : index
    %c0_140 = arith.constant 0 : index
    %177 = vector.load %arg3[%c2_138, %c0_139, %c0_140] : memref<4x1x32xf32, #tpu.memory_space<vmem>>, vector<1x1x32xf32>
    %178 = vector.shape_cast %177 : vector<1x1x32xf32> to vector<1x32xf32>
    %179 = vector.broadcast %178 : vector<1x32xf32> to vector<12x32xf32>
    %180 = arith.addf %176, %179 : vector<12x32xf32>
    %cst_141 = arith.constant 0.000000e+00 : f32
    %181 = vector.broadcast %cst_141 : f32 to vector<12x32xf32>
    %182 = arith.cmpf oge, %180, %181 : vector<12x32xf32>
    %cst_142 = arith.constant 0.00999999977 : f32
    %183 = vector.broadcast %cst_142 : f32 to vector<12x32xf32>
    %184 = arith.mulf %183, %180 : vector<12x32xf32>
    %185 = arith.select %182, %180, %184 : vector<12x32xi1>, vector<12x32xf32>
    %c2_143 = arith.constant 2 : index
    %c0_144 = arith.constant 0 : index
    %c0_145 = arith.constant 0 : index
    %c0_146 = arith.constant 0 : index
    %186 = vector.load %arg4[%c2_143, %c0_144, %c0_145, %c0_146] : memref<4x5x32x32xf32, #tpu.memory_space<vmem>>, vector<1x1x32x32xf32>
    %187 = vector.shape_cast %186 : vector<1x1x32x32xf32> to vector<32x32xf32>
    %cst_147 = arith.constant dense<0.000000e+00> : vector<12x32xf32>
    %188 = tpu.matmul %185, %187, %cst_147 {dimension_numbers = #tpu.dot_dimension_numbers<[1], [0], [0], [1], [0, 0, 1, 1], [], []>} : vector<12x32xf32>, vector<32x32xf32>, vector<12x32xf32> -> vector<12x32xf32>
    %189 = vector.extract_strided_slice %188 {offsets = [0, 0], sizes = [8, 32], strides = [1, 1]} : vector<12x32xf32> to vector<8x32xf32>
    %c2_148 = arith.constant 2 : index
    %c1_149 = arith.constant 1 : index
    %c0_150 = arith.constant 0 : index
    %c0_151 = arith.constant 0 : index
    %190 = vector.load %arg4[%c2_148, %c1_149, %c0_150, %c0_151] : memref<4x5x32x32xf32, #tpu.memory_space<vmem>>, vector<1x1x32x32xf32>
    %191 = vector.shape_cast %190 : vector<1x1x32x32xf32> to vector<32x32xf32>
    %cst_152 = arith.constant dense<0.000000e+00> : vector<12x32xf32>
    %192 = tpu.matmul %185, %191, %cst_152 {dimension_numbers = #tpu.dot_dimension_numbers<[1], [0], [0], [1], [0, 0, 1, 1], [], []>} : vector<12x32xf32>, vector<32x32xf32>, vector<12x32xf32> -> vector<12x32xf32>
    %193 = vector.extract_strided_slice %192 {offsets = [1, 0], sizes = [8, 32], strides = [1, 1]} : vector<12x32xf32> to vector<8x32xf32>
    %194 = arith.addf %189, %193 : vector<8x32xf32>
    %c2_153 = arith.constant 2 : index
    %c2_154 = arith.constant 2 : index
    %c0_155 = arith.constant 0 : index
    %c0_156 = arith.constant 0 : index
    %195 = vector.load %arg4[%c2_153, %c2_154, %c0_155, %c0_156] : memref<4x5x32x32xf32, #tpu.memory_space<vmem>>, vector<1x1x32x32xf32>
    %196 = vector.shape_cast %195 : vector<1x1x32x32xf32> to vector<32x32xf32>
    %cst_157 = arith.constant dense<0.000000e+00> : vector<12x32xf32>
    %197 = tpu.matmul %185, %196, %cst_157 {dimension_numbers = #tpu.dot_dimension_numbers<[1], [0], [0], [1], [0, 0, 1, 1], [], []>} : vector<12x32xf32>, vector<32x32xf32>, vector<12x32xf32> -> vector<12x32xf32>
    %198 = vector.extract_strided_slice %197 {offsets = [2, 0], sizes = [8, 32], strides = [1, 1]} : vector<12x32xf32> to vector<8x32xf32>
    %199 = arith.addf %194, %198 : vector<8x32xf32>
    %c2_158 = arith.constant 2 : index
    %c3_159 = arith.constant 3 : index
    %c0_160 = arith.constant 0 : index
    %c0_161 = arith.constant 0 : index
    %200 = vector.load %arg4[%c2_158, %c3_159, %c0_160, %c0_161] : memref<4x5x32x32xf32, #tpu.memory_space<vmem>>, vector<1x1x32x32xf32>
    %201 = vector.shape_cast %200 : vector<1x1x32x32xf32> to vector<32x32xf32>
    %cst_162 = arith.constant dense<0.000000e+00> : vector<12x32xf32>
    %202 = tpu.matmul %185, %201, %cst_162 {dimension_numbers = #tpu.dot_dimension_numbers<[1], [0], [0], [1], [0, 0, 1, 1], [], []>} : vector<12x32xf32>, vector<32x32xf32>, vector<12x32xf32> -> vector<12x32xf32>
    %203 = vector.extract_strided_slice %202 {offsets = [3, 0], sizes = [8, 32], strides = [1, 1]} : vector<12x32xf32> to vector<8x32xf32>
    %204 = arith.addf %199, %203 : vector<8x32xf32>
    %c2_163 = arith.constant 2 : index
    %c4_164 = arith.constant 4 : index
    %c0_165 = arith.constant 0 : index
    %c0_166 = arith.constant 0 : index
    %205 = vector.load %arg4[%c2_163, %c4_164, %c0_165, %c0_166] : memref<4x5x32x32xf32, #tpu.memory_space<vmem>>, vector<1x1x32x32xf32>
    %206 = vector.shape_cast %205 : vector<1x1x32x32xf32> to vector<32x32xf32>
    %cst_167 = arith.constant dense<0.000000e+00> : vector<12x32xf32>
    %207 = tpu.matmul %185, %206, %cst_167 {dimension_numbers = #tpu.dot_dimension_numbers<[1], [0], [0], [1], [0, 0, 1, 1], [], []>} : vector<12x32xf32>, vector<32x32xf32>, vector<12x32xf32> -> vector<12x32xf32>
    %208 = vector.extract_strided_slice %207 {offsets = [4, 0], sizes = [8, 32], strides = [1, 1]} : vector<12x32xf32> to vector<8x32xf32>
    %209 = arith.addf %204, %208 : vector<8x32xf32>
    %c2_168 = arith.constant 2 : index
    %c0_169 = arith.constant 0 : index
    %c0_170 = arith.constant 0 : index
    %210 = vector.load %arg5[%c2_168, %c0_169, %c0_170] : memref<4x1x32xf32, #tpu.memory_space<vmem>>, vector<1x1x32xf32>
    %211 = vector.shape_cast %210 : vector<1x1x32xf32> to vector<1x32xf32>
    %212 = vector.broadcast %211 : vector<1x32xf32> to vector<8x32xf32>
    %213 = arith.addf %209, %212 : vector<8x32xf32>
    %214 = math.tanh %213 : vector<8x32xf32>
    %215 = arith.addf %74, %214 : vector<8x32xf32>
    %216 = vector.extract_strided_slice %74 {offsets = [0, 0], sizes = [1, 32], strides = [1, 1]} : vector<8x32xf32> to vector<1x32xf32>
    %217 = vector.shape_cast %216 : vector<1x32xf32> to vector<1x32xf32>
    %218 = vector.broadcast %217 : vector<1x32xf32> to vector<4x32xf32>
    %219 = vector.extract_strided_slice %74 {offsets = [7, 0], sizes = [1, 32], strides = [1, 1]} : vector<8x32xf32> to vector<1x32xf32>
    %220 = vector.shape_cast %219 : vector<1x32xf32> to vector<1x32xf32>
    %221 = vector.broadcast %220 : vector<1x32xf32> to vector<4x32xf32>
    %222 = tpu.concatenate %218, %74, %221 in 0 : vector<4x32xf32>, vector<8x32xf32>, vector<4x32xf32> -> vector<16x32xf32>
    %c3_171 = arith.constant 3 : index
    %c0_172 = arith.constant 0 : index
    %c0_173 = arith.constant 0 : index
    %c0_174 = arith.constant 0 : index
    %223 = vector.load %arg2[%c3_171, %c0_172, %c0_173, %c0_174] : memref<4x5x32x32xf32, #tpu.memory_space<vmem>>, vector<1x1x32x32xf32>
    %224 = vector.shape_cast %223 : vector<1x1x32x32xf32> to vector<32x32xf32>
    %cst_175 = arith.constant dense<0.000000e+00> : vector<16x32xf32>
    %225 = tpu.matmul %222, %224, %cst_175 {dimension_numbers = #tpu.dot_dimension_numbers<[1], [0], [0], [1], [0, 0, 1, 1], [], []>} : vector<16x32xf32>, vector<32x32xf32>, vector<16x32xf32> -> vector<16x32xf32>
    %226 = vector.extract_strided_slice %225 {offsets = [0, 0], sizes = [12, 32], strides = [1, 1]} : vector<16x32xf32> to vector<12x32xf32>
    %c3_176 = arith.constant 3 : index
    %c1_177 = arith.constant 1 : index
    %c0_178 = arith.constant 0 : index
    %c0_179 = arith.constant 0 : index
    %227 = vector.load %arg2[%c3_176, %c1_177, %c0_178, %c0_179] : memref<4x5x32x32xf32, #tpu.memory_space<vmem>>, vector<1x1x32x32xf32>
    %228 = vector.shape_cast %227 : vector<1x1x32x32xf32> to vector<32x32xf32>
    %cst_180 = arith.constant dense<0.000000e+00> : vector<16x32xf32>
    %229 = tpu.matmul %222, %228, %cst_180 {dimension_numbers = #tpu.dot_dimension_numbers<[1], [0], [0], [1], [0, 0, 1, 1], [], []>} : vector<16x32xf32>, vector<32x32xf32>, vector<16x32xf32> -> vector<16x32xf32>
    %230 = vector.extract_strided_slice %229 {offsets = [1, 0], sizes = [12, 32], strides = [1, 1]} : vector<16x32xf32> to vector<12x32xf32>
    %231 = arith.addf %226, %230 : vector<12x32xf32>
    %c3_181 = arith.constant 3 : index
    %c2_182 = arith.constant 2 : index
    %c0_183 = arith.constant 0 : index
    %c0_184 = arith.constant 0 : index
    %232 = vector.load %arg2[%c3_181, %c2_182, %c0_183, %c0_184] : memref<4x5x32x32xf32, #tpu.memory_space<vmem>>, vector<1x1x32x32xf32>
    %233 = vector.shape_cast %232 : vector<1x1x32x32xf32> to vector<32x32xf32>
    %cst_185 = arith.constant dense<0.000000e+00> : vector<16x32xf32>
    %234 = tpu.matmul %222, %233, %cst_185 {dimension_numbers = #tpu.dot_dimension_numbers<[1], [0], [0], [1], [0, 0, 1, 1], [], []>} : vector<16x32xf32>, vector<32x32xf32>, vector<16x32xf32> -> vector<16x32xf32>
    %235 = vector.extract_strided_slice %234 {offsets = [2, 0], sizes = [12, 32], strides = [1, 1]} : vector<16x32xf32> to vector<12x32xf32>
    %236 = arith.addf %231, %235 : vector<12x32xf32>
    %c3_186 = arith.constant 3 : index
    %c3_187 = arith.constant 3 : index
    %c0_188 = arith.constant 0 : index
    %c0_189 = arith.constant 0 : index
    %237 = vector.load %arg2[%c3_186, %c3_187, %c0_188, %c0_189] : memref<4x5x32x32xf32, #tpu.memory_space<vmem>>, vector<1x1x32x32xf32>
    %238 = vector.shape_cast %237 : vector<1x1x32x32xf32> to vector<32x32xf32>
    %cst_190 = arith.constant dense<0.000000e+00> : vector<16x32xf32>
    %239 = tpu.matmul %222, %238, %cst_190 {dimension_numbers = #tpu.dot_dimension_numbers<[1], [0], [0], [1], [0, 0, 1, 1], [], []>} : vector<16x32xf32>, vector<32x32xf32>, vector<16x32xf32> -> vector<16x32xf32>
    %240 = vector.extract_strided_slice %239 {offsets = [3, 0], sizes = [12, 32], strides = [1, 1]} : vector<16x32xf32> to vector<12x32xf32>
    %241 = arith.addf %236, %240 : vector<12x32xf32>
    %c3_191 = arith.constant 3 : index
    %c4_192 = arith.constant 4 : index
    %c0_193 = arith.constant 0 : index
    %c0_194 = arith.constant 0 : index
    %242 = vector.load %arg2[%c3_191, %c4_192, %c0_193, %c0_194] : memref<4x5x32x32xf32, #tpu.memory_space<vmem>>, vector<1x1x32x32xf32>
    %243 = vector.shape_cast %242 : vector<1x1x32x32xf32> to vector<32x32xf32>
    %cst_195 = arith.constant dense<0.000000e+00> : vector<16x32xf32>
    %244 = tpu.matmul %222, %243, %cst_195 {dimension_numbers = #tpu.dot_dimension_numbers<[1], [0], [0], [1], [0, 0, 1, 1], [], []>} : vector<16x32xf32>, vector<32x32xf32>, vector<16x32xf32> -> vector<16x32xf32>
    %245 = vector.extract_strided_slice %244 {offsets = [4, 0], sizes = [12, 32], strides = [1, 1]} : vector<16x32xf32> to vector<12x32xf32>
    %246 = arith.addf %241, %245 : vector<12x32xf32>
    %c3_196 = arith.constant 3 : index
    %c0_197 = arith.constant 0 : index
    %c0_198 = arith.constant 0 : index
    %247 = vector.load %arg3[%c3_196, %c0_197, %c0_198] : memref<4x1x32xf32, #tpu.memory_space<vmem>>, vector<1x1x32xf32>
    %248 = vector.shape_cast %247 : vector<1x1x32xf32> to vector<1x32xf32>
    %249 = vector.broadcast %248 : vector<1x32xf32> to vector<12x32xf32>
    %250 = arith.addf %246, %249 : vector<12x32xf32>
    %cst_199 = arith.constant 0.000000e+00 : f32
    %251 = vector.broadcast %cst_199 : f32 to vector<12x32xf32>
    %252 = arith.cmpf oge, %250, %251 : vector<12x32xf32>
    %cst_200 = arith.constant 0.00999999977 : f32
    %253 = vector.broadcast %cst_200 : f32 to vector<12x32xf32>
    %254 = arith.mulf %253, %250 : vector<12x32xf32>
    %255 = arith.select %252, %250, %254 : vector<12x32xi1>, vector<12x32xf32>
    %c3_201 = arith.constant 3 : index
    %c0_202 = arith.constant 0 : index
    %c0_203 = arith.constant 0 : index
    %c0_204 = arith.constant 0 : index
    %256 = vector.load %arg4[%c3_201, %c0_202, %c0_203, %c0_204] : memref<4x5x32x32xf32, #tpu.memory_space<vmem>>, vector<1x1x32x32xf32>
    %257 = vector.shape_cast %256 : vector<1x1x32x32xf32> to vector<32x32xf32>
    %cst_205 = arith.constant dense<0.000000e+00> : vector<12x32xf32>
    %258 = tpu.matmul %255, %257, %cst_205 {dimension_numbers = #tpu.dot_dimension_numbers<[1], [0], [0], [1], [0, 0, 1, 1], [], []>} : vector<12x32xf32>, vector<32x32xf32>, vector<12x32xf32> -> vector<12x32xf32>
    %259 = vector.extract_strided_slice %258 {offsets = [0, 0], sizes = [8, 32], strides = [1, 1]} : vector<12x32xf32> to vector<8x32xf32>
    %c3_206 = arith.constant 3 : index
    %c1_207 = arith.constant 1 : index
    %c0_208 = arith.constant 0 : index
    %c0_209 = arith.constant 0 : index
    %260 = vector.load %arg4[%c3_206, %c1_207, %c0_208, %c0_209] : memref<4x5x32x32xf32, #tpu.memory_space<vmem>>, vector<1x1x32x32xf32>
    %261 = vector.shape_cast %260 : vector<1x1x32x32xf32> to vector<32x32xf32>
    %cst_210 = arith.constant dense<0.000000e+00> : vector<12x32xf32>
    %262 = tpu.matmul %255, %261, %cst_210 {dimension_numbers = #tpu.dot_dimension_numbers<[1], [0], [0], [1], [0, 0, 1, 1], [], []>} : vector<12x32xf32>, vector<32x32xf32>, vector<12x32xf32> -> vector<12x32xf32>
    %263 = vector.extract_strided_slice %262 {offsets = [1, 0], sizes = [8, 32], strides = [1, 1]} : vector<12x32xf32> to vector<8x32xf32>
    %264 = arith.addf %259, %263 : vector<8x32xf32>
    %c3_211 = arith.constant 3 : index
    %c2_212 = arith.constant 2 : index
    %c0_213 = arith.constant 0 : index
    %c0_214 = arith.constant 0 : index
    %265 = vector.load %arg4[%c3_211, %c2_212, %c0_213, %c0_214] : memref<4x5x32x32xf32, #tpu.memory_space<vmem>>, vector<1x1x32x32xf32>
    %266 = vector.shape_cast %265 : vector<1x1x32x32xf32> to vector<32x32xf32>
    %cst_215 = arith.constant dense<0.000000e+00> : vector<12x32xf32>
    %267 = tpu.matmul %255, %266, %cst_215 {dimension_numbers = #tpu.dot_dimension_numbers<[1], [0], [0], [1], [0, 0, 1, 1], [], []>} : vector<12x32xf32>, vector<32x32xf32>, vector<12x32xf32> -> vector<12x32xf32>
    %268 = vector.extract_strided_slice %267 {offsets = [2, 0], sizes = [8, 32], strides = [1, 1]} : vector<12x32xf32> to vector<8x32xf32>
    %269 = arith.addf %264, %268 : vector<8x32xf32>
    %c3_216 = arith.constant 3 : index
    %c3_217 = arith.constant 3 : index
    %c0_218 = arith.constant 0 : index
    %c0_219 = arith.constant 0 : index
    %270 = vector.load %arg4[%c3_216, %c3_217, %c0_218, %c0_219] : memref<4x5x32x32xf32, #tpu.memory_space<vmem>>, vector<1x1x32x32xf32>
    %271 = vector.shape_cast %270 : vector<1x1x32x32xf32> to vector<32x32xf32>
    %cst_220 = arith.constant dense<0.000000e+00> : vector<12x32xf32>
    %272 = tpu.matmul %255, %271, %cst_220 {dimension_numbers = #tpu.dot_dimension_numbers<[1], [0], [0], [1], [0, 0, 1, 1], [], []>} : vector<12x32xf32>, vector<32x32xf32>, vector<12x32xf32> -> vector<12x32xf32>
    %273 = vector.extract_strided_slice %272 {offsets = [3, 0], sizes = [8, 32], strides = [1, 1]} : vector<12x32xf32> to vector<8x32xf32>
    %274 = arith.addf %269, %273 : vector<8x32xf32>
    %c3_221 = arith.constant 3 : index
    %c4_222 = arith.constant 4 : index
    %c0_223 = arith.constant 0 : index
    %c0_224 = arith.constant 0 : index
    %275 = vector.load %arg4[%c3_221, %c4_222, %c0_223, %c0_224] : memref<4x5x32x32xf32, #tpu.memory_space<vmem>>, vector<1x1x32x32xf32>
    %276 = vector.shape_cast %275 : vector<1x1x32x32xf32> to vector<32x32xf32>
    %cst_225 = arith.constant dense<0.000000e+00> : vector<12x32xf32>
    %277 = tpu.matmul %255, %276, %cst_225 {dimension_numbers = #tpu.dot_dimension_numbers<[1], [0], [0], [1], [0, 0, 1, 1], [], []>} : vector<12x32xf32>, vector<32x32xf32>, vector<12x32xf32> -> vector<12x32xf32>
    %278 = vector.extract_strided_slice %277 {offsets = [4, 0], sizes = [8, 32], strides = [1, 1]} : vector<12x32xf32> to vector<8x32xf32>
    %279 = arith.addf %274, %278 : vector<8x32xf32>
    %c3_226 = arith.constant 3 : index
    %c0_227 = arith.constant 0 : index
    %c0_228 = arith.constant 0 : index
    %280 = vector.load %arg5[%c3_226, %c0_227, %c0_228] : memref<4x1x32xf32, #tpu.memory_space<vmem>>, vector<1x1x32xf32>
    %281 = vector.shape_cast %280 : vector<1x1x32xf32> to vector<1x32xf32>
    %282 = vector.broadcast %281 : vector<1x32xf32> to vector<8x32xf32>
    %283 = arith.addf %279, %282 : vector<8x32xf32>
    %284 = math.tanh %283 : vector<8x32xf32>
    %285 = arith.subf %145, %284 : vector<8x32xf32>
    %286 = tpu.concatenate %215, %285 in 1 : vector<8x32xf32>, vector<8x32xf32> -> vector<8x64xf32>
    %c0_229 = arith.constant 0 : index
    %c0_230 = arith.constant 0 : index
    %c0_231 = arith.constant 0 : index
    %287 = vector.load %arg6[%c0_229, %c0_230, %c0_231] : memref<1x8x64xf32, #tpu.memory_space<vmem>>, vector<1x8x64xf32>
    %288 = vector.shape_cast %287 : vector<1x8x64xf32> to vector<8x64xf32>
    %289 = vector.shape_cast %286 : vector<8x64xf32> to vector<1x8x64xf32>
    tpu.vector_store %arg6[%c0_229, %c0_230, %c0_231], %289 {strides = array<i32>} : memref<1x8x64xf32, #tpu.memory_space<vmem>>, vector<1x8x64xf32>,
    return
  }
  func.func @transform_0(%arg0: i32) -> (i32, i32, i32) {
    %c0_i32 = arith.constant 0 : i32
    %c0_i32_0 = arith.constant 0 : i32
    %c0_i32_1 = arith.constant 0 : i32
    return %arg0, %c0_i32, %c0_i32_0 : i32, i32, i32
  }
  func.func @transform_1(%arg0: i32) -> (i32, i32, i32, i32) {
    %c0_i32 = arith.constant 0 : i32
    %c0_i32_0 = arith.constant 0 : i32
    %c0_i32_1 = arith.constant 0 : i32
    %c0_i32_2 = arith.constant 0 : i32
    %c0_i32_3 = arith.constant 0 : i32
    return %c0_i32, %c0_i32_0, %c0_i32_1, %c0_i32_2 : i32, i32, i32, i32
  }
  func.func @transform_2(%arg0: i32) -> (i32, i32, i32) {
    %c0_i32 = arith.constant 0 : i32
    %c0_i32_0 = arith.constant 0 : i32
    %c0_i32_1 = arith.constant 0 : i32
    %c0_i32_2 = arith.constant 0 : i32
    return %c0_i32, %c0_i32_0, %c0_i32_1 : i32, i32, i32
  }
  func.func @transform_3(%arg0: i32) -> (i32, i32, i32, i32) {
    %c0_i32 = arith.constant 0 : i32
    %c0_i32_0 = arith.constant 0 : i32
    %c0_i32_1 = arith.constant 0 : i32
    %c0_i32_2 = arith.constant 0 : i32
    %c0_i32_3 = arith.constant 0 : i32
    return %c0_i32, %c0_i32_0, %c0_i32_1, %c0_i32_2 : i32, i32, i32, i32
  }
  func.func @transform_4(%arg0: i32) -> (i32, i32, i32) {
    %c0_i32 = arith.constant 0 : i32
    %c0_i32_0 = arith.constant 0 : i32
    %c0_i32_1 = arith.constant 0 : i32
    %c0_i32_2 = arith.constant 0 : i32
    return %c0_i32, %c0_i32_0, %c0_i32_1 : i32, i32, i32
  }
  func.func @transform_5(%arg0: i32) -> (i32, i32, i32) {
    %c0_i32 = arith.constant 0 : i32
    %c0_i32_0 = arith.constant 0 : i32
    %c0_i32_1 = arith.constant 0 : i32
    return %arg0, %c0_i32, %c0_i32_0 : i32, i32, i32
  }
}

</mosaic_0001>

<llo_original>
// kernel: tpu_custom_call.1
$region0: #{tpu_custom_call.1}
  #allocation0 [shape = 'u32[]', space=smem, size = 0x4, offset = 0x4, fixed_abs, tag = 'smem constant byte address 0x4 - core index']
  #allocation1 [shape = 'u32[144,128]{1,0:T(1,128)}', space=vmem, size = 0x12000, scoped, tag = 'internal scratch']
  %s0 = inlined_call_operand.hbm [shape: f32[2,8,64], index: 0, kind: input, shape index: {}]
  %s1 = inlined_call_operand.hbm [shape: f32[4,5,32,32], index: 1, kind: input, shape index: {}]
  %s2 = inlined_call_operand.hbm [shape: f32[4,1,32], index: 2, kind: input, shape index: {}]
  %s3 = inlined_call_operand.hbm [shape: f32[4,5,32,32], index: 3, kind: input, shape index: {}]
  %s4 = inlined_call_operand.vmem [shape: f32[4,1,32], index: 4, kind: input, shape index: {}]
  %s5 = inlined_call_operand.hbm [shape: f32[2,8,64], index: 5, kind: output, shape index: {}]
  %s6 = sld [smem:[#allocation0]]
  $region69: #{tpu_custom_call.1} parent=0
    _
  %s8 = ssub.s32 1, %s6
  %s9 = scalar_select 0, %s8, %s6
  $region1: #{tpu_custom_call.1} parent=0
    #allocation2 [shape = 'u8[8192]{0}', space=vmem, size = 0x2000, scoped, tag = 'input window, operand 0']
    #allocation3 [shape = 's32[2]{0}', space=sflag, size = 0x8, scoped, tag = 'scoped memory for tpu_custom_call.1']
    #allocation4 [shape = 's32[2]{0}', space=sflag, size = 0x8, scoped, tag = 'scoped memory for tpu_custom_call.1']
    #allocation5 [shape = 'u8[327680]{0}', space=vmem, size = 0x50000, scoped, tag = 'input window, operand 1, single buffered']
    #allocation6 [shape = 's32[1]{0}', space=sflag, size = 0x4, scoped, tag = 'scoped memory for tpu_custom_call.1']
    #allocation7 [shape = 'u8[2048]{0}', space=vmem, size = 0x800, scoped, tag = 'input window, operand 2, single buffered']
    #allocation8 [shape = 'u8[327680]{0}', space=vmem, size = 0x50000, scoped, tag = 'input window, operand 3, single buffered']
    #allocation9 [shape = 's32[1]{0}', space=sflag, size = 0x4, scoped, tag = 'scoped memory for tpu_custom_call.1']
    #allocation10 [shape = 'u8[8192]{0}', space=vmem, size = 0x2000, scoped, tag = 'output window, operand 0']
    %10 = vsyncpa [#allocation3], 0
    %s11 = scalar_lea.sflag [#allocation3], 1
    %12 = vsyncpa %s11, 0
    %13 = vsyncpa [#allocation6], 0
    %14 = vsyncpa [#allocation9], 0
    %15 = vsyncpa [#allocation4], 0
    %s16 = scalar_lea.sflag [#allocation4], 1
    %17 = vsyncpa %s16, 0
    loop: start=0, step=1, limit=4
    $region2: #{tpu_custom_call.1} parent=1 // loop_pre_header
      _
    $region3: #{tpu_custom_call.1} parent=1 // loop_header
      %s19 = sphi 0, %s23
      %p20 = scmp.ge.s32.totalorder %s19, 4
      %s29 = sphi 0, %s31
      %s32 = sphi 0, %s29
      %s33 = sphi 0, %s32
      %s49 = sphi 0, %s33
      %s53 = sphi 0, %s53
      %s55 = sphi 0, %s53
      %s56 = sphi 0, %s55
      %s70 = sphi 0, %s56
      %s74 = sphi 0, %s74
      %s76 = sphi 0, %s74
      %s77 = sphi 0, %s76
      %s91 = sphi 0, %s77
      %s95 = sphi 0, %s95
      %s97 = sphi 0, %s95
      %s98 = sphi 0, %s97
      %s112 = sphi 0, %s98
      %s116 = sphi 0, %s116
      %s118 = sphi 0, %s116
      %s119 = sphi 0, %s118
      %s133 = sphi 0, %s119
      %s139 = sphi 0, %s141
      %s142 = sphi 0, %s139
      %s143 = sphi 0, %s142
      %s159 = sphi 0, %s143
    $region4: #{tpu_custom_call.1} parent=1 // loop_header_branch
      %22 = sbr.rel (%p20) target = $region8
    $region5: #{tpu_custom_call.1} parent=1 // loop_body
      %s24 = ssub.s32 %s19, 1
      %s25 = ssub.s32 %s19, 2
      %s26 = sadd.s32 %s19, 1
      %s27 = ssub.s32 %s19, %s26
      %p28 = scmp.eq.s32.totalorder %s27, 0
      %s30 = sadd.s32 %s29, 1
      %s31 = scalar_select %p28, %s29, %s30
      %p34 = pneg %p28
      %p35 = scmp.eq.s32.totalorder %s19, 1
      %p36 = por %p34, %p35
      %p37 = scmp.ne.s32.totalorder %s29, %s32
      %p38 = scmp.eq.s32.totalorder %s19, 0
      %p39 = por %p37, %p38
      %p40 = scmp.ne.s32.totalorder %s29, %s32
      %p41 = scmp.eq.s32.totalorder %s24, 1
      %p42 = por %p40, %p41
      %p43 = scmp.ne.s32.totalorder %s32, %s33
      %p44 = scmp.eq.s32.totalorder %s24, 0
      %p45 = por %p43, %p44
      %p46 = scmp.ne.s32.totalorder %s32, %s33
      %p47 = scmp.eq.s32.totalorder %s25, 1
      %p48 = por %p46, %p47
      %p50 = scmp.ne.s32.totalorder %s33, %s49
      %p51 = scmp.eq.s32.totalorder %s25, 0
      %p52 = por %p50, %p51
      %s54 = sadd.s32 %s53, 1
      %p57 = scmp.eq.s32.totalorder %s19, 1
      %p58 = scmp.ne.s32.totalorder %s53, %s55
      %p59 = scmp.eq.s32.totalorder %s19, 0
      %p60 = por %p58, %p59
      %p61 = scmp.ne.s32.totalorder %s53, %s55
      %p62 = scmp.eq.s32.totalorder %s24, 1
      %p63 = por %p61, %p62
      %p64 = scmp.ne.s32.totalorder %s55, %s56
      %p65 = scmp.eq.s32.totalorder %s24, 0
      %p66 = por %p64, %p65
      %p67 = scmp.ne.s32.totalorder %s55, %s56
      %p68 = scmp.eq.s32.totalorder %s25, 1
      %p69 = por %p67, %p68
      %p71 = scmp.ne.s32.totalorder %s56, %s70
      %p72 = scmp.eq.s32.totalorder %s25, 0
      %p73 = por %p71, %p72
      %s75 = sadd.s32 %s74, 1
      %p78 = scmp.eq.s32.totalorder %s19, 1
      %p79 = scmp.ne.s32.totalorder %s74, %s76
      %p80 = scmp.eq.s32.totalorder %s19, 0
      %p81 = por %p79, %p80
      %p82 = scmp.ne.s32.totalorder %s74, %s76
      %p83 = scmp.eq.s32.totalorder %s24, 1
      %p84 = por %p82, %p83
      %p85 = scmp.ne.s32.totalorder %s76, %s77
      %p86 = scmp.eq.s32.totalorder %s24, 0
      %p87 = por %p85, %p86
      %p88 = scmp.ne.s32.totalorder %s76, %s77
      %p89 = scmp.eq.s32.totalorder %s25, 1
      %p90 = por %p88, %p89
      %p92 = scmp.ne.s32.totalorder %s77, %s91
      %p93 = scmp.eq.s32.totalorder %s25, 0
      %p94 = por %p92, %p93
      %s96 = sadd.s32 %s95, 1
      %p99 = scmp.eq.s32.totalorder %s19, 1
      %p100 = scmp.ne.s32.totalorder %s95, %s97
      %p101 = scmp.eq.s32.totalorder %s19, 0
      %p102 = por %p100, %p101
      %p103 = scmp.ne.s32.totalorder %s95, %s97
      %p104 = scmp.eq.s32.totalorder %s24, 1
      %p105 = por %p103, %p104
      %p106 = scmp.ne.s32.totalorder %s97, %s98
      %p107 = scmp.eq.s32.totalorder %s24, 0
      %p108 = por %p106, %p107
      %p109 = scmp.ne.s32.totalorder %s97, %s98
      %p110 = scmp.eq.s32.totalorder %s25, 1
      %p111 = por %p109, %p110
      %p113 = scmp.ne.s32.totalorder %s98, %s112
      %p114 = scmp.eq.s32.totalorder %s25, 0
      %p115 = por %p113, %p114
      %s117 = sadd.s32 %s116, 1
      %p120 = scmp.eq.s32.totalorder %s19, 1
      %p121 = scmp.ne.s32.totalorder %s116, %s118
      %p122 = scmp.eq.s32.totalorder %s19, 0
      %p123 = por %p121, %p122
      %p124 = scmp.ne.s32.totalorder %s116, %s118
      %p125 = scmp.eq.s32.totalorder %s24, 1
      %p126 = por %p124, %p125
      %p127 = scmp.ne.s32.totalorder %s118, %s119
      %p128 = scmp.eq.s32.totalorder %s24, 0
      %p129 = por %p127, %p128
      %p130 = scmp.ne.s32.totalorder %s118, %s119
      %p131 = scmp.eq.s32.totalorder %s25, 1
      %p132 = por %p130, %p131
      %p134 = scmp.ne.s32.totalorder %s119, %s133
      %p135 = scmp.eq.s32.totalorder %s25, 0
      %p136 = por %p134, %p135
      %s137 = ssub.s32 %s19, %s26
      %p138 = scmp.eq.s32.totalorder %s137, 0
      %s140 = sadd.s32 %s139, 1
      %s141 = scalar_select %p138, %s139, %s140
      %p144 = pneg %p138
      %p145 = scmp.eq.s32.totalorder %s19, 1
      %p146 = por %p144, %p145
      %p147 = scmp.ne.s32.totalorder %s139, %s142
      %p148 = scmp.eq.s32.totalorder %s19, 0
      %p149 = por %p147, %p148
      %p150 = scmp.ne.s32.totalorder %s139, %s142
      %p151 = scmp.eq.s32.totalorder %s24, 1
      %p152 = por %p150, %p151
      %p153 = scmp.ne.s32.totalorder %s142, %s143
      %p154 = scmp.eq.s32.totalorder %s24, 0
      %p155 = por %p153, %p154
      %p156 = scmp.ne.s32.totalorder %s142, %s143
      %p157 = scmp.eq.s32.totalorder %s25, 1
      %p158 = por %p156, %p157
      %p160 = scmp.ne.s32.totalorder %s143, %s159
      %p161 = scmp.eq.s32.totalorder %s25, 0
      %p162 = por %p160, %p161
      %p163 = scmp.le.s32.totalorder 1, %s19
      %p164 = scmp.lt.s32.totalorder %s19, 3
      %p165 = pnand %p163, %p164
      %p166 = pneg %p165
      // Predicated region
      $region9: #{tpu_custom_call.1} parent=5 // pred_check
        _
      $region10: #{tpu_custom_call.1} parent=5 // pred_check_branch
        %168 = sbr.rel (%p165) target = $region12
      $region11: #{tpu_custom_call.1} parent=5 // pred_region
        %s169 = ssub.s32 %s19, 1
        // Predicated region
        $region13: #{tpu_custom_call.1} parent=11 // pred_check
          %p170 = pneg %p66
        $region14: #{tpu_custom_call.1} parent=11 // pred_check_branch
          %172 = sbr.rel (%p170) target = $region16
        $region15: #{tpu_custom_call.1} parent=11 // pred_region
          %s174 = ssub.s32 10240, 10240
          %175 = vsyncadd [#allocation6], %s174
          %s176 = sshll.u32 [#allocation5], 4
          %s177 = int_to_ptr.vmem [resolvable:$true] %s176
          %182 = dma.hbm_to_vmem [thread:$0]  %s1, 10240, %s177, [#allocation6], 128, 128, 8
        $region16: #{tpu_custom_call.1} parent=11 // pred_fallthru
          _
        // Predicated region
        $region17: #{tpu_custom_call.1} parent=11 // pred_check
          %p183 = pneg %p87
        $region18: #{tpu_custom_call.1} parent=11 // pred_check_branch
          %185 = sbr.rel (%p183) target = $region20
        $region19: #{tpu_custom_call.1} parent=11 // pred_region
          %s187 = ssub.s32 64, 64
          %188 = vsyncadd [#allocation6], %s187
          %s189 = sshll.u32 [#allocation7], 4
          %s190 = int_to_ptr.vmem [resolvable:$true] %s189
          %195 = dma.hbm_to_vmem [thread:$0]  %s2, 64, %s190, [#allocation6], 16, 16, 1
        $region20: #{tpu_custom_call.1} parent=11 // pred_fallthru
          _
        // Predicated region
        $region21: #{tpu_custom_call.1} parent=11 // pred_check
          %p196 = pneg %p108
        $region22: #{tpu_custom_call.1} parent=11 // pred_check_branch
          %198 = sbr.rel (%p196) target = $region24
        $region23: #{tpu_custom_call.1} parent=11 // pred_region
          %s200 = ssub.s32 10240, 10240
          %201 = vsyncadd [#allocation9], %s200
          %s202 = sshll.u32 [#allocation8], 4
          %s203 = int_to_ptr.vmem [resolvable:$true] %s202
          %208 = dma.hbm_to_vmem [thread:$0]  %s3, 10240, %s203, [#allocation9], 128, 128, 8
        $region24: #{tpu_custom_call.1} parent=11 // pred_fallthru
          _
        // Predicated region
        $region25: #{tpu_custom_call.1} parent=11 // pred_check
          %p209 = pneg %p129
        $region26: #{tpu_custom_call.1} parent=11 // pred_check_branch
          %211 = sbr.rel (%p209) target = $region28
        $region27: #{tpu_custom_call.1} parent=11 // pred_region
          _
        $region28: #{tpu_custom_call.1} parent=11 // pred_fallthru
          _
      $region12: #{tpu_custom_call.1} parent=5 // pred_fallthru
        _
      %p212 = scmp.lt.s32.totalorder %s19, 2
      // Predicated region
      $region29: #{tpu_custom_call.1} parent=5 // pred_check
        %p213 = pneg %p212
      $region30: #{tpu_custom_call.1} parent=5 // pred_check_branch
        %215 = sbr.rel (%p213) target = $region32
      $region31: #{tpu_custom_call.1} parent=5 // pred_region
        // Predicated region
        $region33: #{tpu_custom_call.1} parent=31 // pred_check
          %p216 = pneg %p39
        $region34: #{tpu_custom_call.1} parent=31 // pred_check_branch
          %218 = sbr.rel (%p216) target = $region36
        $region35: #{tpu_custom_call.1} parent=31 // pred_region
          %s219 = sand.u32 %s29, 1
          %s220 = scalar_lea.sflag [#allocation3], %s219
          %s221 = sand.u32 %s29, 1
          %s222 = smul.addr %s221, 8
          %s223 = scalar_lea.vmem [#allocation2], %s222
          %s225 = ssub.s32 128, 128
          %226 = vsyncadd %s220, %s225
          %s227 = smul.addr %s19, 128
          %s228 = scalar_lea.hbm %s0, %s227
          %s230 = sshll.u32 %s223, 4
          %s231 = int_to_ptr.vmem [resolvable:$true] %s230
          %233 = dma.hbm_to_vmem [thread:$0]  %s228, 128, %s231, %s220
        $region36: #{tpu_custom_call.1} parent=31 // pred_fallthru
          _
      $region32: #{tpu_custom_call.1} parent=5 // pred_fallthru
        _
      %p234 = scmp.le.s32.totalorder 1, %s19
      %p235 = scmp.lt.s32.totalorder %s19, 3
      %p236 = pnand %p234, %p235
      %p237 = pneg %p236
      // Predicated region
      $region37: #{tpu_custom_call.1} parent=5 // pred_check
        _
      $region38: #{tpu_custom_call.1} parent=5 // pred_check_branch
        %239 = sbr.rel (%p236) target = $region40
      $region39: #{tpu_custom_call.1} parent=5 // pred_region
        %s240 = ssub.s32 %s19, 1
        %s241 = sand.u32 %s32, 1
        %s242 = scalar_lea.sflag [#allocation3], %s241
        %s243 = sand.u32 %s32, 1
        %s244 = smul.addr %s243, 8
        %s245 = scalar_lea.vmem [#allocation2], %s244
        // Predicated region
        $region41: #{tpu_custom_call.1} parent=39 // pred_check
          %p246 = pneg %p45
        $region42: #{tpu_custom_call.1} parent=39 // pred_check_branch
          %248 = sbr.rel (%p246) target = $region44
        $region43: #{tpu_custom_call.1} parent=39 // pred_region
          %249 = dma.done %s242, 128
        $region44: #{tpu_custom_call.1} parent=39 // pred_fallthru
          _
        // Predicated region
        $region45: #{tpu_custom_call.1} parent=39 // pred_check
          %p250 = pneg %p66
        $region46: #{tpu_custom_call.1} parent=39 // pred_check_branch
          %252 = sbr.rel (%p250) target = $region48
        $region47: #{tpu_custom_call.1} parent=39 // pred_region
          %253 = dma.done [#allocation6], 10240
        $region48: #{tpu_custom_call.1} parent=39 // pred_fallthru
          _
        // Predicated region
        $region49: #{tpu_custom_call.1} parent=39 // pred_check
          %p254 = pneg %p87
        $region50: #{tpu_custom_call.1} parent=39 // pred_check_branch
          %256 = sbr.rel (%p254) target = $region52
        $region51: #{tpu_custom_call.1} parent=39 // pred_region
          %257 = dma.done [#allocation6], 64
        $region52: #{tpu_custom_call.1} parent=39 // pred_fallthru
          _
        // Predicated region
        $region53: #{tpu_custom_call.1} parent=39 // pred_check
          %p258 = pneg %p108
        $region54: #{tpu_custom_call.1} parent=39 // pred_check_branch
          %260 = sbr.rel (%p258) target = $region56
        $region55: #{tpu_custom_call.1} parent=39 // pred_region
          %261 = dma.done [#allocation9], 10240
        $region56: #{tpu_custom_call.1} parent=39 // pred_fallthru
          _
        %s262 = sand.u32 %s32, 1
        %s263 = scalar_lea.sflag [#allocation3], %s262
        %s264 = sand.u32 %s32, 1
        %s265 = smul.addr %s264, 8
        %s266 = scalar_lea.vmem [#allocation2], %s265
        %p267 = pneg %p45
        %p268 = pneg %p42
        %p269 = pneg %p66
        %p270 = pneg %p63
        %p271 = pneg %p87
        %p272 = pneg %p84
        %p273 = pneg %p108
        %p274 = pneg %p105
        %p275 = pneg %p129
        %p276 = pneg %p126
        %p277 = pneg %p155
        %p278 = pneg %p152
        %s279 = sand.u32 %s142, 1
        %s280 = scalar_lea.sflag [#allocation4], %s279
        %s281 = sand.u32 %s142, 1
        %s282 = smul.addr %s281, 8
        %s283 = scalar_lea.vmem [#allocation10], %s282
        %v284 = vld [vmem:[%s245] sm:$0xff]
        %v285 = vlaneseq
        %v286 = vshrl.u32 %v285, 7
        %v287 = vsub.s32 0, %v286
        %v288 = vrot.slane %v284, %v287
        %v289 = vlaneseq
        %v290 = vshrl.u32 %v289, 7
        %v291 = vsub.s32 7, %v290
        %v292 = vrot.slane %v284, %v291
        %v294 = vrot.slane %v284, 4
        %vm296 = vcmask 1043456
        %v297 = vsel %vm296, %v288, %v294
        %v298 = vsel %vm296, %v294, %v292
        %v299 = vld [vmem:[#allocation5] sm:$0xff]
        %v300 = vld [vmem:[#allocation5 + $0x8] sm:$0xff]
        %v301 = vld [vmem:[#allocation5 + $0x10] sm:$0xff]
        %v302 = vld [vmem:[#allocation5 + $0x18] sm:$0xff]
        %305 = vrot.lane.b32.xlu0 %v297, 96
        %v306 = vpop.permute.xlu0 %305
        %307 = vrot.lane.b32.xlu0 %v298, 96
        %v308 = vpop.permute.xlu0 %307
        %vm309 = vcmask 261120
        %v310 = vsel %vm309, %v306, 0
        %v312 = vsel %vm309, %v308, 0
        %314 = vmatprep.subr.mxu0 0.0
        %315 = vmatpush1.msra.mxu0 0.0
        %316 = vmatprep.subr.mxu0 0.0
        %317 = vmatpush1.msra.mxu0 0.0
        %318 = vmatprep.subr.mxu0 0.0
        %319 = vmatpush1.msra.mxu0 0.0
        %320 = vmatprep.subr.mxu0 0.0
        %321 = vmatpush1.msra.mxu0 0.0
        %322 = vmatprep.subr.mxu0 0.0
        %323 = vmatpush1.msra.mxu0 0.0
        %324 = vmatprep.subr.mxu0 0.0
        %325 = vmatpush1.msra.mxu0 0.0
        %326 = vmatprep.subr.mxu0 0.0
        %327 = vmatpush1.msra.mxu0 0.0
        %328 = vmatprep.subr.mxu0 0.0
        %329 = vmatpush1.msra.mxu0 0.0
        %330 = vmatprep.subr.mxu0 0.0
        %331 = vmatpush1.msra.mxu0 0.0
        %332 = vmatprep.subr.mxu0 0.0
        %333 = vmatpush1.msra.mxu0 0.0
        %334 = vmatprep.subr.mxu0 0.0
        %335 = vmatpush1.msra.mxu0 0.0
        %336 = vmatprep.subr.mxu0 0.0
        %337 = vmatpush1.msra.mxu0 0.0
        %338 = vmatprep.subr.mxu0 0.0
        %339 = vmatpush1.msra.mxu0 %v302
        %340 = vmatprep.subr.mxu0 0.0
        %341 = vmatpush1.msra.mxu0 %v301
        %342 = vmatprep.subr.mxu0 0.0
        %343 = vmatpush1.msra.mxu0 %v300
        %344 = vmatprep.subr.mxu0 0.0
        %345 = vmatpush1.msra.mxu0 %v299
        %346 = vmatprep.subr.mxu0 0.0
        %347 = vmatpush2.msra.mxu0 0.0
        %348 = vmatprep.subr.mxu0 0.0
        %349 = vmatpush2.msra.mxu0 0.0
        %350 = vmatprep.subr.mxu0 0.0
        %351 = vmatpush2.msra.mxu0 0.0
        %352 = vmatprep.subr.mxu0 0.0
        %353 = vmatpush2.msra.mxu0 0.0
        %354 = vmatprep.subr.mxu0 0.0
        %355 = vmatpush2.msra.mxu0 0.0
        %356 = vmatprep.subr.mxu0 0.0
        %357 = vmatpush2.msra.mxu0 0.0
        %358 = vmatprep.subr.mxu0 0.0
        %359 = vmatpush2.msra.mxu0 0.0
        %360 = vmatprep.subr.mxu0 0.0
        %361 = vmatpush2.msra.mxu0 0.0
        %362 = vmatprep.subr.mxu0 0.0
        %363 = vmatpush2.msra.mxu0 0.0
        %364 = vmatprep.subr.mxu0 0.0
        %365 = vmatpush2.msra.mxu0 0.0
        %366 = vmatprep.subr.mxu0 0.0
        %367 = vmatpush2.msra.mxu0 0.0
        %368 = vmatprep.subr.mxu0 0.0
        %369 = vmatpush2.msra.mxu0 0.0
        %370 = vmatprep.subr.mxu0 0.0
        %371 = vmatpush2.msra.mxu0 0.0
        %372 = vmatprep.subr.mxu0 0.0
        %373 = vmatpush2.msra.mxu0 0.0
        %374 = vmatprep.subr.mxu0 0.0
        %375 = vmatpush2.msra.mxu0 0.0
        %376 = vmatprep.subr.mxu0 0.0
        %377 = vmatpush2.msra.mxu0 0.0
        %378 = vmatprep.mubr.f32.mxu0 0.0
        %379 = vmatmul.mubr.f32.gmra.mxu0 %v310
        %v380 = vpop.f32.mrf.mxu0
        %v381 = vadd.f32 0.0, %v380
        %v382 = vpop.f32.mrf.mxu0
        %383 = vmatprep.mubr.f32.mxu0 0.0
        %384 = vmatmul.mubr.f32.gmra.mxu0 %v312
        %v385 = vpop.f32.mrf.mxu0
        %v386 = vadd.f32 0.0, %v385
        %v387 = vpop.f32.mrf.mxu0
        %388 = vdwg.mxu0
        %s389 = scalar_lea.vmem [#allocation5], 32
        %v390 = vld [vmem:[%s389] sm:$0xff]
        %v391 = vld [vmem:[%s389 + $0x8] sm:$0xff]
        %v392 = vld [vmem:[%s389 + $0x10] sm:$0xff]
        %v393 = vld [vmem:[%s389 + $0x18] sm:$0xff]
        %394 = vmatprep.subr.mxu0 0.0
        %395 = vmatpush1.msra.mxu0 0.0
        %396 = vmatprep.subr.mxu0 0.0
        %397 = vmatpush1.msra.mxu0 0.0
        %398 = vmatprep.subr.mxu0 0.0
        %399 = vmatpush1.msra.mxu0 0.0
        %400 = vmatprep.subr.mxu0 0.0
        %401 = vmatpush1.msra.mxu0 0.0
        %402 = vmatprep.subr.mxu0 0.0
        %403 = vmatpush1.msra.mxu0 0.0
        %404 = vmatprep.subr.mxu0 0.0
        %405 = vmatpush1.msra.mxu0 0.0
        %406 = vmatprep.subr.mxu0 0.0
        %407 = vmatpush1.msra.mxu0 0.0
        %408 = vmatprep.subr.mxu0 0.0
        %409 = vmatpush1.msra.mxu0 0.0
        %410 = vmatprep.subr.mxu0 0.0
        %411 = vmatpush1.msra.mxu0 0.0
        %412 = vmatprep.subr.mxu0 0.0
        %413 = vmatpush1.msra.mxu0 0.0
        %414 = vmatprep.subr.mxu0 0.0
        %415 = vmatpush1.msra.mxu0 0.0
        %416 = vmatprep.subr.mxu0 0.0
        %417 = vmatpush1.msra.mxu0 0.0
        %418 = vmatprep.subr.mxu0 0.0
        %419 = vmatpush1.msra.mxu0 %v393
        %420 = vmatprep.subr.mxu0 0.0
        %421 = vmatpush1.msra.mxu0 %v392
        %422 = vmatprep.subr.mxu0 0.0
        %423 = vmatpush1.msra.mxu0 %v391
        %424 = vmatprep.subr.mxu0 0.0
        %425 = vmatpush1.msra.mxu0 %v390
        %426 = vmatprep.subr.mxu0 0.0
        %427 = vmatpush2.msra.mxu0 0.0
        %428 = vmatprep.subr.mxu0 0.0
        %429 = vmatpush2.msra.mxu0 0.0
        %430 = vmatprep.subr.mxu0 0.0
        %431 = vmatpush2.msra.mxu0 0.0
        %432 = vmatprep.subr.mxu0 0.0
        %433 = vmatpush2.msra.mxu0 0.0
        %434 = vmatprep.subr.mxu0 0.0
        %435 = vmatpush2.msra.mxu0 0.0
        %436 = vmatprep.subr.mxu0 0.0
        %437 = vmatpush2.msra.mxu0 0.0
        %438 = vmatprep.subr.mxu0 0.0
        %439 = vmatpush2.msra.mxu0 0.0
        %440 = vmatprep.subr.mxu0 0.0
        %441 = vmatpush2.msra.mxu0 0.0
        %442 = vmatprep.subr.mxu0 0.0
        %443 = vmatpush2.msra.mxu0 0.0
        %444 = vmatprep.subr.mxu0 0.0
        %445 = vmatpush2.msra.mxu0 0.0
        %446 = vmatprep.subr.mxu0 0.0
        %447 = vmatpush2.msra.mxu0 0.0
        %448 = vmatprep.subr.mxu0 0.0
        %449 = vmatpush2.msra.mxu0 0.0
        %450 = vmatprep.subr.mxu0 0.0
        %451 = vmatpush2.msra.mxu0 0.0
        %452 = vmatprep.subr.mxu0 0.0
        %453 = vmatpush2.msra.mxu0 0.0
        %454 = vmatprep.subr.mxu0 0.0
        %455 = vmatpush2.msra.mxu0 0.0
        %456 = vmatprep.subr.mxu0 0.0
        %457 = vmatpush2.msra.mxu0 0.0
        %458 = vmatprep.mubr.f32.mxu0 0.0
        %459 = vmatmul.mubr.f32.gmra.mxu0 %v310
        %v460 = vpop.f32.mrf.mxu0
        %v461 = vadd.f32 0.0, %v460
        %v462 = vpop.f32.mrf.mxu0
        %463 = vmatprep.mubr.f32.mxu0 0.0
        %464 = vmatmul.mubr.f32.gmra.mxu0 %v312
        %v465 = vpop.f32.mrf.mxu0
        %v466 = vadd.f32 0.0, %v465
        %v467 = vpop.f32.mrf.mxu0
        %468 = vdwg.mxu0
        %vm471 = vcmask 1046528
        %v472 = vrot.slane %v461, 1
        %v473 = vrot.slane %v466, 1
        %v474 = vsel %vm471, %v472, %v473
        %v477 = vadd.f32 %v381, %v474
        %v478 = vadd.f32 %v386, %v473
        %s479 = scalar_lea.vmem [#allocation5], 64
        %v480 = vld [vmem:[%s479] sm:$0xff]
        %v481 = vld [vmem:[%s479 + $0x8] sm:$0xff]
        %v482 = vld [vmem:[%s479 + $0x10] sm:$0xff]
        %v483 = vld [vmem:[%s479 + $0x18] sm:$0xff]
        %484 = vmatprep.subr.mxu0 0.0
        %485 = vmatpush1.msra.mxu0 0.0
        %486 = vmatprep.subr.mxu0 0.0
        %487 = vmatpush1.msra.mxu0 0.0
        %488 = vmatprep.subr.mxu0 0.0
        %489 = vmatpush1.msra.mxu0 0.0
        %490 = vmatprep.subr.mxu0 0.0
        %491 = vmatpush1.msra.mxu0 0.0
        %492 = vmatprep.subr.mxu0 0.0
        %493 = vmatpush1.msra.mxu0 0.0
        %494 = vmatprep.subr.mxu0 0.0
        %495 = vmatpush1.msra.mxu0 0.0
        %496 = vmatprep.subr.mxu0 0.0
        %497 = vmatpush1.msra.mxu0 0.0
        %498 = vmatprep.subr.mxu0 0.0
        %499 = vmatpush1.msra.mxu0 0.0
        %500 = vmatprep.subr.mxu0 0.0
        %501 = vmatpush1.msra.mxu0 0.0
        %502 = vmatprep.subr.mxu0 0.0
        %503 = vmatpush1.msra.mxu0 0.0
        %504 = vmatprep.subr.mxu0 0.0
        %505 = vmatpush1.msra.mxu0 0.0
        %506 = vmatprep.subr.mxu0 0.0
        %507 = vmatpush1.msra.mxu0 0.0
        %508 = vmatprep.subr.mxu0 0.0
        %509 = vmatpush1.msra.mxu0 %v483
        %510 = vmatprep.subr.mxu0 0.0
        %511 = vmatpush1.msra.mxu0 %v482
        %512 = vmatprep.subr.mxu0 0.0
        %513 = vmatpush1.msra.mxu0 %v481
        %514 = vmatprep.subr.mxu0 0.0
        %515 = vmatpush1.msra.mxu0 %v480
        %516 = vmatprep.subr.mxu0 0.0
        %517 = vmatpush2.msra.mxu0 0.0
        %518 = vmatprep.subr.mxu0 0.0
        %519 = vmatpush2.msra.mxu0 0.0
        %520 = vmatprep.subr.mxu0 0.0
        %521 = vmatpush2.msra.mxu0 0.0
        %522 = vmatprep.subr.mxu0 0.0
        %523 = vmatpush2.msra.mxu0 0.0
        %524 = vmatprep.subr.mxu0 0.0
        %525 = vmatpush2.msra.mxu0 0.0
        %526 = vmatprep.subr.mxu0 0.0
        %527 = vmatpush2.msra.mxu0 0.0
        %528 = vmatprep.subr.mxu0 0.0
        %529 = vmatpush2.msra.mxu0 0.0
        %530 = vmatprep.subr.mxu0 0.0
        %531 = vmatpush2.msra.mxu0 0.0
        %532 = vmatprep.subr.mxu0 0.0
        %533 = vmatpush2.msra.mxu0 0.0
        %534 = vmatprep.subr.mxu0 0.0
        %535 = vmatpush2.msra.mxu0 0.0
        %536 = vmatprep.subr.mxu0 0.0
        %537 = vmatpush2.msra.mxu0 0.0
        %538 = vmatprep.subr.mxu0 0.0
        %539 = vmatpush2.msra.mxu0 0.0
        %540 = vmatprep.subr.mxu0 0.0
        %541 = vmatpush2.msra.mxu0 0.0
        %542 = vmatprep.subr.mxu0 0.0
        %543 = vmatpush2.msra.mxu0 0.0
        %544 = vmatprep.subr.mxu0 0.0
        %545 = vmatpush2.msra.mxu0 0.0
        %546 = vmatprep.subr.mxu0 0.0
        %547 = vmatpush2.msra.mxu0 0.0
        %548 = vmatprep.mubr.f32.mxu0 0.0
        %549 = vmatmul.mubr.f32.gmra.mxu0 %v310
        %v550 = vpop.f32.mrf.mxu0
        %v551 = vadd.f32 0.0, %v550
        %v552 = vpop.f32.mrf.mxu0
        %553 = vmatprep.mubr.f32.mxu0 0.0
        %554 = vmatmul.mubr.f32.gmra.mxu0 %v312
        %v555 = vpop.f32.mrf.mxu0
        %v556 = vadd.f32 0.0, %v555
        %v557 = vpop.f32.mrf.mxu0
        %558 = vdwg.mxu0
        %vm561 = vcmask 1045504
        %v562 = vrot.slane %v551, 2
        %v563 = vrot.slane %v556, 2
        %v564 = vsel %vm561, %v562, %v563
        %v567 = vadd.f32 %v477, %v564
        %v568 = vadd.f32 %v478, %v563
        %s569 = scalar_lea.vmem [#allocation5], 96
        %v570 = vld [vmem:[%s569] sm:$0xff]
        %v571 = vld [vmem:[%s569 + $0x8] sm:$0xff]
        %v572 = vld [vmem:[%s569 + $0x10] sm:$0xff]
        %v573 = vld [vmem:[%s569 + $0x18] sm:$0xff]
        %574 = vmatprep.subr.mxu0 0.0
        %575 = vmatpush1.msra.mxu0 0.0
        %576 = vmatprep.subr.mxu0 0.0
        %577 = vmatpush1.msra.mxu0 0.0
        %578 = vmatprep.subr.mxu0 0.0
        %579 = vmatpush1.msra.mxu0 0.0
        %580 = vmatprep.subr.mxu0 0.0
        %581 = vmatpush1.msra.mxu0 0.0
        %582 = vmatprep.subr.mxu0 0.0
        %583 = vmatpush1.msra.mxu0 0.0
        %584 = vmatprep.subr.mxu0 0.0
        %585 = vmatpush1.msra.mxu0 0.0
        %586 = vmatprep.subr.mxu0 0.0
        %587 = vmatpush1.msra.mxu0 0.0
        %588 = vmatprep.subr.mxu0 0.0
        %589 = vmatpush1.msra.mxu0 0.0
        %590 = vmatprep.subr.mxu0 0.0
        %591 = vmatpush1.msra.mxu0 0.0
        %592 = vmatprep.subr.mxu0 0.0
        %593 = vmatpush1.msra.mxu0 0.0
        %594 = vmatprep.subr.mxu0 0.0
        %595 = vmatpush1.msra.mxu0 0.0
        %596 = vmatprep.subr.mxu0 0.0
        %597 = vmatpush1.msra.mxu0 0.0
        %598 = vmatprep.subr.mxu0 0.0
        %599 = vmatpush1.msra.mxu0 %v573
        %600 = vmatprep.subr.mxu0 0.0
        %601 = vmatpush1.msra.mxu0 %v572
        %602 = vmatprep.subr.mxu0 0.0
        %603 = vmatpush1.msra.mxu0 %v571
        %604 = vmatprep.subr.mxu0 0.0
        %605 = vmatpush1.msra.mxu0 %v570
        %606 = vmatprep.subr.mxu0 0.0
        %607 = vmatpush2.msra.mxu0 0.0
        %608 = vmatprep.subr.mxu0 0.0
        %609 = vmatpush2.msra.mxu0 0.0
        %610 = vmatprep.subr.mxu0 0.0
        %611 = vmatpush2.msra.mxu0 0.0
        %612 = vmatprep.subr.mxu0 0.0
        %613 = vmatpush2.msra.mxu0 0.0
        %614 = vmatprep.subr.mxu0 0.0
        %615 = vmatpush2.msra.mxu0 0.0
        %616 = vmatprep.subr.mxu0 0.0
        %617 = vmatpush2.msra.mxu0 0.0
        %618 = vmatprep.subr.mxu0 0.0
        %619 = vmatpush2.msra.mxu0 0.0
        %620 = vmatprep.subr.mxu0 0.0
        %621 = vmatpush2.msra.mxu0 0.0
        %622 = vmatprep.subr.mxu0 0.0
        %623 = vmatpush2.msra.mxu0 0.0
        %624 = vmatprep.subr.mxu0 0.0
        %625 = vmatpush2.msra.mxu0 0.0
        %626 = vmatprep.subr.mxu0 0.0
        %627 = vmatpush2.msra.mxu0 0.0
        %628 = vmatprep.subr.mxu0 0.0
        %629 = vmatpush2.msra.mxu0 0.0
        %630 = vmatprep.subr.mxu0 0.0
        %631 = vmatpush2.msra.mxu0 0.0
        %632 = vmatprep.subr.mxu0 0.0
        %633 = vmatpush2.msra.mxu0 0.0
        %634 = vmatprep.subr.mxu0 0.0
        %635 = vmatpush2.msra.mxu0 0.0
        %636 = vmatprep.subr.mxu0 0.0
        %637 = vmatpush2.msra.mxu0 0.0
        %638 = vmatprep.mubr.f32.mxu0 0.0
        %639 = vmatmul.mubr.f32.gmra.mxu0 %v310
        %v640 = vpop.f32.mrf.mxu0
        %v641 = vadd.f32 0.0, %v640
        %v642 = vpop.f32.mrf.mxu0
        %643 = vmatprep.mubr.f32.mxu0 0.0
        %644 = vmatmul.mubr.f32.gmra.mxu0 %v312
        %v645 = vpop.f32.mrf.mxu0
        %v646 = vadd.f32 0.0, %v645
        %v647 = vpop.f32.mrf.mxu0
        %648 = vdwg.mxu0
        %vm651 = vcmask 1044480
        %v652 = vrot.slane %v641, 3
        %v653 = vrot.slane %v646, 3
        %v654 = vsel %vm651, %v652, %v653
        %v657 = vadd.f32 %v567, %v654
        %v658 = vadd.f32 %v568, %v653
        %s659 = scalar_lea.vmem [#allocation5], 128
        %v660 = vld [vmem:[%s659] sm:$0xff]
        %v661 = vld [vmem:[%s659 + $0x8] sm:$0xff]
        %v662 = vld [vmem:[%s659 + $0x10] sm:$0xff]
        %v663 = vld [vmem:[%s659 + $0x18] sm:$0xff]
        %664 = vmatprep.subr.mxu0 0.0
        %665 = vmatpush1.msra.mxu0 0.0
        %666 = vmatprep.subr.mxu0 0.0
        %667 = vmatpush1.msra.mxu0 0.0
        %668 = vmatprep.subr.mxu0 0.0
        %669 = vmatpush1.msra.mxu0 0.0
        %670 = vmatprep.subr.mxu0 0.0
        %671 = vmatpush1.msra.mxu0 0.0
        %672 = vmatprep.subr.mxu0 0.0
        %673 = vmatpush1.msra.mxu0 0.0
        %674 = vmatprep.subr.mxu0 0.0
        %675 = vmatpush1.msra.mxu0 0.0
        %676 = vmatprep.subr.mxu0 0.0
        %677 = vmatpush1.msra.mxu0 0.0
        %678 = vmatprep.subr.mxu0 0.0
        %679 = vmatpush1.msra.mxu0 0.0
        %680 = vmatprep.subr.mxu0 0.0
        %681 = vmatpush1.msra.mxu0 0.0
        %682 = vmatprep.subr.mxu0 0.0
        %683 = vmatpush1.msra.mxu0 0.0
        %684 = vmatprep.subr.mxu0 0.0
        %685 = vmatpush1.msra.mxu0 0.0
        %686 = vmatprep.subr.mxu0 0.0
        %687 = vmatpush1.msra.mxu0 0.0
        %688 = vmatprep.subr.mxu0 0.0
        %689 = vmatpush1.msra.mxu0 %v663
        %690 = vmatprep.subr.mxu0 0.0
        %691 = vmatpush1.msra.mxu0 %v662
        %692 = vmatprep.subr.mxu0 0.0
        %693 = vmatpush1.msra.mxu0 %v661
        %694 = vmatprep.subr.mxu0 0.0
        %695 = vmatpush1.msra.mxu0 %v660
        %696 = vmatprep.subr.mxu0 0.0
        %697 = vmatpush2.msra.mxu0 0.0
        %698 = vmatprep.subr.mxu0 0.0
        %699 = vmatpush2.msra.mxu0 0.0
        %700 = vmatprep.subr.mxu0 0.0
        %701 = vmatpush2.msra.mxu0 0.0
        %702 = vmatprep.subr.mxu0 0.0
        %703 = vmatpush2.msra.mxu0 0.0
        %704 = vmatprep.subr.mxu0 0.0
        %705 = vmatpush2.msra.mxu0 0.0
        %706 = vmatprep.subr.mxu0 0.0
        %707 = vmatpush2.msra.mxu0 0.0
        %708 = vmatprep.subr.mxu0 0.0
        %709 = vmatpush2.msra.mxu0 0.0
        %710 = vmatprep.subr.mxu0 0.0
        %711 = vmatpush2.msra.mxu0 0.0
        %712 = vmatprep.subr.mxu0 0.0
        %713 = vmatpush2.msra.mxu0 0.0
        %714 = vmatprep.subr.mxu0 0.0
        %715 = vmatpush2.msra.mxu0 0.0
        %716 = vmatprep.subr.mxu0 0.0
        %717 = vmatpush2.msra.mxu0 0.0
        %718 = vmatprep.subr.mxu0 0.0
        %719 = vmatpush2.msra.mxu0 0.0
        %720 = vmatprep.subr.mxu0 0.0
        %721 = vmatpush2.msra.mxu0 0.0
        %722 = vmatprep.subr.mxu0 0.0
        %723 = vmatpush2.msra.mxu0 0.0
        %724 = vmatprep.subr.mxu0 0.0
        %725 = vmatpush2.msra.mxu0 0.0
        %726 = vmatprep.subr.mxu0 0.0
        %727 = vmatpush2.msra.mxu0 0.0
        %728 = vmatprep.mubr.f32.mxu0 0.0
        %729 = vmatmul.mubr.f32.gmra.mxu0 %v310
        %v730 = vpop.f32.mrf.mxu0
        %v731 = vadd.f32 0.0, %v730
        %v732 = vpop.f32.mrf.mxu0
        %733 = vmatprep.mubr.f32.mxu0 0.0
        %734 = vmatmul.mubr.f32.gmra.mxu0 %v312
        %v735 = vpop.f32.mrf.mxu0
        %v736 = vadd.f32 0.0, %v735
        %v737 = vpop.f32.mrf.mxu0
        %738 = vdwg.mxu0
        %v741 = vrot.slane %v731, 4
        %v742 = vrot.slane %v736, 4
        %v743 = vsel %vm296, %v741, %v742
        %v746 = vadd.f32 %v657, %v743
        %v747 = vadd.f32 %v658, %v742
        %v748 = vld [vmem:[#allocation7] sm:$0x1]
        %v750 = vlaneseq
        %v751 = vshrl.u32 %v750, 7
        %v752 = vsub.s32 0, %v751
        %v753 = vrot.slane %v748, %v752
        %v755 = vadd.f32 %v746, %v753
        %v756 = vadd.f32 %v747, %v753
        %vm757 = vcmp.ge.f32.partialorder %v755, 0.0
        %vm758 = vcmp.ge.f32.partialorder %v756, 0.0
        %v759 = vmul.f32 %v755, 0.01
        %v760 = vmul.f32 %v756, 0.01
        %v761 = vsel %vm757, %v755, %v759
        %v762 = vsel %vm758, %v756, %v760
        %v763 = vld [vmem:[#allocation8] sm:$0xff]
        %v764 = vld [vmem:[#allocation8 + $0x8] sm:$0xff]
        %v765 = vld [vmem:[#allocation8 + $0x10] sm:$0xff]
        %v766 = vld [vmem:[#allocation8 + $0x18] sm:$0xff]
        %v768 = vsel %vm309, %v761, 0
        %v771 = vsel %vm309, %v762, 0
        %773 = vmatprep.subr.mxu0 0.0
        %774 = vmatpush1.msra.mxu0 0.0
        %775 = vmatprep.subr.mxu0 0.0
        %776 = vmatpush1.msra.mxu0 0.0
        %777 = vmatprep.subr.mxu0 0.0
        %778 = vmatpush1.msra.mxu0 0.0
        %779 = vmatprep.subr.mxu0 0.0
        %780 = vmatpush1.msra.mxu0 0.0
        %781 = vmatprep.subr.mxu0 0.0
        %782 = vmatpush1.msra.mxu0 0.0
        %783 = vmatprep.subr.mxu0 0.0
        %784 = vmatpush1.msra.mxu0 0.0
        %785 = vmatprep.subr.mxu0 0.0
        %786 = vmatpush1.msra.mxu0 0.0
        %787 = vmatprep.subr.mxu0 0.0
        %788 = vmatpush1.msra.mxu0 0.0
        %789 = vmatprep.subr.mxu0 0.0
        %790 = vmatpush1.msra.mxu0 0.0
        %791 = vmatprep.subr.mxu0 0.0
        %792 = vmatpush1.msra.mxu0 0.0
        %793 = vmatprep.subr.mxu0 0.0
        %794 = vmatpush1.msra.mxu0 0.0
        %795 = vmatprep.subr.mxu0 0.0
        %796 = vmatpush1.msra.mxu0 0.0
        %797 = vmatprep.subr.mxu0 0.0
        %798 = vmatpush1.msra.mxu0 %v766
        %799 = vmatprep.subr.mxu0 0.0
        %800 = vmatpush1.msra.mxu0 %v765
        %801 = vmatprep.subr.mxu0 0.0
        %802 = vmatpush1.msra.mxu0 %v764
        %803 = vmatprep.subr.mxu0 0.0
        %804 = vmatpush1.msra.mxu0 %v763
        %805 = vmatprep.subr.mxu0 0.0
        %806 = vmatpush2.msra.mxu0 0.0
        %807 = vmatprep.subr.mxu0 0.0
        %808 = vmatpush2.msra.mxu0 0.0
        %809 = vmatprep.subr.mxu0 0.0
        %810 = vmatpush2.msra.mxu0 0.0
        %811 = vmatprep.subr.mxu0 0.0
        %812 = vmatpush2.msra.mxu0 0.0
        %813 = vmatprep.subr.mxu0 0.0
        %814 = vmatpush2.msra.mxu0 0.0
        %815 = vmatprep.subr.mxu0 0.0
        %816 = vmatpush2.msra.mxu0 0.0
        %817 = vmatprep.subr.mxu0 0.0
        %818 = vmatpush2.msra.mxu0 0.0
        %819 = vmatprep.subr.mxu0 0.0
        %820 = vmatpush2.msra.mxu0 0.0
        %821 = vmatprep.subr.mxu0 0.0
        %822 = vmatpush2.msra.mxu0 0.0
        %823 = vmatprep.subr.mxu0 0.0
        %824 = vmatpush2.msra.mxu0 0.0
        %825 = vmatprep.subr.mxu0 0.0
        %826 = vmatpush2.msra.mxu0 0.0
        %827 = vmatprep.subr.mxu0 0.0
        %828 = vmatpush2.msra.mxu0 0.0
        %829 = vmatprep.subr.mxu0 0.0
        %830 = vmatpush2.msra.mxu0 0.0
        %831 = vmatprep.subr.mxu0 0.0
        %832 = vmatpush2.msra.mxu0 0.0
        %833 = vmatprep.subr.mxu0 0.0
        %834 = vmatpush2.msra.mxu0 0.0
        %835 = vmatprep.subr.mxu0 0.0
        %836 = vmatpush2.msra.mxu0 0.0
        %837 = vmatprep.mubr.f32.mxu0 0.0
        %838 = vmatmul.mubr.f32.gmra.mxu0 %v768
        %v839 = vpop.f32.mrf.mxu0
        %v840 = vadd.f32 0.0, %v839
        %v841 = vpop.f32.mrf.mxu0
        %842 = vmatprep.mubr.f32.mxu0 0.0
        %843 = vmatmul.mubr.f32.gmra.mxu0 %v771
        %v844 = vpop.f32.mrf.mxu0
        %v845 = vpop.f32.mrf.mxu0
        %846 = vdwg.mxu0
        %s847 = scalar_lea.vmem [#allocation8], 32
        %v848 = vld [vmem:[%s847] sm:$0xff]
        %v849 = vld [vmem:[%s847 + $0x8] sm:$0xff]
        %v850 = vld [vmem:[%s847 + $0x10] sm:$0xff]
        %v851 = vld [vmem:[%s847 + $0x18] sm:$0xff]
        %852 = vmatprep.subr.mxu0 0.0
        %853 = vmatpush1.msra.mxu0 0.0
        %854 = vmatprep.subr.mxu0 0.0
        %855 = vmatpush1.msra.mxu0 0.0
        %856 = vmatprep.subr.mxu0 0.0
        %857 = vmatpush1.msra.mxu0 0.0
        %858 = vmatprep.subr.mxu0 0.0
        %859 = vmatpush1.msra.mxu0 0.0
        %860 = vmatprep.subr.mxu0 0.0
        %861 = vmatpush1.msra.mxu0 0.0
        %862 = vmatprep.subr.mxu0 0.0
        %863 = vmatpush1.msra.mxu0 0.0
        %864 = vmatprep.subr.mxu0 0.0
        %865 = vmatpush1.msra.mxu0 0.0
        %866 = vmatprep.subr.mxu0 0.0
        %867 = vmatpush1.msra.mxu0 0.0
        %868 = vmatprep.subr.mxu0 0.0
        %869 = vmatpush1.msra.mxu0 0.0
        %870 = vmatprep.subr.mxu0 0.0
        %871 = vmatpush1.msra.mxu0 0.0
        %872 = vmatprep.subr.mxu0 0.0
        %873 = vmatpush1.msra.mxu0 0.0
        %874 = vmatprep.subr.mxu0 0.0
        %875 = vmatpush1.msra.mxu0 0.0
        %876 = vmatprep.subr.mxu0 0.0
        %877 = vmatpush1.msra.mxu0 %v851
        %878 = vmatprep.subr.mxu0 0.0
        %879 = vmatpush1.msra.mxu0 %v850
        %880 = vmatprep.subr.mxu0 0.0
        %881 = vmatpush1.msra.mxu0 %v849
        %882 = vmatprep.subr.mxu0 0.0
        %883 = vmatpush1.msra.mxu0 %v848
        %884 = vmatprep.subr.mxu0 0.0
        %885 = vmatpush2.msra.mxu0 0.0
        %886 = vmatprep.subr.mxu0 0.0
        %887 = vmatpush2.msra.mxu0 0.0
        %888 = vmatprep.subr.mxu0 0.0
        %889 = vmatpush2.msra.mxu0 0.0
        %890 = vmatprep.subr.mxu0 0.0
        %891 = vmatpush2.msra.mxu0 0.0
        %892 = vmatprep.subr.mxu0 0.0
        %893 = vmatpush2.msra.mxu0 0.0
        %894 = vmatprep.subr.mxu0 0.0
        %895 = vmatpush2.msra.mxu0 0.0
        %896 = vmatprep.subr.mxu0 0.0
        %897 = vmatpush2.msra.mxu0 0.0
        %898 = vmatprep.subr.mxu0 0.0
        %899 = vmatpush2.msra.mxu0 0.0
        %900 = vmatprep.subr.mxu0 0.0
        %901 = vmatpush2.msra.mxu0 0.0
        %902 = vmatprep.subr.mxu0 0.0
        %903 = vmatpush2.msra.mxu0 0.0
        %904 = vmatprep.subr.mxu0 0.0
        %905 = vmatpush2.msra.mxu0 0.0
        %906 = vmatprep.subr.mxu0 0.0
        %907 = vmatpush2.msra.mxu0 0.0
        %908 = vmatprep.subr.mxu0 0.0
        %909 = vmatpush2.msra.mxu0 0.0
        %910 = vmatprep.subr.mxu0 0.0
        %911 = vmatpush2.msra.mxu0 0.0
        %912 = vmatprep.subr.mxu0 0.0
        %913 = vmatpush2.msra.mxu0 0.0
        %914 = vmatprep.subr.mxu0 0.0
        %915 = vmatpush2.msra.mxu0 0.0
        %916 = vmatprep.mubr.f32.mxu0 0.0
        %917 = vmatmul.mubr.f32.gmra.mxu0 %v768
        %v918 = vpop.f32.mrf.mxu0
        %v919 = vadd.f32 0.0, %v918
        %v920 = vpop.f32.mrf.mxu0
        %921 = vmatprep.mubr.f32.mxu0 0.0
        %922 = vmatmul.mubr.f32.gmra.mxu0 %v771
        %v923 = vpop.f32.mrf.mxu0
        %v924 = vadd.f32 0.0, %v923
        %v925 = vpop.f32.mrf.mxu0
        %926 = vdwg.mxu0
        %v929 = vrot.slane %v919, 1
        %v930 = vrot.slane %v924, 1
        %v931 = vsel %vm471, %v929, %v930
        %v933 = vadd.f32 %v840, %v931
        %s934 = scalar_lea.vmem [#allocation8], 64
        %v935 = vld [vmem:[%s934] sm:$0xff]
        %v936 = vld [vmem:[%s934 + $0x8] sm:$0xff]
        %v937 = vld [vmem:[%s934 + $0x10] sm:$0xff]
        %v938 = vld [vmem:[%s934 + $0x18] sm:$0xff]
        %939 = vmatprep.subr.mxu0 0.0
        %940 = vmatpush1.msra.mxu0 0.0
        %941 = vmatprep.subr.mxu0 0.0
        %942 = vmatpush1.msra.mxu0 0.0
        %943 = vmatprep.subr.mxu0 0.0
        %944 = vmatpush1.msra.mxu0 0.0
        %945 = vmatprep.subr.mxu0 0.0
        %946 = vmatpush1.msra.mxu0 0.0
        %947 = vmatprep.subr.mxu0 0.0
        %948 = vmatpush1.msra.mxu0 0.0
        %949 = vmatprep.subr.mxu0 0.0
        %950 = vmatpush1.msra.mxu0 0.0
        %951 = vmatprep.subr.mxu0 0.0
        %952 = vmatpush1.msra.mxu0 0.0
        %953 = vmatprep.subr.mxu0 0.0
        %954 = vmatpush1.msra.mxu0 0.0
        %955 = vmatprep.subr.mxu0 0.0
        %956 = vmatpush1.msra.mxu0 0.0
        %957 = vmatprep.subr.mxu0 0.0
        %958 = vmatpush1.msra.mxu0 0.0
        %959 = vmatprep.subr.mxu0 0.0
        %960 = vmatpush1.msra.mxu0 0.0
        %961 = vmatprep.subr.mxu0 0.0
        %962 = vmatpush1.msra.mxu0 0.0
        %963 = vmatprep.subr.mxu0 0.0
        %964 = vmatpush1.msra.mxu0 %v938
        %965 = vmatprep.subr.mxu0 0.0
        %966 = vmatpush1.msra.mxu0 %v937
        %967 = vmatprep.subr.mxu0 0.0
        %968 = vmatpush1.msra.mxu0 %v936
        %969 = vmatprep.subr.mxu0 0.0
        %970 = vmatpush1.msra.mxu0 %v935
        %971 = vmatprep.subr.mxu0 0.0
        %972 = vmatpush2.msra.mxu0 0.0
        %973 = vmatprep.subr.mxu0 0.0
        %974 = vmatpush2.msra.mxu0 0.0
        %975 = vmatprep.subr.mxu0 0.0
        %976 = vmatpush2.msra.mxu0 0.0
        %977 = vmatprep.subr.mxu0 0.0
        %978 = vmatpush2.msra.mxu0 0.0
        %979 = vmatprep.subr.mxu0 0.0
        %980 = vmatpush2.msra.mxu0 0.0
        %981 = vmatprep.subr.mxu0 0.0
        %982 = vmatpush2.msra.mxu0 0.0
        %983 = vmatprep.subr.mxu0 0.0
        %984 = vmatpush2.msra.mxu0 0.0
        %985 = vmatprep.subr.mxu0 0.0
        %986 = vmatpush2.msra.mxu0 0.0
        %987 = vmatprep.subr.mxu0 0.0
        %988 = vmatpush2.msra.mxu0 0.0
        %989 = vmatprep.subr.mxu0 0.0
        %990 = vmatpush2.msra.mxu0 0.0
        %991 = vmatprep.subr.mxu0 0.0
        %992 = vmatpush2.msra.mxu0 0.0
        %993 = vmatprep.subr.mxu0 0.0
        %994 = vmatpush2.msra.mxu0 0.0
        %995 = vmatprep.subr.mxu0 0.0
        %996 = vmatpush2.msra.mxu0 0.0
        %997 = vmatprep.subr.mxu0 0.0
        %998 = vmatpush2.msra.mxu0 0.0
        %999 = vmatprep.subr.mxu0 0.0
        %1000 = vmatpush2.msra.mxu0 0.0
        %1001 = vmatprep.subr.mxu0 0.0
        %1002 = vmatpush2.msra.mxu0 0.0
        %1003 = vmatprep.mubr.f32.mxu0 0.0
        %1004 = vmatmul.mubr.f32.gmra.mxu0 %v768
        %v1005 = vpop.f32.mrf.mxu0
        %v1006 = vadd.f32 0.0, %v1005
        %v1007 = vpop.f32.mrf.mxu0
        %1008 = vmatprep.mubr.f32.mxu0 0.0
        %1009 = vmatmul.mubr.f32.gmra.mxu0 %v771
        %v1010 = vpop.f32.mrf.mxu0
        %v1011 = vadd.f32 0.0, %v1010
        %v1012 = vpop.f32.mrf.mxu0
        %1013 = vdwg.mxu0
        %v1016 = vrot.slane %v1006, 2
        %v1017 = vrot.slane %v1011, 2
        %v1018 = vsel %vm561, %v1016, %v1017
        %v1020 = vadd.f32 %v933, %v1018
        %s1021 = scalar_lea.vmem [#allocation8], 96
        %v1022 = vld [vmem:[%s1021] sm:$0xff]
        %v1023 = vld [vmem:[%s1021 + $0x8] sm:$0xff]
        %v1024 = vld [vmem:[%s1021 + $0x10] sm:$0xff]
        %v1025 = vld [vmem:[%s1021 + $0x18] sm:$0xff]
        %1026 = vmatprep.subr.mxu0 0.0
        %1027 = vmatpush1.msra.mxu0 0.0
        %1028 = vmatprep.subr.mxu0 0.0
        %1029 = vmatpush1.msra.mxu0 0.0
        %1030 = vmatprep.subr.mxu0 0.0
        %1031 = vmatpush1.msra.mxu0 0.0
        %1032 = vmatprep.subr.mxu0 0.0
        %1033 = vmatpush1.msra.mxu0 0.0
        %1034 = vmatprep.subr.mxu0 0.0
        %1035 = vmatpush1.msra.mxu0 0.0
        %1036 = vmatprep.subr.mxu0 0.0
        %1037 = vmatpush1.msra.mxu0 0.0
        %1038 = vmatprep.subr.mxu0 0.0
        %1039 = vmatpush1.msra.mxu0 0.0
        %1040 = vmatprep.subr.mxu0 0.0
        %1041 = vmatpush1.msra.mxu0 0.0
        %1042 = vmatprep.subr.mxu0 0.0
        %1043 = vmatpush1.msra.mxu0 0.0
        %1044 = vmatprep.subr.mxu0 0.0
        %1045 = vmatpush1.msra.mxu0 0.0
        %1046 = vmatprep.subr.mxu0 0.0
        %1047 = vmatpush1.msra.mxu0 0.0
        %1048 = vmatprep.subr.mxu0 0.0
        %1049 = vmatpush1.msra.mxu0 0.0
        %1050 = vmatprep.subr.mxu0 0.0
        %1051 = vmatpush1.msra.mxu0 %v1025
        %1052 = vmatprep.subr.mxu0 0.0
        %1053 = vmatpush1.msra.mxu0 %v1024
        %1054 = vmatprep.subr.mxu0 0.0
        %1055 = vmatpush1.msra.mxu0 %v1023
        %1056 = vmatprep.subr.mxu0 0.0
        %1057 = vmatpush1.msra.mxu0 %v1022
        %1058 = vmatprep.subr.mxu0 0.0
        %1059 = vmatpush2.msra.mxu0 0.0
        %1060 = vmatprep.subr.mxu0 0.0
        %1061 = vmatpush2.msra.mxu0 0.0
        %1062 = vmatprep.subr.mxu0 0.0
        %1063 = vmatpush2.msra.mxu0 0.0
        %1064 = vmatprep.subr.mxu0 0.0
        %1065 = vmatpush2.msra.mxu0 0.0
        %1066 = vmatprep.subr.mxu0 0.0
        %1067 = vmatpush2.msra.mxu0 0.0
        %1068 = vmatprep.subr.mxu0 0.0
        %1069 = vmatpush2.msra.mxu0 0.0
        %1070 = vmatprep.subr.mxu0 0.0
        %1071 = vmatpush2.msra.mxu0 0.0
        %1072 = vmatprep.subr.mxu0 0.0
        %1073 = vmatpush2.msra.mxu0 0.0
        %1074 = vmatprep.subr.mxu0 0.0
        %1075 = vmatpush2.msra.mxu0 0.0
        %1076 = vmatprep.subr.mxu0 0.0
        %1077 = vmatpush2.msra.mxu0 0.0
        %1078 = vmatprep.subr.mxu0 0.0
        %1079 = vmatpush2.msra.mxu0 0.0
        %1080 = vmatprep.subr.mxu0 0.0
        %1081 = vmatpush2.msra.mxu0 0.0
        %1082 = vmatprep.subr.mxu0 0.0
        %1083 = vmatpush2.msra.mxu0 0.0
        %1084 = vmatprep.subr.mxu0 0.0
        %1085 = vmatpush2.msra.mxu0 0.0
        %1086 = vmatprep.subr.mxu0 0.0
        %1087 = vmatpush2.msra.mxu0 0.0
        %1088 = vmatprep.subr.mxu0 0.0
        %1089 = vmatpush2.msra.mxu0 0.0
        %1090 = vmatprep.mubr.f32.mxu0 0.0
        %1091 = vmatmul.mubr.f32.gmra.mxu0 %v768
        %v1092 = vpop.f32.mrf.mxu0
        %v1093 = vadd.f32 0.0, %v1092
        %v1094 = vpop.f32.mrf.mxu0
        %1095 = vmatprep.mubr.f32.mxu0 0.0
        %1096 = vmatmul.mubr.f32.gmra.mxu0 %v771
        %v1097 = vpop.f32.mrf.mxu0
        %v1098 = vadd.f32 0.0, %v1097
        %v1099 = vpop.f32.mrf.mxu0
        %1100 = vdwg.mxu0
        %v1103 = vrot.slane %v1093, 3
        %v1104 = vrot.slane %v1098, 3
        %v1105 = vsel %vm651, %v1103, %v1104
        %v1107 = vadd.f32 %v1020, %v1105
        %s1108 = scalar_lea.vmem [#allocation8], 128
        %v1109 = vld [vmem:[%s1108] sm:$0xff]
        %v1110 = vld [vmem:[%s1108 + $0x8] sm:$0xff]
        %v1111 = vld [vmem:[%s1108 + $0x10] sm:$0xff]
        %v1112 = vld [vmem:[%s1108 + $0x18] sm:$0xff]
        %1113 = vmatprep.subr.mxu0 0.0
        %1114 = vmatpush1.msra.mxu0 0.0
        %1115 = vmatprep.subr.mxu0 0.0
        %1116 = vmatpush1.msra.mxu0 0.0
        %1117 = vmatprep.subr.mxu0 0.0
        %1118 = vmatpush1.msra.mxu0 0.0
        %1119 = vmatprep.subr.mxu0 0.0
        %1120 = vmatpush1.msra.mxu0 0.0
        %1121 = vmatprep.subr.mxu0 0.0
        %1122 = vmatpush1.msra.mxu0 0.0
        %1123 = vmatprep.subr.mxu0 0.0
        %1124 = vmatpush1.msra.mxu0 0.0
        %1125 = vmatprep.subr.mxu0 0.0
        %1126 = vmatpush1.msra.mxu0 0.0
        %1127 = vmatprep.subr.mxu0 0.0
        %1128 = vmatpush1.msra.mxu0 0.0
        %1129 = vmatprep.subr.mxu0 0.0
        %1130 = vmatpush1.msra.mxu0 0.0
        %1131 = vmatprep.subr.mxu0 0.0
        %1132 = vmatpush1.msra.mxu0 0.0
        %1133 = vmatprep.subr.mxu0 0.0
        %1134 = vmatpush1.msra.mxu0 0.0
        %1135 = vmatprep.subr.mxu0 0.0
        %1136 = vmatpush1.msra.mxu0 0.0
        %1137 = vmatprep.subr.mxu0 0.0
        %1138 = vmatpush1.msra.mxu0 %v1112
        %1139 = vmatprep.subr.mxu0 0.0
        %1140 = vmatpush1.msra.mxu0 %v1111
        %1141 = vmatprep.subr.mxu0 0.0
        %1142 = vmatpush1.msra.mxu0 %v1110
        %1143 = vmatprep.subr.mxu0 0.0
        %1144 = vmatpush1.msra.mxu0 %v1109
        %1145 = vmatprep.subr.mxu0 0.0
        %1146 = vmatpush2.msra.mxu0 0.0
        %1147 = vmatprep.subr.mxu0 0.0
        %1148 = vmatpush2.msra.mxu0 0.0
        %1149 = vmatprep.subr.mxu0 0.0
        %1150 = vmatpush2.msra.mxu0 0.0
        %1151 = vmatprep.subr.mxu0 0.0
        %1152 = vmatpush2.msra.mxu0 0.0
        %1153 = vmatprep.subr.mxu0 0.0
        %1154 = vmatpush2.msra.mxu0 0.0
        %1155 = vmatprep.subr.mxu0 0.0
        %1156 = vmatpush2.msra.mxu0 0.0
        %1157 = vmatprep.subr.mxu0 0.0
        %1158 = vmatpush2.msra.mxu0 0.0
        %1159 = vmatprep.subr.mxu0 0.0
        %1160 = vmatpush2.msra.mxu0 0.0
        %1161 = vmatprep.subr.mxu0 0.0
        %1162 = vmatpush2.msra.mxu0 0.0
        %1163 = vmatprep.subr.mxu0 0.0
        %1164 = vmatpush2.msra.mxu0 0.0
        %1165 = vmatprep.subr.mxu0 0.0
        %1166 = vmatpush2.msra.mxu0 0.0
        %1167 = vmatprep.subr.mxu0 0.0
        %1168 = vmatpush2.msra.mxu0 0.0
        %1169 = vmatprep.subr.mxu0 0.0
        %1170 = vmatpush2.msra.mxu0 0.0
        %1171 = vmatprep.subr.mxu0 0.0
        %1172 = vmatpush2.msra.mxu0 0.0
        %1173 = vmatprep.subr.mxu0 0.0
        %1174 = vmatpush2.msra.mxu0 0.0
        %1175 = vmatprep.subr.mxu0 0.0
        %1176 = vmatpush2.msra.mxu0 0.0
        %1177 = vmatprep.mubr.f32.mxu0 0.0
        %1178 = vmatmul.mubr.f32.gmra.mxu0 %v768
        %v1179 = vpop.f32.mrf.mxu0
        %v1180 = vadd.f32 0.0, %v1179
        %v1181 = vpop.f32.mrf.mxu0
        %1182 = vmatprep.mubr.f32.mxu0 0.0
        %1183 = vmatmul.mubr.f32.gmra.mxu0 %v771
        %v1184 = vpop.f32.mrf.mxu0
        %v1185 = vadd.f32 0.0, %v1184
        %v1186 = vpop.f32.mrf.mxu0
        %1187 = vdwg.mxu0
        %v1190 = vrot.slane %v1180, 4
        %v1191 = vrot.slane %v1185, 4
        %v1192 = vsel %vm296, %v1190, %v1191
        %v1194 = vadd.f32 %v1107, %v1192
        %v1195 = vld [vmem:[%s4] sm:$0x1]
        %v1197 = vlaneseq
        %v1198 = vshrl.u32 %v1197, 7
        %v1199 = vsub.s32 0, %v1198
        %v1200 = vrot.slane %v1195, %v1199
        %v1202 = vadd.f32 %v1194, %v1200
        %v1203 = vtanh.pop %v1202
        %v1204 = vmul.f32 %v1203, 1.442695
        %v1205 = vpow.pop %v1204
        %v1206 = vmul.f32 %v284, %v1205
        %s1207 = scalar_lea.vmem [#allocation5], 160
        %v1208 = vld [vmem:[%s1207] sm:$0xff]
        %v1209 = vld [vmem:[%s1207 + $0x8] sm:$0xff]
        %v1210 = vld [vmem:[%s1207 + $0x10] sm:$0xff]
        %v1211 = vld [vmem:[%s1207 + $0x18] sm:$0xff]
        %v1212 = vsel %vm309, %v297, 0
        %v1214 = vsel %vm309, %v298, 0
        %1216 = vmatprep.subr.mxu0 0.0
        %1217 = vmatpush1.msra.mxu0 0.0
        %1218 = vmatprep.subr.mxu0 0.0
        %1219 = vmatpush1.msra.mxu0 0.0
        %1220 = vmatprep.subr.mxu0 0.0
        %1221 = vmatpush1.msra.mxu0 0.0
        %1222 = vmatprep.subr.mxu0 0.0
        %1223 = vmatpush1.msra.mxu0 0.0
        %1224 = vmatprep.subr.mxu0 0.0
        %1225 = vmatpush1.msra.mxu0 0.0
        %1226 = vmatprep.subr.mxu0 0.0
        %1227 = vmatpush1.msra.mxu0 0.0
        %1228 = vmatprep.subr.mxu0 0.0
        %1229 = vmatpush1.msra.mxu0 0.0
        %1230 = vmatprep.subr.mxu0 0.0
        %1231 = vmatpush1.msra.mxu0 0.0
        %1232 = vmatprep.subr.mxu0 0.0
        %1233 = vmatpush1.msra.mxu0 0.0
        %1234 = vmatprep.subr.mxu0 0.0
        %1235 = vmatpush1.msra.mxu0 0.0
        %1236 = vmatprep.subr.mxu0 0.0
        %1237 = vmatpush1.msra.mxu0 0.0
        %1238 = vmatprep.subr.mxu0 0.0
        %1239 = vmatpush1.msra.mxu0 0.0
        %1240 = vmatprep.subr.mxu0 0.0
        %1241 = vmatpush1.msra.mxu0 %v1211
        %1242 = vmatprep.subr.mxu0 0.0
        %1243 = vmatpush1.msra.mxu0 %v1210
        %1244 = vmatprep.subr.mxu0 0.0
        %1245 = vmatpush1.msra.mxu0 %v1209
        %1246 = vmatprep.subr.mxu0 0.0
        %1247 = vmatpush1.msra.mxu0 %v1208
        %1248 = vmatprep.subr.mxu0 0.0
        %1249 = vmatpush2.msra.mxu0 0.0
        %1250 = vmatprep.subr.mxu0 0.0
        %1251 = vmatpush2.msra.mxu0 0.0
        %1252 = vmatprep.subr.mxu0 0.0
        %1253 = vmatpush2.msra.mxu0 0.0
        %1254 = vmatprep.subr.mxu0 0.0
        %1255 = vmatpush2.msra.mxu0 0.0
        %1256 = vmatprep.subr.mxu0 0.0
        %1257 = vmatpush2.msra.mxu0 0.0
        %1258 = vmatprep.subr.mxu0 0.0
        %1259 = vmatpush2.msra.mxu0 0.0
        %1260 = vmatprep.subr.mxu0 0.0
        %1261 = vmatpush2.msra.mxu0 0.0
        %1262 = vmatprep.subr.mxu0 0.0
        %1263 = vmatpush2.msra.mxu0 0.0
        %1264 = vmatprep.subr.mxu0 0.0
        %1265 = vmatpush2.msra.mxu0 0.0
        %1266 = vmatprep.subr.mxu0 0.0
        %1267 = vmatpush2.msra.mxu0 0.0
        %1268 = vmatprep.subr.mxu0 0.0
        %1269 = vmatpush2.msra.mxu0 0.0
        %1270 = vmatprep.subr.mxu0 0.0
        %1271 = vmatpush2.msra.mxu0 0.0
        %1272 = vmatprep.subr.mxu0 0.0
        %1273 = vmatpush2.msra.mxu0 0.0
        %1274 = vmatprep.subr.mxu0 0.0
        %1275 = vmatpush2.msra.mxu0 0.0
        %1276 = vmatprep.subr.mxu0 0.0
        %1277 = vmatpush2.msra.mxu0 0.0
        %1278 = vmatprep.subr.mxu0 0.0
        %1279 = vmatpush2.msra.mxu0 0.0
        %1280 = vmatprep.mubr.f32.mxu0 0.0
        %1281 = vmatmul.mubr.f32.gmra.mxu0 %v1212
        %v1282 = vpop.f32.mrf.mxu0
        %v1283 = vadd.f32 0.0, %v1282
        %v1284 = vpop.f32.mrf.mxu0
        %1285 = vmatprep.mubr.f32.mxu0 0.0
        %1286 = vmatmul.mubr.f32.gmra.mxu0 %v1214
        %v1287 = vpop.f32.mrf.mxu0
        %v1288 = vadd.f32 0.0, %v1287
        %v1289 = vpop.f32.mrf.mxu0
        %1290 = vdwg.mxu0
        %s1291 = scalar_lea.vmem [#allocation5], 192
        %v1292 = vld [vmem:[%s1291] sm:$0xff]
        %v1293 = vld [vmem:[%s1291 + $0x8] sm:$0xff]
        %v1294 = vld [vmem:[%s1291 + $0x10] sm:$0xff]
        %v1295 = vld [vmem:[%s1291 + $0x18] sm:$0xff]
        %1296 = vmatprep.subr.mxu0 0.0
        %1297 = vmatpush1.msra.mxu0 0.0
        %1298 = vmatprep.subr.mxu0 0.0
        %1299 = vmatpush1.msra.mxu0 0.0
        %1300 = vmatprep.subr.mxu0 0.0
        %1301 = vmatpush1.msra.mxu0 0.0
        %1302 = vmatprep.subr.mxu0 0.0
        %1303 = vmatpush1.msra.mxu0 0.0
        %1304 = vmatprep.subr.mxu0 0.0
        %1305 = vmatpush1.msra.mxu0 0.0
        %1306 = vmatprep.subr.mxu0 0.0
        %1307 = vmatpush1.msra.mxu0 0.0
        %1308 = vmatprep.subr.mxu0 0.0
        %1309 = vmatpush1.msra.mxu0 0.0
        %1310 = vmatprep.subr.mxu0 0.0
        %1311 = vmatpush1.msra.mxu0 0.0
        %1312 = vmatprep.subr.mxu0 0.0
        %1313 = vmatpush1.msra.mxu0 0.0
        %1314 = vmatprep.subr.mxu0 0.0
        %1315 = vmatpush1.msra.mxu0 0.0
        %1316 = vmatprep.subr.mxu0 0.0
        %1317 = vmatpush1.msra.mxu0 0.0
        %1318 = vmatprep.subr.mxu0 0.0
        %1319 = vmatpush1.msra.mxu0 0.0
        %1320 = vmatprep.subr.mxu0 0.0
        %1321 = vmatpush1.msra.mxu0 %v1295
        %1322 = vmatprep.subr.mxu0 0.0
        %1323 = vmatpush1.msra.mxu0 %v1294
        %1324 = vmatprep.subr.mxu0 0.0
        %1325 = vmatpush1.msra.mxu0 %v1293
        %1326 = vmatprep.subr.mxu0 0.0
        %1327 = vmatpush1.msra.mxu0 %v1292
        %1328 = vmatprep.subr.mxu0 0.0
        %1329 = vmatpush2.msra.mxu0 0.0
        %1330 = vmatprep.subr.mxu0 0.0
        %1331 = vmatpush2.msra.mxu0 0.0
        %1332 = vmatprep.subr.mxu0 0.0
        %1333 = vmatpush2.msra.mxu0 0.0
        %1334 = vmatprep.subr.mxu0 0.0
        %1335 = vmatpush2.msra.mxu0 0.0
        %1336 = vmatprep.subr.mxu0 0.0
        %1337 = vmatpush2.msra.mxu0 0.0
        %1338 = vmatprep.subr.mxu0 0.0
        %1339 = vmatpush2.msra.mxu0 0.0
        %1340 = vmatprep.subr.mxu0 0.0
        %1341 = vmatpush2.msra.mxu0 0.0
        %1342 = vmatprep.subr.mxu0 0.0
        %1343 = vmatpush2.msra.mxu0 0.0
        %1344 = vmatprep.subr.mxu0 0.0
        %1345 = vmatpush2.msra.mxu0 0.0
        %1346 = vmatprep.subr.mxu0 0.0
        %1347 = vmatpush2.msra.mxu0 0.0
        %1348 = vmatprep.subr.mxu0 0.0
        %1349 = vmatpush2.msra.mxu0 0.0
        %1350 = vmatprep.subr.mxu0 0.0
        %1351 = vmatpush2.msra.mxu0 0.0
        %1352 = vmatprep.subr.mxu0 0.0
        %1353 = vmatpush2.msra.mxu0 0.0
        %1354 = vmatprep.subr.mxu0 0.0
        %1355 = vmatpush2.msra.mxu0 0.0
        %1356 = vmatprep.subr.mxu0 0.0
        %1357 = vmatpush2.msra.mxu0 0.0
        %1358 = vmatprep.subr.mxu0 0.0
        %1359 = vmatpush2.msra.mxu0 0.0
        %1360 = vmatprep.mubr.f32.mxu0 0.0
        %1361 = vmatmul.mubr.f32.gmra.mxu0 %v1212
        %v1362 = vpop.f32.mrf.mxu0
        %v1363 = vadd.f32 0.0, %v1362
        %v1364 = vpop.f32.mrf.mxu0
        %1365 = vmatprep.mubr.f32.mxu0 0.0
        %1366 = vmatmul.mubr.f32.gmra.mxu0 %v1214
        %v1367 = vpop.f32.mrf.mxu0
        %v1368 = vadd.f32 0.0, %v1367
        %v1369 = vpop.f32.mrf.mxu0
        %1370 = vdwg.mxu0
        %v1373 = vrot.slane %v1363, 1
        %v1374 = vrot.slane %v1368, 1
        %v1375 = vsel %vm471, %v1373, %v1374
        %v1378 = vadd.f32 %v1283, %v1375
        %v1379 = vadd.f32 %v1288, %v1374
        %s1380 = scalar_lea.vmem [#allocation5], 224
        %v1381 = vld [vmem:[%s1380] sm:$0xff]
        %v1382 = vld [vmem:[%s1380 + $0x8] sm:$0xff]
        %v1383 = vld [vmem:[%s1380 + $0x10] sm:$0xff]
        %v1384 = vld [vmem:[%s1380 + $0x18] sm:$0xff]
        %1385 = vmatprep.subr.mxu0 0.0
        %1386 = vmatpush1.msra.mxu0 0.0
        %1387 = vmatprep.subr.mxu0 0.0
        %1388 = vmatpush1.msra.mxu0 0.0
        %1389 = vmatprep.subr.mxu0 0.0
        %1390 = vmatpush1.msra.mxu0 0.0
        %1391 = vmatprep.subr.mxu0 0.0
        %1392 = vmatpush1.msra.mxu0 0.0
        %1393 = vmatprep.subr.mxu0 0.0
        %1394 = vmatpush1.msra.mxu0 0.0
        %1395 = vmatprep.subr.mxu0 0.0
        %1396 = vmatpush1.msra.mxu0 0.0
        %1397 = vmatprep.subr.mxu0 0.0
        %1398 = vmatpush1.msra.mxu0 0.0
        %1399 = vmatprep.subr.mxu0 0.0
        %1400 = vmatpush1.msra.mxu0 0.0
        %1401 = vmatprep.subr.mxu0 0.0
        %1402 = vmatpush1.msra.mxu0 0.0
        %1403 = vmatprep.subr.mxu0 0.0
        %1404 = vmatpush1.msra.mxu0 0.0
        %1405 = vmatprep.subr.mxu0 0.0
        %1406 = vmatpush1.msra.mxu0 0.0
        %1407 = vmatprep.subr.mxu0 0.0
        %1408 = vmatpush1.msra.mxu0 0.0
        %1409 = vmatprep.subr.mxu0 0.0
        %1410 = vmatpush1.msra.mxu0 %v1384
        %1411 = vmatprep.subr.mxu0 0.0
        %1412 = vmatpush1.msra.mxu0 %v1383
        %1413 = vmatprep.subr.mxu0 0.0
        %1414 = vmatpush1.msra.mxu0 %v1382
        %1415 = vmatprep.subr.mxu0 0.0
        %1416 = vmatpush1.msra.mxu0 %v1381
        %1417 = vmatprep.subr.mxu0 0.0
        %1418 = vmatpush2.msra.mxu0 0.0
        %1419 = vmatprep.subr.mxu0 0.0
        %1420 = vmatpush2.msra.mxu0 0.0
        %1421 = vmatprep.subr.mxu0 0.0
        %1422 = vmatpush2.msra.mxu0 0.0
        %1423 = vmatprep.subr.mxu0 0.0
        %1424 = vmatpush2.msra.mxu0 0.0
        %1425 = vmatprep.subr.mxu0 0.0
        %1426 = vmatpush2.msra.mxu0 0.0
        %1427 = vmatprep.subr.mxu0 0.0
        %1428 = vmatpush2.msra.mxu0 0.0
        %1429 = vmatprep.subr.mxu0 0.0
        %1430 = vmatpush2.msra.mxu0 0.0
        %1431 = vmatprep.subr.mxu0 0.0
        %1432 = vmatpush2.msra.mxu0 0.0
        %1433 = vmatprep.subr.mxu0 0.0
        %1434 = vmatpush2.msra.mxu0 0.0
        %1435 = vmatprep.subr.mxu0 0.0
        %1436 = vmatpush2.msra.mxu0 0.0
        %1437 = vmatprep.subr.mxu0 0.0
        %1438 = vmatpush2.msra.mxu0 0.0
        %1439 = vmatprep.subr.mxu0 0.0
        %1440 = vmatpush2.msra.mxu0 0.0
        %1441 = vmatprep.subr.mxu0 0.0
        %1442 = vmatpush2.msra.mxu0 0.0
        %1443 = vmatprep.subr.mxu0 0.0
        %1444 = vmatpush2.msra.mxu0 0.0
        %1445 = vmatprep.subr.mxu0 0.0
        %1446 = vmatpush2.msra.mxu0 0.0
        %1447 = vmatprep.subr.mxu0 0.0
        %1448 = vmatpush2.msra.mxu0 0.0
        %1449 = vmatprep.mubr.f32.mxu0 0.0
        %1450 = vmatmul.mubr.f32.gmra.mxu0 %v1212
        %v1451 = vpop.f32.mrf.mxu0
        %v1452 = vadd.f32 0.0, %v1451
        %v1453 = vpop.f32.mrf.mxu0
        %1454 = vmatprep.mubr.f32.mxu0 0.0
        %1455 = vmatmul.mubr.f32.gmra.mxu0 %v1214
        %v1456 = vpop.f32.mrf.mxu0
        %v1457 = vadd.f32 0.0, %v1456
        %v1458 = vpop.f32.mrf.mxu0
        %1459 = vdwg.mxu0
        %v1462 = vrot.slane %v1452, 2
        %v1463 = vrot.slane %v1457, 2
        %v1464 = vsel %vm561, %v1462, %v1463
        %v1467 = vadd.f32 %v1378, %v1464
        %v1468 = vadd.f32 %v1379, %v1463
        %s1469 = scalar_lea.vmem [#allocation5], 256
        %v1470 = vld [vmem:[%s1469] sm:$0xff]
        %v1471 = vld [vmem:[%s1469 + $0x8] sm:$0xff]
        %v1472 = vld [vmem:[%s1469 + $0x10] sm:$0xff]
        %v1473 = vld [vmem:[%s1469 + $0x18] sm:$0xff]
        %1474 = vmatprep.subr.mxu0 0.0
        %1475 = vmatpush1.msra.mxu0 0.0
        %1476 = vmatprep.subr.mxu0 0.0
        %1477 = vmatpush1.msra.mxu0 0.0
        %1478 = vmatprep.subr.mxu0 0.0
        %1479 = vmatpush1.msra.mxu0 0.0
        %1480 = vmatprep.subr.mxu0 0.0
        %1481 = vmatpush1.msra.mxu0 0.0
        %1482 = vmatprep.subr.mxu0 0.0
        %1483 = vmatpush1.msra.mxu0 0.0
        %1484 = vmatprep.subr.mxu0 0.0
        %1485 = vmatpush1.msra.mxu0 0.0
        %1486 = vmatprep.subr.mxu0 0.0
        %1487 = vmatpush1.msra.mxu0 0.0
        %1488 = vmatprep.subr.mxu0 0.0
        %1489 = vmatpush1.msra.mxu0 0.0
        %1490 = vmatprep.subr.mxu0 0.0
        %1491 = vmatpush1.msra.mxu0 0.0
        %1492 = vmatprep.subr.mxu0 0.0
        %1493 = vmatpush1.msra.mxu0 0.0
        %1494 = vmatprep.subr.mxu0 0.0
        %1495 = vmatpush1.msra.mxu0 0.0
        %1496 = vmatprep.subr.mxu0 0.0
        %1497 = vmatpush1.msra.mxu0 0.0
        %1498 = vmatprep.subr.mxu0 0.0
        %1499 = vmatpush1.msra.mxu0 %v1473
        %1500 = vmatprep.subr.mxu0 0.0
        %1501 = vmatpush1.msra.mxu0 %v1472
        %1502 = vmatprep.subr.mxu0 0.0
        %1503 = vmatpush1.msra.mxu0 %v1471
        %1504 = vmatprep.subr.mxu0 0.0
        %1505 = vmatpush1.msra.mxu0 %v1470
        %1506 = vmatprep.subr.mxu0 0.0
        %1507 = vmatpush2.msra.mxu0 0.0
        %1508 = vmatprep.subr.mxu0 0.0
        %1509 = vmatpush2.msra.mxu0 0.0
        %1510 = vmatprep.subr.mxu0 0.0
        %1511 = vmatpush2.msra.mxu0 0.0
        %1512 = vmatprep.subr.mxu0 0.0
        %1513 = vmatpush2.msra.mxu0 0.0
        %1514 = vmatprep.subr.mxu0 0.0
        %1515 = vmatpush2.msra.mxu0 0.0
        %1516 = vmatprep.subr.mxu0 0.0
        %1517 = vmatpush2.msra.mxu0 0.0
        %1518 = vmatprep.subr.mxu0 0.0
        %1519 = vmatpush2.msra.mxu0 0.0
        %1520 = vmatprep.subr.mxu0 0.0
        %1521 = vmatpush2.msra.mxu0 0.0
        %1522 = vmatprep.subr.mxu0 0.0
        %1523 = vmatpush2.msra.mxu0 0.0
        %1524 = vmatprep.subr.mxu0 0.0
        %1525 = vmatpush2.msra.mxu0 0.0
        %1526 = vmatprep.subr.mxu0 0.0
        %1527 = vmatpush2.msra.mxu0 0.0
        %1528 = vmatprep.subr.mxu0 0.0
        %1529 = vmatpush2.msra.mxu0 0.0
        %1530 = vmatprep.subr.mxu0 0.0
        %1531 = vmatpush2.msra.mxu0 0.0
        %1532 = vmatprep.subr.mxu0 0.0
        %1533 = vmatpush2.msra.mxu0 0.0
        %1534 = vmatprep.subr.mxu0 0.0
        %1535 = vmatpush2.msra.mxu0 0.0
        %1536 = vmatprep.subr.mxu0 0.0
        %1537 = vmatpush2.msra.mxu0 0.0
        %1538 = vmatprep.mubr.f32.mxu0 0.0
        %1539 = vmatmul.mubr.f32.gmra.mxu0 %v1212
        %v1540 = vpop.f32.mrf.mxu0
        %v1541 = vadd.f32 0.0, %v1540
        %v1542 = vpop.f32.mrf.mxu0
        %1543 = vmatprep.mubr.f32.mxu0 0.0
        %1544 = vmatmul.mubr.f32.gmra.mxu0 %v1214
        %v1545 = vpop.f32.mrf.mxu0
        %v1546 = vadd.f32 0.0, %v1545
        %v1547 = vpop.f32.mrf.mxu0
        %1548 = vdwg.mxu0
        %v1551 = vrot.slane %v1541, 3
        %v1552 = vrot.slane %v1546, 3
        %v1553 = vsel %vm651, %v1551, %v1552
        %v1556 = vadd.f32 %v1467, %v1553
        %v1557 = vadd.f32 %v1468, %v1552
        %s1558 = scalar_lea.vmem [#allocation5], 288
        %v1559 = vld [vmem:[%s1558] sm:$0xff]
        %v1560 = vld [vmem:[%s1558 + $0x8] sm:$0xff]
        %v1561 = vld [vmem:[%s1558 + $0x10] sm:$0xff]
        %v1562 = vld [vmem:[%s1558 + $0x18] sm:$0xff]
        %1563 = vmatprep.subr.mxu0 0.0
        %1564 = vmatpush1.msra.mxu0 0.0
        %1565 = vmatprep.subr.mxu0 0.0
        %1566 = vmatpush1.msra.mxu0 0.0
        %1567 = vmatprep.subr.mxu0 0.0
        %1568 = vmatpush1.msra.mxu0 0.0
        %1569 = vmatprep.subr.mxu0 0.0
        %1570 = vmatpush1.msra.mxu0 0.0
        %1571 = vmatprep.subr.mxu0 0.0
        %1572 = vmatpush1.msra.mxu0 0.0
        %1573 = vmatprep.subr.mxu0 0.0
        %1574 = vmatpush1.msra.mxu0 0.0
        %1575 = vmatprep.subr.mxu0 0.0
        %1576 = vmatpush1.msra.mxu0 0.0
        %1577 = vmatprep.subr.mxu0 0.0
        %1578 = vmatpush1.msra.mxu0 0.0
        %1579 = vmatprep.subr.mxu0 0.0
        %1580 = vmatpush1.msra.mxu0 0.0
        %1581 = vmatprep.subr.mxu0 0.0
        %1582 = vmatpush1.msra.mxu0 0.0
        %1583 = vmatprep.subr.mxu0 0.0
        %1584 = vmatpush1.msra.mxu0 0.0
        %1585 = vmatprep.subr.mxu0 0.0
        %1586 = vmatpush1.msra.mxu0 0.0
        %1587 = vmatprep.subr.mxu0 0.0
        %1588 = vmatpush1.msra.mxu0 %v1562
        %1589 = vmatprep.subr.mxu0 0.0
        %1590 = vmatpush1.msra.mxu0 %v1561
        %1591 = vmatprep.subr.mxu0 0.0
        %1592 = vmatpush1.msra.mxu0 %v1560
        %1593 = vmatprep.subr.mxu0 0.0
        %1594 = vmatpush1.msra.mxu0 %v1559
        %1595 = vmatprep.subr.mxu0 0.0
        %1596 = vmatpush2.msra.mxu0 0.0
        %1597 = vmatprep.subr.mxu0 0.0
        %1598 = vmatpush2.msra.mxu0 0.0
        %1599 = vmatprep.subr.mxu0 0.0
        %1600 = vmatpush2.msra.mxu0 0.0
        %1601 = vmatprep.subr.mxu0 0.0
        %1602 = vmatpush2.msra.mxu0 0.0
        %1603 = vmatprep.subr.mxu0 0.0
        %1604 = vmatpush2.msra.mxu0 0.0
        %1605 = vmatprep.subr.mxu0 0.0
        %1606 = vmatpush2.msra.mxu0 0.0
        %1607 = vmatprep.subr.mxu0 0.0
        %1608 = vmatpush2.msra.mxu0 0.0
        %1609 = vmatprep.subr.mxu0 0.0
        %1610 = vmatpush2.msra.mxu0 0.0
        %1611 = vmatprep.subr.mxu0 0.0
        %1612 = vmatpush2.msra.mxu0 0.0
        %1613 = vmatprep.subr.mxu0 0.0
        %1614 = vmatpush2.msra.mxu0 0.0
        %1615 = vmatprep.subr.mxu0 0.0
        %1616 = vmatpush2.msra.mxu0 0.0
        %1617 = vmatprep.subr.mxu0 0.0
        %1618 = vmatpush2.msra.mxu0 0.0
        %1619 = vmatprep.subr.mxu0 0.0
        %1620 = vmatpush2.msra.mxu0 0.0
        %1621 = vmatprep.subr.mxu0 0.0
        %1622 = vmatpush2.msra.mxu0 0.0
        %1623 = vmatprep.subr.mxu0 0.0
        %1624 = vmatpush2.msra.mxu0 0.0
        %1625 = vmatprep.subr.mxu0 0.0
        %1626 = vmatpush2.msra.mxu0 0.0
        %1627 = vmatprep.mubr.f32.mxu0 0.0
        %1628 = vmatmul.mubr.f32.gmra.mxu0 %v1212
        %v1629 = vpop.f32.mrf.mxu0
        %v1630 = vadd.f32 0.0, %v1629
        %v1631 = vpop.f32.mrf.mxu0
        %1632 = vmatprep.mubr.f32.mxu0 0.0
        %1633 = vmatmul.mubr.f32.gmra.mxu0 %v1214
        %v1634 = vpop.f32.mrf.mxu0
        %v1635 = vadd.f32 0.0, %v1634
        %v1636 = vpop.f32.mrf.mxu0
        %1637 = vdwg.mxu0
        %v1640 = vrot.slane %v1630, 4
        %v1641 = vrot.slane %v1635, 4
        %v1642 = vsel %vm296, %v1640, %v1641
        %v1645 = vadd.f32 %v1556, %v1642
        %v1646 = vadd.f32 %v1557, %v1641
        %s1647 = scalar_lea.vmem [#allocation7], 1
        %v1648 = vld [vmem:[%s1647] sm:$0x1]
        %v1650 = vlaneseq
        %v1651 = vshrl.u32 %v1650, 7
        %v1652 = vsub.s32 0, %v1651
        %v1653 = vrot.slane %v1648, %v1652
        %v1655 = vadd.f32 %v1645, %v1653
        %v1656 = vadd.f32 %v1646, %v1653
        %vm1657 = vcmp.ge.f32.partialorder %v1655, 0.0
        %vm1658 = vcmp.ge.f32.partialorder %v1656, 0.0
        %v1659 = vmul.f32 %v1655, 0.01
        %v1660 = vmul.f32 %v1656, 0.01
        %v1661 = vsel %vm1657, %v1655, %v1659
        %v1662 = vsel %vm1658, %v1656, %v1660
        %s1663 = scalar_lea.vmem [#allocation8], 160
        %v1664 = vld [vmem:[%s1663] sm:$0xff]
        %v1665 = vld [vmem:[%s1663 + $0x8] sm:$0xff]
        %v1666 = vld [vmem:[%s1663 + $0x10] sm:$0xff]
        %v1667 = vld [vmem:[%s1663 + $0x18] sm:$0xff]
        %v1669 = vsel %vm309, %v1661, 0
        %v1672 = vsel %vm309, %v1662, 0
        %1674 = vmatprep.subr.mxu0 0.0
        %1675 = vmatpush1.msra.mxu0 0.0
        %1676 = vmatprep.subr.mxu0 0.0
        %1677 = vmatpush1.msra.mxu0 0.0
        %1678 = vmatprep.subr.mxu0 0.0
        %1679 = vmatpush1.msra.mxu0 0.0
        %1680 = vmatprep.subr.mxu0 0.0
        %1681 = vmatpush1.msra.mxu0 0.0
        %1682 = vmatprep.subr.mxu0 0.0
        %1683 = vmatpush1.msra.mxu0 0.0
        %1684 = vmatprep.subr.mxu0 0.0
        %1685 = vmatpush1.msra.mxu0 0.0
        %1686 = vmatprep.subr.mxu0 0.0
        %1687 = vmatpush1.msra.mxu0 0.0
        %1688 = vmatprep.subr.mxu0 0.0
        %1689 = vmatpush1.msra.mxu0 0.0
        %1690 = vmatprep.subr.mxu0 0.0
        %1691 = vmatpush1.msra.mxu0 0.0
        %1692 = vmatprep.subr.mxu0 0.0
        %1693 = vmatpush1.msra.mxu0 0.0
        %1694 = vmatprep.subr.mxu0 0.0
        %1695 = vmatpush1.msra.mxu0 0.0
        %1696 = vmatprep.subr.mxu0 0.0
        %1697 = vmatpush1.msra.mxu0 0.0
        %1698 = vmatprep.subr.mxu0 0.0
        %1699 = vmatpush1.msra.mxu0 %v1667
        %1700 = vmatprep.subr.mxu0 0.0
        %1701 = vmatpush1.msra.mxu0 %v1666
        %1702 = vmatprep.subr.mxu0 0.0
        %1703 = vmatpush1.msra.mxu0 %v1665
        %1704 = vmatprep.subr.mxu0 0.0
        %1705 = vmatpush1.msra.mxu0 %v1664
        %1706 = vmatprep.subr.mxu0 0.0
        %1707 = vmatpush2.msra.mxu0 0.0
        %1708 = vmatprep.subr.mxu0 0.0
        %1709 = vmatpush2.msra.mxu0 0.0
        %1710 = vmatprep.subr.mxu0 0.0
        %1711 = vmatpush2.msra.mxu0 0.0
        %1712 = vmatprep.subr.mxu0 0.0
        %1713 = vmatpush2.msra.mxu0 0.0
        %1714 = vmatprep.subr.mxu0 0.0
        %1715 = vmatpush2.msra.mxu0 0.0
        %1716 = vmatprep.subr.mxu0 0.0
        %1717 = vmatpush2.msra.mxu0 0.0
        %1718 = vmatprep.subr.mxu0 0.0
        %1719 = vmatpush2.msra.mxu0 0.0
        %1720 = vmatprep.subr.mxu0 0.0
        %1721 = vmatpush2.msra.mxu0 0.0
        %1722 = vmatprep.subr.mxu0 0.0
        %1723 = vmatpush2.msra.mxu0 0.0
        %1724 = vmatprep.subr.mxu0 0.0
        %1725 = vmatpush2.msra.mxu0 0.0
        %1726 = vmatprep.subr.mxu0 0.0
        %1727 = vmatpush2.msra.mxu0 0.0
        %1728 = vmatprep.subr.mxu0 0.0
        %1729 = vmatpush2.msra.mxu0 0.0
        %1730 = vmatprep.subr.mxu0 0.0
        %1731 = vmatpush2.msra.mxu0 0.0
        %1732 = vmatprep.subr.mxu0 0.0
        %1733 = vmatpush2.msra.mxu0 0.0
        %1734 = vmatprep.subr.mxu0 0.0
        %1735 = vmatpush2.msra.mxu0 0.0
        %1736 = vmatprep.subr.mxu0 0.0
        %1737 = vmatpush2.msra.mxu0 0.0
        %1738 = vmatprep.mubr.f32.mxu0 0.0
        %1739 = vmatmul.mubr.f32.gmra.mxu0 %v1669
        %v1740 = vpop.f32.mrf.mxu0
        %v1741 = vadd.f32 0.0, %v1740
        %v1742 = vpop.f32.mrf.mxu0
        %1743 = vmatprep.mubr.f32.mxu0 0.0
        %1744 = vmatmul.mubr.f32.gmra.mxu0 %v1672
        %v1745 = vpop.f32.mrf.mxu0
        %v1746 = vpop.f32.mrf.mxu0
        %1747 = vdwg.mxu0
        %s1748 = scalar_lea.vmem [#allocation8], 192
        %v1749 = vld [vmem:[%s1748] sm:$0xff]
        %v1750 = vld [vmem:[%s1748 + $0x8] sm:$0xff]
        %v1751 = vld [vmem:[%s1748 + $0x10] sm:$0xff]
        %v1752 = vld [vmem:[%s1748 + $0x18] sm:$0xff]
        %1753 = vmatprep.subr.mxu0 0.0
        %1754 = vmatpush1.msra.mxu0 0.0
        %1755 = vmatprep.subr.mxu0 0.0
        %1756 = vmatpush1.msra.mxu0 0.0
        %1757 = vmatprep.subr.mxu0 0.0
        %1758 = vmatpush1.msra.mxu0 0.0
        %1759 = vmatprep.subr.mxu0 0.0
        %1760 = vmatpush1.msra.mxu0 0.0
        %1761 = vmatprep.subr.mxu0 0.0
        %1762 = vmatpush1.msra.mxu0 0.0
        %1763 = vmatprep.subr.mxu0 0.0
        %1764 = vmatpush1.msra.mxu0 0.0
        %1765 = vmatprep.subr.mxu0 0.0
        %1766 = vmatpush1.msra.mxu0 0.0
        %1767 = vmatprep.subr.mxu0 0.0
        %1768 = vmatpush1.msra.mxu0 0.0
        %1769 = vmatprep.subr.mxu0 0.0
        %1770 = vmatpush1.msra.mxu0 0.0
        %1771 = vmatprep.subr.mxu0 0.0
        %1772 = vmatpush1.msra.mxu0 0.0
        %1773 = vmatprep.subr.mxu0 0.0
        %1774 = vmatpush1.msra.mxu0 0.0
        %1775 = vmatprep.subr.mxu0 0.0
        %1776 = vmatpush1.msra.mxu0 0.0
        %1777 = vmatprep.subr.mxu0 0.0
        %1778 = vmatpush1.msra.mxu0 %v1752
        %1779 = vmatprep.subr.mxu0 0.0
        %1780 = vmatpush1.msra.mxu0 %v1751
        %1781 = vmatprep.subr.mxu0 0.0
        %1782 = vmatpush1.msra.mxu0 %v1750
        %1783 = vmatprep.subr.mxu0 0.0
        %1784 = vmatpush1.msra.mxu0 %v1749
        %1785 = vmatprep.subr.mxu0 0.0
        %1786 = vmatpush2.msra.mxu0 0.0
        %1787 = vmatprep.subr.mxu0 0.0
        %1788 = vmatpush2.msra.mxu0 0.0
        %1789 = vmatprep.subr.mxu0 0.0
        %1790 = vmatpush2.msra.mxu0 0.0
        %1791 = vmatprep.subr.mxu0 0.0
        %1792 = vmatpush2.msra.mxu0 0.0
        %1793 = vmatprep.subr.mxu0 0.0
        %1794 = vmatpush2.msra.mxu0 0.0
        %1795 = vmatprep.subr.mxu0 0.0
        %1796 = vmatpush2.msra.mxu0 0.0
        %1797 = vmatprep.subr.mxu0 0.0
        %1798 = vmatpush2.msra.mxu0 0.0
        %1799 = vmatprep.subr.mxu0 0.0
        %1800 = vmatpush2.msra.mxu0 0.0
        %1801 = vmatprep.subr.mxu0 0.0
        %1802 = vmatpush2.msra.mxu0 0.0
        %1803 = vmatprep.subr.mxu0 0.0
        %1804 = vmatpush2.msra.mxu0 0.0
        %1805 = vmatprep.subr.mxu0 0.0
        %1806 = vmatpush2.msra.mxu0 0.0
        %1807 = vmatprep.subr.mxu0 0.0
        %1808 = vmatpush2.msra.mxu0 0.0
        %1809 = vmatprep.subr.mxu0 0.0
        %1810 = vmatpush2.msra.mxu0 0.0
        %1811 = vmatprep.subr.mxu0 0.0
        %1812 = vmatpush2.msra.mxu0 0.0
        %1813 = vmatprep.subr.mxu0 0.0
        %1814 = vmatpush2.msra.mxu0 0.0
        %1815 = vmatprep.subr.mxu0 0.0
        %1816 = vmatpush2.msra.mxu0 0.0
        %1817 = vmatprep.mubr.f32.mxu0 0.0
        %1818 = vmatmul.mubr.f32.gmra.mxu0 %v1669
        %v1819 = vpop.f32.mrf.mxu0
        %v1820 = vadd.f32 0.0, %v1819
        %v1821 = vpop.f32.mrf.mxu0
        %1822 = vmatprep.mubr.f32.mxu0 0.0
        %1823 = vmatmul.mubr.f32.gmra.mxu0 %v1672
        %v1824 = vpop.f32.mrf.mxu0
        %v1825 = vadd.f32 0.0, %v1824
        %v1826 = vpop.f32.mrf.mxu0
        %1827 = vdwg.mxu0
        %v1830 = vrot.slane %v1820, 1
        %v1831 = vrot.slane %v1825, 1
        %v1832 = vsel %vm471, %v1830, %v1831
        %v1834 = vadd.f32 %v1741, %v1832
        %s1835 = scalar_lea.vmem [#allocation8], 224
        %v1836 = vld [vmem:[%s1835] sm:$0xff]
        %v1837 = vld [vmem:[%s1835 + $0x8] sm:$0xff]
        %v1838 = vld [vmem:[%s1835 + $0x10] sm:$0xff]
        %v1839 = vld [vmem:[%s1835 + $0x18] sm:$0xff]
        %1840 = vmatprep.subr.mxu0 0.0
        %1841 = vmatpush1.msra.mxu0 0.0
        %1842 = vmatprep.subr.mxu0 0.0
        %1843 = vmatpush1.msra.mxu0 0.0
        %1844 = vmatprep.subr.mxu0 0.0
        %1845 = vmatpush1.msra.mxu0 0.0
        %1846 = vmatprep.subr.mxu0 0.0
        %1847 = vmatpush1.msra.mxu0 0.0
        %1848 = vmatprep.subr.mxu0 0.0
        %1849 = vmatpush1.msra.mxu0 0.0
        %1850 = vmatprep.subr.mxu0 0.0
        %1851 = vmatpush1.msra.mxu0 0.0
        %1852 = vmatprep.subr.mxu0 0.0
        %1853 = vmatpush1.msra.mxu0 0.0
        %1854 = vmatprep.subr.mxu0 0.0
        %1855 = vmatpush1.msra.mxu0 0.0
        %1856 = vmatprep.subr.mxu0 0.0
        %1857 = vmatpush1.msra.mxu0 0.0
        %1858 = vmatprep.subr.mxu0 0.0
        %1859 = vmatpush1.msra.mxu0 0.0
        %1860 = vmatprep.subr.mxu0 0.0
        %1861 = vmatpush1.msra.mxu0 0.0
        %1862 = vmatprep.subr.mxu0 0.0
        %1863 = vmatpush1.msra.mxu0 0.0
        %1864 = vmatprep.subr.mxu0 0.0
        %1865 = vmatpush1.msra.mxu0 %v1839
        %1866 = vmatprep.subr.mxu0 0.0
        %1867 = vmatpush1.msra.mxu0 %v1838
        %1868 = vmatprep.subr.mxu0 0.0
        %1869 = vmatpush1.msra.mxu0 %v1837
        %1870 = vmatprep.subr.mxu0 0.0
        %1871 = vmatpush1.msra.mxu0 %v1836
        %1872 = vmatprep.subr.mxu0 0.0
        %1873 = vmatpush2.msra.mxu0 0.0
        %1874 = vmatprep.subr.mxu0 0.0
        %1875 = vmatpush2.msra.mxu0 0.0
        %1876 = vmatprep.subr.mxu0 0.0
        %1877 = vmatpush2.msra.mxu0 0.0
        %1878 = vmatprep.subr.mxu0 0.0
        %1879 = vmatpush2.msra.mxu0 0.0
        %1880 = vmatprep.subr.mxu0 0.0
        %1881 = vmatpush2.msra.mxu0 0.0
        %1882 = vmatprep.subr.mxu0 0.0
        %1883 = vmatpush2.msra.mxu0 0.0
        %1884 = vmatprep.subr.mxu0 0.0
        %1885 = vmatpush2.msra.mxu0 0.0
        %1886 = vmatprep.subr.mxu0 0.0
        %1887 = vmatpush2.msra.mxu0 0.0
        %1888 = vmatprep.subr.mxu0 0.0
        %1889 = vmatpush2.msra.mxu0 0.0
        %1890 = vmatprep.subr.mxu0 0.0
        %1891 = vmatpush2.msra.mxu0 0.0
        %1892 = vmatprep.subr.mxu0 0.0
        %1893 = vmatpush2.msra.mxu0 0.0
        %1894 = vmatprep.subr.mxu0 0.0
        %1895 = vmatpush2.msra.mxu0 0.0
        %1896 = vmatprep.subr.mxu0 0.0
        %1897 = vmatpush2.msra.mxu0 0.0
        %1898 = vmatprep.subr.mxu0 0.0
        %1899 = vmatpush2.msra.mxu0 0.0
        %1900 = vmatprep.subr.mxu0 0.0
        %1901 = vmatpush2.msra.mxu0 0.0
        %1902 = vmatprep.subr.mxu0 0.0
        %1903 = vmatpush2.msra.mxu0 0.0
        %1904 = vmatprep.mubr.f32.mxu0 0.0
        %1905 = vmatmul.mubr.f32.gmra.mxu0 %v1669
        %v1906 = vpop.f32.mrf.mxu0
        %v1907 = vadd.f32 0.0, %v1906
        %v1908 = vpop.f32.mrf.mxu0
        %1909 = vmatprep.mubr.f32.mxu0 0.0
        %1910 = vmatmul.mubr.f32.gmra.mxu0 %v1672
        %v1911 = vpop.f32.mrf.mxu0
        %v1912 = vadd.f32 0.0, %v1911
        %v1913 = vpop.f32.mrf.mxu0
        %1914 = vdwg.mxu0
        %v1917 = vrot.slane %v1907, 2
        %v1918 = vrot.slane %v1912, 2
        %v1919 = vsel %vm561, %v1917, %v1918
        %v1921 = vadd.f32 %v1834, %v1919
        %s1922 = scalar_lea.vmem [#allocation8], 256
        %v1923 = vld [vmem:[%s1922] sm:$0xff]
        %v1924 = vld [vmem:[%s1922 + $0x8] sm:$0xff]
        %v1925 = vld [vmem:[%s1922 + $0x10] sm:$0xff]
        %v1926 = vld [vmem:[%s1922 + $0x18] sm:$0xff]
        %1927 = vmatprep.subr.mxu0 0.0
        %1928 = vmatpush1.msra.mxu0 0.0
        %1929 = vmatprep.subr.mxu0 0.0
        %1930 = vmatpush1.msra.mxu0 0.0
        %1931 = vmatprep.subr.mxu0 0.0
        %1932 = vmatpush1.msra.mxu0 0.0
        %1933 = vmatprep.subr.mxu0 0.0
        %1934 = vmatpush1.msra.mxu0 0.0
        %1935 = vmatprep.subr.mxu0 0.0
        %1936 = vmatpush1.msra.mxu0 0.0
        %1937 = vmatprep.subr.mxu0 0.0
        %1938 = vmatpush1.msra.mxu0 0.0
        %1939 = vmatprep.subr.mxu0 0.0
        %1940 = vmatpush1.msra.mxu0 0.0
        %1941 = vmatprep.subr.mxu0 0.0
        %1942 = vmatpush1.msra.mxu0 0.0
        %1943 = vmatprep.subr.mxu0 0.0
        %1944 = vmatpush1.msra.mxu0 0.0
        %1945 = vmatprep.subr.mxu0 0.0
        %1946 = vmatpush1.msra.mxu0 0.0
        %1947 = vmatprep.subr.mxu0 0.0
        %1948 = vmatpush1.msra.mxu0 0.0
        %1949 = vmatprep.subr.mxu0 0.0
        %1950 = vmatpush1.msra.mxu0 0.0
        %1951 = vmatprep.subr.mxu0 0.0
        %1952 = vmatpush1.msra.mxu0 %v1926
        %1953 = vmatprep.subr.mxu0 0.0
        %1954 = vmatpush1.msra.mxu0 %v1925
        %1955 = vmatprep.subr.mxu0 0.0
        %1956 = vmatpush1.msra.mxu0 %v1924
        %1957 = vmatprep.subr.mxu0 0.0
        %1958 = vmatpush1.msra.mxu0 %v1923
        %1959 = vmatprep.subr.mxu0 0.0
        %1960 = vmatpush2.msra.mxu0 0.0
        %1961 = vmatprep.subr.mxu0 0.0
        %1962 = vmatpush2.msra.mxu0 0.0
        %1963 = vmatprep.subr.mxu0 0.0
        %1964 = vmatpush2.msra.mxu0 0.0
        %1965 = vmatprep.subr.mxu0 0.0
        %1966 = vmatpush2.msra.mxu0 0.0
        %1967 = vmatprep.subr.mxu0 0.0
        %1968 = vmatpush2.msra.mxu0 0.0
        %1969 = vmatprep.subr.mxu0 0.0
        %1970 = vmatpush2.msra.mxu0 0.0
        %1971 = vmatprep.subr.mxu0 0.0
        %1972 = vmatpush2.msra.mxu0 0.0
        %1973 = vmatprep.subr.mxu0 0.0
        %1974 = vmatpush2.msra.mxu0 0.0
        %1975 = vmatprep.subr.mxu0 0.0
        %1976 = vmatpush2.msra.mxu0 0.0
        %1977 = vmatprep.subr.mxu0 0.0
        %1978 = vmatpush2.msra.mxu0 0.0
        %1979 = vmatprep.subr.mxu0 0.0
        %1980 = vmatpush2.msra.mxu0 0.0
        %1981 = vmatprep.subr.mxu0 0.0
        %1982 = vmatpush2.msra.mxu0 0.0
        %1983 = vmatprep.subr.mxu0 0.0
        %1984 = vmatpush2.msra.mxu0 0.0
        %1985 = vmatprep.subr.mxu0 0.0
        %1986 = vmatpush2.msra.mxu0 0.0
        %1987 = vmatprep.subr.mxu0 0.0
        %1988 = vmatpush2.msra.mxu0 0.0
        %1989 = vmatprep.subr.mxu0 0.0
        %1990 = vmatpush2.msra.mxu0 0.0
        %1991 = vmatprep.mubr.f32.mxu0 0.0
        %1992 = vmatmul.mubr.f32.gmra.mxu0 %v1669
        %v1993 = vpop.f32.mrf.mxu0
        %v1994 = vadd.f32 0.0, %v1993
        %v1995 = vpop.f32.mrf.mxu0
        %1996 = vmatprep.mubr.f32.mxu0 0.0
        %1997 = vmatmul.mubr.f32.gmra.mxu0 %v1672
        %v1998 = vpop.f32.mrf.mxu0
        %v1999 = vadd.f32 0.0, %v1998
        %v2000 = vpop.f32.mrf.mxu0
        %2001 = vdwg.mxu0
        %v2004 = vrot.slane %v1994, 3
        %v2005 = vrot.slane %v1999, 3
        %v2006 = vsel %vm651, %v2004, %v2005
        %v2008 = vadd.f32 %v1921, %v2006
        %s2009 = scalar_lea.vmem [#allocation8], 288
        %v2010 = vld [vmem:[%s2009] sm:$0xff]
        %v2011 = vld [vmem:[%s2009 + $0x8] sm:$0xff]
        %v2012 = vld [vmem:[%s2009 + $0x10] sm:$0xff]
        %v2013 = vld [vmem:[%s2009 + $0x18] sm:$0xff]
        %2014 = vmatprep.subr.mxu0 0.0
        %2015 = vmatpush1.msra.mxu0 0.0
        %2016 = vmatprep.subr.mxu0 0.0
        %2017 = vmatpush1.msra.mxu0 0.0
        %2018 = vmatprep.subr.mxu0 0.0
        %2019 = vmatpush1.msra.mxu0 0.0
        %2020 = vmatprep.subr.mxu0 0.0
        %2021 = vmatpush1.msra.mxu0 0.0
        %2022 = vmatprep.subr.mxu0 0.0
        %2023 = vmatpush1.msra.mxu0 0.0
        %2024 = vmatprep.subr.mxu0 0.0
        %2025 = vmatpush1.msra.mxu0 0.0
        %2026 = vmatprep.subr.mxu0 0.0
        %2027 = vmatpush1.msra.mxu0 0.0
        %2028 = vmatprep.subr.mxu0 0.0
        %2029 = vmatpush1.msra.mxu0 0.0
        %2030 = vmatprep.subr.mxu0 0.0
        %2031 = vmatpush1.msra.mxu0 0.0
        %2032 = vmatprep.subr.mxu0 0.0
        %2033 = vmatpush1.msra.mxu0 0.0
        %2034 = vmatprep.subr.mxu0 0.0
        %2035 = vmatpush1.msra.mxu0 0.0
        %2036 = vmatprep.subr.mxu0 0.0
        %2037 = vmatpush1.msra.mxu0 0.0
        %2038 = vmatprep.subr.mxu0 0.0
        %2039 = vmatpush1.msra.mxu0 %v2013
        %2040 = vmatprep.subr.mxu0 0.0
        %2041 = vmatpush1.msra.mxu0 %v2012
        %2042 = vmatprep.subr.mxu0 0.0
        %2043 = vmatpush1.msra.mxu0 %v2011
        %2044 = vmatprep.subr.mxu0 0.0
        %2045 = vmatpush1.msra.mxu0 %v2010
        %2046 = vmatprep.subr.mxu0 0.0
        %2047 = vmatpush2.msra.mxu0 0.0
        %2048 = vmatprep.subr.mxu0 0.0
        %2049 = vmatpush2.msra.mxu0 0.0
        %2050 = vmatprep.subr.mxu0 0.0
        %2051 = vmatpush2.msra.mxu0 0.0
        %2052 = vmatprep.subr.mxu0 0.0
        %2053 = vmatpush2.msra.mxu0 0.0
        %2054 = vmatprep.subr.mxu0 0.0
        %2055 = vmatpush2.msra.mxu0 0.0
        %2056 = vmatprep.subr.mxu0 0.0
        %2057 = vmatpush2.msra.mxu0 0.0
        %2058 = vmatprep.subr.mxu0 0.0
        %2059 = vmatpush2.msra.mxu0 0.0
        %2060 = vmatprep.subr.mxu0 0.0
        %2061 = vmatpush2.msra.mxu0 0.0
        %2062 = vmatprep.subr.mxu0 0.0
        %2063 = vmatpush2.msra.mxu0 0.0
        %2064 = vmatprep.subr.mxu0 0.0
        %2065 = vmatpush2.msra.mxu0 0.0
        %2066 = vmatprep.subr.mxu0 0.0
        %2067 = vmatpush2.msra.mxu0 0.0
        %2068 = vmatprep.subr.mxu0 0.0
        %2069 = vmatpush2.msra.mxu0 0.0
        %2070 = vmatprep.subr.mxu0 0.0
        %2071 = vmatpush2.msra.mxu0 0.0
        %2072 = vmatprep.subr.mxu0 0.0
        %2073 = vmatpush2.msra.mxu0 0.0
        %2074 = vmatprep.subr.mxu0 0.0
        %2075 = vmatpush2.msra.mxu0 0.0
        %2076 = vmatprep.subr.mxu0 0.0
        %2077 = vmatpush2.msra.mxu0 0.0
        %2078 = vmatprep.mubr.f32.mxu0 0.0
        %2079 = vmatmul.mubr.f32.gmra.mxu0 %v1669
        %v2080 = vpop.f32.mrf.mxu0
        %v2081 = vadd.f32 0.0, %v2080
        %v2082 = vpop.f32.mrf.mxu0
        %2083 = vmatprep.mubr.f32.mxu0 0.0
        %2084 = vmatmul.mubr.f32.gmra.mxu0 %v1672
        %v2085 = vpop.f32.mrf.mxu0
        %v2086 = vadd.f32 0.0, %v2085
        %v2087 = vpop.f32.mrf.mxu0
        %2088 = vdwg.mxu0
        %v2091 = vrot.slane %v2081, 4
        %v2092 = vrot.slane %v2086, 4
        %v2093 = vsel %vm296, %v2091, %v2092
        %v2095 = vadd.f32 %v2008, %v2093
        %s2096 = scalar_lea.vmem %s4, 1
        %v2097 = vld [vmem:[%s2096] sm:$0x1]
        %v2099 = vlaneseq
        %v2100 = vshrl.u32 %v2099, 7
        %v2101 = vsub.s32 0, %v2100
        %v2102 = vrot.slane %v2097, %v2101
        %v2104 = vadd.f32 %v2095, %v2102
        %v2105 = vtanh.pop %v2104
        %v2106 = vmul.f32 %v2105, 1.442695
        %v2107 = vpow.pop %v2106
        %2109 = vrot.lane.b32.xlu0 %v2107, 32
        %v2110 = vpop.permute.xlu0 %2109
        %v2112 = vmul.f32 %v284, %v2110
        %v2113 = vlaneseq
        %v2114 = vshrl.u32 %v2113, 7
        %v2115 = vsub.s32 0, %v2114
        %v2116 = vrot.slane %v2112, %v2115
        %v2117 = vlaneseq
        %v2118 = vshrl.u32 %v2117, 7
        %v2119 = vsub.s32 7, %v2118
        %v2120 = vrot.slane %v2112, %v2119
        %v2122 = vrot.slane %v2112, 4
        %v2124 = vsel %vm296, %v2116, %v2122
        %v2125 = vsel %vm296, %v2122, %v2120
        %s2126 = scalar_lea.vmem [#allocation5], 320
        %v2127 = vld [vmem:[%s2126] sm:$0xff]
        %v2128 = vld [vmem:[%s2126 + $0x8] sm:$0xff]
        %v2129 = vld [vmem:[%s2126 + $0x10] sm:$0xff]
        %v2130 = vld [vmem:[%s2126 + $0x18] sm:$0xff]
        %2133 = vrot.lane.b32.xlu0 %v2124, 96
        %v2134 = vpop.permute.xlu0 %2133
        %2135 = vrot.lane.b32.xlu0 %v2125, 96
        %v2136 = vpop.permute.xlu0 %2135
        %v2137 = vsel %vm309, %v2134, 0
        %v2139 = vsel %vm309, %v2136, 0
        %2141 = vmatprep.subr.mxu0 0.0
        %2142 = vmatpush1.msra.mxu0 0.0
        %2143 = vmatprep.subr.mxu0 0.0
        %2144 = vmatpush1.msra.mxu0 0.0
        %2145 = vmatprep.subr.mxu0 0.0
        %2146 = vmatpush1.msra.mxu0 0.0
        %2147 = vmatprep.subr.mxu0 0.0
        %2148 = vmatpush1.msra.mxu0 0.0
        %2149 = vmatprep.subr.mxu0 0.0
        %2150 = vmatpush1.msra.mxu0 0.0
        %2151 = vmatprep.subr.mxu0 0.0
        %2152 = vmatpush1.msra.mxu0 0.0
        %2153 = vmatprep.subr.mxu0 0.0
        %2154 = vmatpush1.msra.mxu0 0.0
        %2155 = vmatprep.subr.mxu0 0.0
        %2156 = vmatpush1.msra.mxu0 0.0
        %2157 = vmatprep.subr.mxu0 0.0
        %2158 = vmatpush1.msra.mxu0 0.0
        %2159 = vmatprep.subr.mxu0 0.0
        %2160 = vmatpush1.msra.mxu0 0.0
        %2161 = vmatprep.subr.mxu0 0.0
        %2162 = vmatpush1.msra.mxu0 0.0
        %2163 = vmatprep.subr.mxu0 0.0
        %2164 = vmatpush1.msra.mxu0 0.0
        %2165 = vmatprep.subr.mxu0 0.0
        %2166 = vmatpush1.msra.mxu0 %v2130
        %2167 = vmatprep.subr.mxu0 0.0
        %2168 = vmatpush1.msra.mxu0 %v2129
        %2169 = vmatprep.subr.mxu0 0.0
        %2170 = vmatpush1.msra.mxu0 %v2128
        %2171 = vmatprep.subr.mxu0 0.0
        %2172 = vmatpush1.msra.mxu0 %v2127
        %2173 = vmatprep.subr.mxu0 0.0
        %2174 = vmatpush2.msra.mxu0 0.0
        %2175 = vmatprep.subr.mxu0 0.0
        %2176 = vmatpush2.msra.mxu0 0.0
        %2177 = vmatprep.subr.mxu0 0.0
        %2178 = vmatpush2.msra.mxu0 0.0
        %2179 = vmatprep.subr.mxu0 0.0
        %2180 = vmatpush2.msra.mxu0 0.0
        %2181 = vmatprep.subr.mxu0 0.0
        %2182 = vmatpush2.msra.mxu0 0.0
        %2183 = vmatprep.subr.mxu0 0.0
        %2184 = vmatpush2.msra.mxu0 0.0
        %2185 = vmatprep.subr.mxu0 0.0
        %2186 = vmatpush2.msra.mxu0 0.0
        %2187 = vmatprep.subr.mxu0 0.0
        %2188 = vmatpush2.msra.mxu0 0.0
        %2189 = vmatprep.subr.mxu0 0.0
        %2190 = vmatpush2.msra.mxu0 0.0
        %2191 = vmatprep.subr.mxu0 0.0
        %2192 = vmatpush2.msra.mxu0 0.0
        %2193 = vmatprep.subr.mxu0 0.0
        %2194 = vmatpush2.msra.mxu0 0.0
        %2195 = vmatprep.subr.mxu0 0.0
        %2196 = vmatpush2.msra.mxu0 0.0
        %2197 = vmatprep.subr.mxu0 0.0
        %2198 = vmatpush2.msra.mxu0 0.0
        %2199 = vmatprep.subr.mxu0 0.0
        %2200 = vmatpush2.msra.mxu0 0.0
        %2201 = vmatprep.subr.mxu0 0.0
        %2202 = vmatpush2.msra.mxu0 0.0
        %2203 = vmatprep.subr.mxu0 0.0
        %2204 = vmatpush2.msra.mxu0 0.0
        %2205 = vmatprep.mubr.f32.mxu0 0.0
        %2206 = vmatmul.mubr.f32.gmra.mxu0 %v2137
        %v2207 = vpop.f32.mrf.mxu0
        %v2208 = vadd.f32 0.0, %v2207
        %v2209 = vpop.f32.mrf.mxu0
        %2210 = vmatprep.mubr.f32.mxu0 0.0
        %2211 = vmatmul.mubr.f32.gmra.mxu0 %v2139
        %v2212 = vpop.f32.mrf.mxu0
        %v2213 = vadd.f32 0.0, %v2212
        %v2214 = vpop.f32.mrf.mxu0
        %2215 = vdwg.mxu0
        %s2216 = scalar_lea.vmem [#allocation5], 352
        %v2217 = vld [vmem:[%s2216] sm:$0xff]
        %v2218 = vld [vmem:[%s2216 + $0x8] sm:$0xff]
        %v2219 = vld [vmem:[%s2216 + $0x10] sm:$0xff]
        %v2220 = vld [vmem:[%s2216 + $0x18] sm:$0xff]
        %2221 = vmatprep.subr.mxu0 0.0
        %2222 = vmatpush1.msra.mxu0 0.0
        %2223 = vmatprep.subr.mxu0 0.0
        %2224 = vmatpush1.msra.mxu0 0.0
        %2225 = vmatprep.subr.mxu0 0.0
        %2226 = vmatpush1.msra.mxu0 0.0
        %2227 = vmatprep.subr.mxu0 0.0
        %2228 = vmatpush1.msra.mxu0 0.0
        %2229 = vmatprep.subr.mxu0 0.0
        %2230 = vmatpush1.msra.mxu0 0.0
        %2231 = vmatprep.subr.mxu0 0.0
        %2232 = vmatpush1.msra.mxu0 0.0
        %2233 = vmatprep.subr.mxu0 0.0
        %2234 = vmatpush1.msra.mxu0 0.0
        %2235 = vmatprep.subr.mxu0 0.0
        %2236 = vmatpush1.msra.mxu0 0.0
        %2237 = vmatprep.subr.mxu0 0.0
        %2238 = vmatpush1.msra.mxu0 0.0
        %2239 = vmatprep.subr.mxu0 0.0
        %2240 = vmatpush1.msra.mxu0 0.0
        %2241 = vmatprep.subr.mxu0 0.0
        %2242 = vmatpush1.msra.mxu0 0.0
        %2243 = vmatprep.subr.mxu0 0.0
        %2244 = vmatpush1.msra.mxu0 0.0
        %2245 = vmatprep.subr.mxu0 0.0
        %2246 = vmatpush1.msra.mxu0 %v2220
        %2247 = vmatprep.subr.mxu0 0.0
        %2248 = vmatpush1.msra.mxu0 %v2219
        %2249 = vmatprep.subr.mxu0 0.0
        %2250 = vmatpush1.msra.mxu0 %v2218
        %2251 = vmatprep.subr.mxu0 0.0
        %2252 = vmatpush1.msra.mxu0 %v2217
        %2253 = vmatprep.subr.mxu0 0.0
        %2254 = vmatpush2.msra.mxu0 0.0
        %2255 = vmatprep.subr.mxu0 0.0
        %2256 = vmatpush2.msra.mxu0 0.0
        %2257 = vmatprep.subr.mxu0 0.0
        %2258 = vmatpush2.msra.mxu0 0.0
        %2259 = vmatprep.subr.mxu0 0.0
        %2260 = vmatpush2.msra.mxu0 0.0
        %2261 = vmatprep.subr.mxu0 0.0
        %2262 = vmatpush2.msra.mxu0 0.0
        %2263 = vmatprep.subr.mxu0 0.0
        %2264 = vmatpush2.msra.mxu0 0.0
        %2265 = vmatprep.subr.mxu0 0.0
        %2266 = vmatpush2.msra.mxu0 0.0
        %2267 = vmatprep.subr.mxu0 0.0
        %2268 = vmatpush2.msra.mxu0 0.0
        %2269 = vmatprep.subr.mxu0 0.0
        %2270 = vmatpush2.msra.mxu0 0.0
        %2271 = vmatprep.subr.mxu0 0.0
        %2272 = vmatpush2.msra.mxu0 0.0
        %2273 = vmatprep.subr.mxu0 0.0
        %2274 = vmatpush2.msra.mxu0 0.0
        %2275 = vmatprep.subr.mxu0 0.0
        %2276 = vmatpush2.msra.mxu0 0.0
        %2277 = vmatprep.subr.mxu0 0.0
        %2278 = vmatpush2.msra.mxu0 0.0
        %2279 = vmatprep.subr.mxu0 0.0
        %2280 = vmatpush2.msra.mxu0 0.0
        %2281 = vmatprep.subr.mxu0 0.0
        %2282 = vmatpush2.msra.mxu0 0.0
        %2283 = vmatprep.subr.mxu0 0.0
        %2284 = vmatpush2.msra.mxu0 0.0
        %2285 = vmatprep.mubr.f32.mxu0 0.0
        %2286 = vmatmul.mubr.f32.gmra.mxu0 %v2137
        %v2287 = vpop.f32.mrf.mxu0
        %v2288 = vadd.f32 0.0, %v2287
        %v2289 = vpop.f32.mrf.mxu0
        %2290 = vmatprep.mubr.f32.mxu0 0.0
        %2291 = vmatmul.mubr.f32.gmra.mxu0 %v2139
        %v2292 = vpop.f32.mrf.mxu0
        %v2293 = vadd.f32 0.0, %v2292
        %v2294 = vpop.f32.mrf.mxu0
        %2295 = vdwg.mxu0
        %v2298 = vrot.slane %v2288, 1
        %v2299 = vrot.slane %v2293, 1
        %v2300 = vsel %vm471, %v2298, %v2299
        %v2303 = vadd.f32 %v2208, %v2300
        %v2304 = vadd.f32 %v2213, %v2299
        %s2305 = scalar_lea.vmem [#allocation5], 384
        %v2306 = vld [vmem:[%s2305] sm:$0xff]
        %v2307 = vld [vmem:[%s2305 + $0x8] sm:$0xff]
        %v2308 = vld [vmem:[%s2305 + $0x10] sm:$0xff]
        %v2309 = vld [vmem:[%s2305 + $0x18] sm:$0xff]
        %2310 = vmatprep.subr.mxu0 0.0
        %2311 = vmatpush1.msra.mxu0 0.0
        %2312 = vmatprep.subr.mxu0 0.0
        %2313 = vmatpush1.msra.mxu0 0.0
        %2314 = vmatprep.subr.mxu0 0.0
        %2315 = vmatpush1.msra.mxu0 0.0
        %2316 = vmatprep.subr.mxu0 0.0
        %2317 = vmatpush1.msra.mxu0 0.0
        %2318 = vmatprep.subr.mxu0 0.0
        %2319 = vmatpush1.msra.mxu0 0.0
        %2320 = vmatprep.subr.mxu0 0.0
        %2321 = vmatpush1.msra.mxu0 0.0
        %2322 = vmatprep.subr.mxu0 0.0
        %2323 = vmatpush1.msra.mxu0 0.0
        %2324 = vmatprep.subr.mxu0 0.0
        %2325 = vmatpush1.msra.mxu0 0.0
        %2326 = vmatprep.subr.mxu0 0.0
        %2327 = vmatpush1.msra.mxu0 0.0
        %2328 = vmatprep.subr.mxu0 0.0
        %2329 = vmatpush1.msra.mxu0 0.0
        %2330 = vmatprep.subr.mxu0 0.0
        %2331 = vmatpush1.msra.mxu0 0.0
        %2332 = vmatprep.subr.mxu0 0.0
        %2333 = vmatpush1.msra.mxu0 0.0
        %2334 = vmatprep.subr.mxu0 0.0
        %2335 = vmatpush1.msra.mxu0 %v2309
        %2336 = vmatprep.subr.mxu0 0.0
        %2337 = vmatpush1.msra.mxu0 %v2308
        %2338 = vmatprep.subr.mxu0 0.0
        %2339 = vmatpush1.msra.mxu0 %v2307
        %2340 = vmatprep.subr.mxu0 0.0
        %2341 = vmatpush1.msra.mxu0 %v2306
        %2342 = vmatprep.subr.mxu0 0.0
        %2343 = vmatpush2.msra.mxu0 0.0
        %2344 = vmatprep.subr.mxu0 0.0
        %2345 = vmatpush2.msra.mxu0 0.0
        %2346 = vmatprep.subr.mxu0 0.0
        %2347 = vmatpush2.msra.mxu0 0.0
        %2348 = vmatprep.subr.mxu0 0.0
        %2349 = vmatpush2.msra.mxu0 0.0
        %2350 = vmatprep.subr.mxu0 0.0
        %2351 = vmatpush2.msra.mxu0 0.0
        %2352 = vmatprep.subr.mxu0 0.0
        %2353 = vmatpush2.msra.mxu0 0.0
        %2354 = vmatprep.subr.mxu0 0.0
        %2355 = vmatpush2.msra.mxu0 0.0
        %2356 = vmatprep.subr.mxu0 0.0
        %2357 = vmatpush2.msra.mxu0 0.0
        %2358 = vmatprep.subr.mxu0 0.0
        %2359 = vmatpush2.msra.mxu0 0.0
        %2360 = vmatprep.subr.mxu0 0.0
        %2361 = vmatpush2.msra.mxu0 0.0
        %2362 = vmatprep.subr.mxu0 0.0
        %2363 = vmatpush2.msra.mxu0 0.0
        %2364 = vmatprep.subr.mxu0 0.0
        %2365 = vmatpush2.msra.mxu0 0.0
        %2366 = vmatprep.subr.mxu0 0.0
        %2367 = vmatpush2.msra.mxu0 0.0
        %2368 = vmatprep.subr.mxu0 0.0
        %2369 = vmatpush2.msra.mxu0 0.0
        %2370 = vmatprep.subr.mxu0 0.0
        %2371 = vmatpush2.msra.mxu0 0.0
        %2372 = vmatprep.subr.mxu0 0.0
        %2373 = vmatpush2.msra.mxu0 0.0
        %2374 = vmatprep.mubr.f32.mxu0 0.0
        %2375 = vmatmul.mubr.f32.gmra.mxu0 %v2137
        %v2376 = vpop.f32.mrf.mxu0
        %v2377 = vadd.f32 0.0, %v2376
        %v2378 = vpop.f32.mrf.mxu0
        %2379 = vmatprep.mubr.f32.mxu0 0.0
        %2380 = vmatmul.mubr.f32.gmra.mxu0 %v2139
        %v2381 = vpop.f32.mrf.mxu0
        %v2382 = vadd.f32 0.0, %v2381
        %v2383 = vpop.f32.mrf.mxu0
        %2384 = vdwg.mxu0
        %v2387 = vrot.slane %v2377, 2
        %v2388 = vrot.slane %v2382, 2
        %v2389 = vsel %vm561, %v2387, %v2388
        %v2392 = vadd.f32 %v2303, %v2389
        %v2393 = vadd.f32 %v2304, %v2388
        %s2394 = scalar_lea.vmem [#allocation5], 416
        %v2395 = vld [vmem:[%s2394] sm:$0xff]
        %v2396 = vld [vmem:[%s2394 + $0x8] sm:$0xff]
        %v2397 = vld [vmem:[%s2394 + $0x10] sm:$0xff]
        %v2398 = vld [vmem:[%s2394 + $0x18] sm:$0xff]
        %2399 = vmatprep.subr.mxu0 0.0
        %2400 = vmatpush1.msra.mxu0 0.0
        %2401 = vmatprep.subr.mxu0 0.0
        %2402 = vmatpush1.msra.mxu0 0.0
        %2403 = vmatprep.subr.mxu0 0.0
        %2404 = vmatpush1.msra.mxu0 0.0
        %2405 = vmatprep.subr.mxu0 0.0
        %2406 = vmatpush1.msra.mxu0 0.0
        %2407 = vmatprep.subr.mxu0 0.0
        %2408 = vmatpush1.msra.mxu0 0.0
        %2409 = vmatprep.subr.mxu0 0.0
        %2410 = vmatpush1.msra.mxu0 0.0
        %2411 = vmatprep.subr.mxu0 0.0
        %2412 = vmatpush1.msra.mxu0 0.0
        %2413 = vmatprep.subr.mxu0 0.0
        %2414 = vmatpush1.msra.mxu0 0.0
        %2415 = vmatprep.subr.mxu0 0.0
        %2416 = vmatpush1.msra.mxu0 0.0
        %2417 = vmatprep.subr.mxu0 0.0
        %2418 = vmatpush1.msra.mxu0 0.0
        %2419 = vmatprep.subr.mxu0 0.0
        %2420 = vmatpush1.msra.mxu0 0.0
        %2421 = vmatprep.subr.mxu0 0.0
        %2422 = vmatpush1.msra.mxu0 0.0
        %2423 = vmatprep.subr.mxu0 0.0
        %2424 = vmatpush1.msra.mxu0 %v2398
        %2425 = vmatprep.subr.mxu0 0.0
        %2426 = vmatpush1.msra.mxu0 %v2397
        %2427 = vmatprep.subr.mxu0 0.0
        %2428 = vmatpush1.msra.mxu0 %v2396
        %2429 = vmatprep.subr.mxu0 0.0
        %2430 = vmatpush1.msra.mxu0 %v2395
        %2431 = vmatprep.subr.mxu0 0.0
        %2432 = vmatpush2.msra.mxu0 0.0
        %2433 = vmatprep.subr.mxu0 0.0
        %2434 = vmatpush2.msra.mxu0 0.0
        %2435 = vmatprep.subr.mxu0 0.0
        %2436 = vmatpush2.msra.mxu0 0.0
        %2437 = vmatprep.subr.mxu0 0.0
        %2438 = vmatpush2.msra.mxu0 0.0
        %2439 = vmatprep.subr.mxu0 0.0
        %2440 = vmatpush2.msra.mxu0 0.0
        %2441 = vmatprep.subr.mxu0 0.0
        %2442 = vmatpush2.msra.mxu0 0.0
        %2443 = vmatprep.subr.mxu0 0.0
        %2444 = vmatpush2.msra.mxu0 0.0
        %2445 = vmatprep.subr.mxu0 0.0
        %2446 = vmatpush2.msra.mxu0 0.0
        %2447 = vmatprep.subr.mxu0 0.0
        %2448 = vmatpush2.msra.mxu0 0.0
        %2449 = vmatprep.subr.mxu0 0.0
        %2450 = vmatpush2.msra.mxu0 0.0
        %2451 = vmatprep.subr.mxu0 0.0
        %2452 = vmatpush2.msra.mxu0 0.0
        %2453 = vmatprep.subr.mxu0 0.0
        %2454 = vmatpush2.msra.mxu0 0.0
        %2455 = vmatprep.subr.mxu0 0.0
        %2456 = vmatpush2.msra.mxu0 0.0
        %2457 = vmatprep.subr.mxu0 0.0
        %2458 = vmatpush2.msra.mxu0 0.0
        %2459 = vmatprep.subr.mxu0 0.0
        %2460 = vmatpush2.msra.mxu0 0.0
        %2461 = vmatprep.subr.mxu0 0.0
        %2462 = vmatpush2.msra.mxu0 0.0
        %2463 = vmatprep.mubr.f32.mxu0 0.0
        %2464 = vmatmul.mubr.f32.gmra.mxu0 %v2137
        %v2465 = vpop.f32.mrf.mxu0
        %v2466 = vadd.f32 0.0, %v2465
        %v2467 = vpop.f32.mrf.mxu0
        %2468 = vmatprep.mubr.f32.mxu0 0.0
        %2469 = vmatmul.mubr.f32.gmra.mxu0 %v2139
        %v2470 = vpop.f32.mrf.mxu0
        %v2471 = vadd.f32 0.0, %v2470
        %v2472 = vpop.f32.mrf.mxu0
        %2473 = vdwg.mxu0
        %v2476 = vrot.slane %v2466, 3
        %v2477 = vrot.slane %v2471, 3
        %v2478 = vsel %vm651, %v2476, %v2477
        %v2481 = vadd.f32 %v2392, %v2478
        %v2482 = vadd.f32 %v2393, %v2477
        %s2483 = scalar_lea.vmem [#allocation5], 448
        %v2484 = vld [vmem:[%s2483] sm:$0xff]
        %v2485 = vld [vmem:[%s2483 + $0x8] sm:$0xff]
        %v2486 = vld [vmem:[%s2483 + $0x10] sm:$0xff]
        %v2487 = vld [vmem:[%s2483 + $0x18] sm:$0xff]
        %2488 = vmatprep.subr.mxu0 0.0
        %2489 = vmatpush1.msra.mxu0 0.0
        %2490 = vmatprep.subr.mxu0 0.0
        %2491 = vmatpush1.msra.mxu0 0.0
        %2492 = vmatprep.subr.mxu0 0.0
        %2493 = vmatpush1.msra.mxu0 0.0
        %2494 = vmatprep.subr.mxu0 0.0
        %2495 = vmatpush1.msra.mxu0 0.0
        %2496 = vmatprep.subr.mxu0 0.0
        %2497 = vmatpush1.msra.mxu0 0.0
        %2498 = vmatprep.subr.mxu0 0.0
        %2499 = vmatpush1.msra.mxu0 0.0
        %2500 = vmatprep.subr.mxu0 0.0
        %2501 = vmatpush1.msra.mxu0 0.0
        %2502 = vmatprep.subr.mxu0 0.0
        %2503 = vmatpush1.msra.mxu0 0.0
        %2504 = vmatprep.subr.mxu0 0.0
        %2505 = vmatpush1.msra.mxu0 0.0
        %2506 = vmatprep.subr.mxu0 0.0
        %2507 = vmatpush1.msra.mxu0 0.0
        %2508 = vmatprep.subr.mxu0 0.0
        %2509 = vmatpush1.msra.mxu0 0.0
        %2510 = vmatprep.subr.mxu0 0.0
        %2511 = vmatpush1.msra.mxu0 0.0
        %2512 = vmatprep.subr.mxu0 0.0
        %2513 = vmatpush1.msra.mxu0 %v2487
        %2514 = vmatprep.subr.mxu0 0.0
        %2515 = vmatpush1.msra.mxu0 %v2486
        %2516 = vmatprep.subr.mxu0 0.0
        %2517 = vmatpush1.msra.mxu0 %v2485
        %2518 = vmatprep.subr.mxu0 0.0
        %2519 = vmatpush1.msra.mxu0 %v2484
        %2520 = vmatprep.subr.mxu0 0.0
        %2521 = vmatpush2.msra.mxu0 0.0
        %2522 = vmatprep.subr.mxu0 0.0
        %2523 = vmatpush2.msra.mxu0 0.0
        %2524 = vmatprep.subr.mxu0 0.0
        %2525 = vmatpush2.msra.mxu0 0.0
        %2526 = vmatprep.subr.mxu0 0.0
        %2527 = vmatpush2.msra.mxu0 0.0
        %2528 = vmatprep.subr.mxu0 0.0
        %2529 = vmatpush2.msra.mxu0 0.0
        %2530 = vmatprep.subr.mxu0 0.0
        %2531 = vmatpush2.msra.mxu0 0.0
        %2532 = vmatprep.subr.mxu0 0.0
        %2533 = vmatpush2.msra.mxu0 0.0
        %2534 = vmatprep.subr.mxu0 0.0
        %2535 = vmatpush2.msra.mxu0 0.0
        %2536 = vmatprep.subr.mxu0 0.0
        %2537 = vmatpush2.msra.mxu0 0.0
        %2538 = vmatprep.subr.mxu0 0.0
        %2539 = vmatpush2.msra.mxu0 0.0
        %2540 = vmatprep.subr.mxu0 0.0
        %2541 = vmatpush2.msra.mxu0 0.0
        %2542 = vmatprep.subr.mxu0 0.0
        %2543 = vmatpush2.msra.mxu0 0.0
        %2544 = vmatprep.subr.mxu0 0.0
        %2545 = vmatpush2.msra.mxu0 0.0
        %2546 = vmatprep.subr.mxu0 0.0
        %2547 = vmatpush2.msra.mxu0 0.0
        %2548 = vmatprep.subr.mxu0 0.0
        %2549 = vmatpush2.msra.mxu0 0.0
        %2550 = vmatprep.subr.mxu0 0.0
        %2551 = vmatpush2.msra.mxu0 0.0
        %2552 = vmatprep.mubr.f32.mxu0 0.0
        %2553 = vmatmul.mubr.f32.gmra.mxu0 %v2137
        %v2554 = vpop.f32.mrf.mxu0
        %v2555 = vadd.f32 0.0, %v2554
        %v2556 = vpop.f32.mrf.mxu0
        %2557 = vmatprep.mubr.f32.mxu0 0.0
        %2558 = vmatmul.mubr.f32.gmra.mxu0 %v2139
        %v2559 = vpop.f32.mrf.mxu0
        %v2560 = vadd.f32 0.0, %v2559
        %v2561 = vpop.f32.mrf.mxu0
        %2562 = vdwg.mxu0
        %v2565 = vrot.slane %v2555, 4
        %v2566 = vrot.slane %v2560, 4
        %v2567 = vsel %vm296, %v2565, %v2566
        %v2570 = vadd.f32 %v2481, %v2567
        %v2571 = vadd.f32 %v2482, %v2566
        %s2572 = scalar_lea.vmem [#allocation7], 2
        %v2573 = vld [vmem:[%s2572] sm:$0x1]
        %v2575 = vlaneseq
        %v2576 = vshrl.u32 %v2575, 7
        %v2577 = vsub.s32 0, %v2576
        %v2578 = vrot.slane %v2573, %v2577
        %v2580 = vadd.f32 %v2570, %v2578
        %v2581 = vadd.f32 %v2571, %v2578
        %vm2582 = vcmp.ge.f32.partialorder %v2580, 0.0
        %vm2583 = vcmp.ge.f32.partialorder %v2581, 0.0
        %v2584 = vmul.f32 %v2580, 0.01
        %v2585 = vmul.f32 %v2581, 0.01
        %v2586 = vsel %vm2582, %v2580, %v2584
        %v2587 = vsel %vm2583, %v2581, %v2585
        %s2588 = scalar_lea.vmem [#allocation8], 320
        %v2589 = vld [vmem:[%s2588] sm:$0xff]
        %v2590 = vld [vmem:[%s2588 + $0x8] sm:$0xff]
        %v2591 = vld [vmem:[%s2588 + $0x10] sm:$0xff]
        %v2592 = vld [vmem:[%s2588 + $0x18] sm:$0xff]
        %v2594 = vsel %vm309, %v2586, 0
        %v2597 = vsel %vm309, %v2587, 0
        %2599 = vmatprep.subr.mxu0 0.0
        %2600 = vmatpush1.msra.mxu0 0.0
        %2601 = vmatprep.subr.mxu0 0.0
        %2602 = vmatpush1.msra.mxu0 0.0
        %2603 = vmatprep.subr.mxu0 0.0
        %2604 = vmatpush1.msra.mxu0 0.0
        %2605 = vmatprep.subr.mxu0 0.0
        %2606 = vmatpush1.msra.mxu0 0.0
        %2607 = vmatprep.subr.mxu0 0.0
        %2608 = vmatpush1.msra.mxu0 0.0
        %2609 = vmatprep.subr.mxu0 0.0
        %2610 = vmatpush1.msra.mxu0 0.0
        %2611 = vmatprep.subr.mxu0 0.0
        %2612 = vmatpush1.msra.mxu0 0.0
        %2613 = vmatprep.subr.mxu0 0.0
        %2614 = vmatpush1.msra.mxu0 0.0
        %2615 = vmatprep.subr.mxu0 0.0
        %2616 = vmatpush1.msra.mxu0 0.0
        %2617 = vmatprep.subr.mxu0 0.0
        %2618 = vmatpush1.msra.mxu0 0.0
        %2619 = vmatprep.subr.mxu0 0.0
        %2620 = vmatpush1.msra.mxu0 0.0
        %2621 = vmatprep.subr.mxu0 0.0
        %2622 = vmatpush1.msra.mxu0 0.0
        %2623 = vmatprep.subr.mxu0 0.0
        %2624 = vmatpush1.msra.mxu0 %v2592
        %2625 = vmatprep.subr.mxu0 0.0
        %2626 = vmatpush1.msra.mxu0 %v2591
        %2627 = vmatprep.subr.mxu0 0.0
        %2628 = vmatpush1.msra.mxu0 %v2590
        %2629 = vmatprep.subr.mxu0 0.0
        %2630 = vmatpush1.msra.mxu0 %v2589
        %2631 = vmatprep.subr.mxu0 0.0
        %2632 = vmatpush2.msra.mxu0 0.0
        %2633 = vmatprep.subr.mxu0 0.0
        %2634 = vmatpush2.msra.mxu0 0.0
        %2635 = vmatprep.subr.mxu0 0.0
        %2636 = vmatpush2.msra.mxu0 0.0
        %2637 = vmatprep.subr.mxu0 0.0
        %2638 = vmatpush2.msra.mxu0 0.0
        %2639 = vmatprep.subr.mxu0 0.0
        %2640 = vmatpush2.msra.mxu0 0.0
        %2641 = vmatprep.subr.mxu0 0.0
        %2642 = vmatpush2.msra.mxu0 0.0
        %2643 = vmatprep.subr.mxu0 0.0
        %2644 = vmatpush2.msra.mxu0 0.0
        %2645 = vmatprep.subr.mxu0 0.0
        %2646 = vmatpush2.msra.mxu0 0.0
        %2647 = vmatprep.subr.mxu0 0.0
        %2648 = vmatpush2.msra.mxu0 0.0
        %2649 = vmatprep.subr.mxu0 0.0
        %2650 = vmatpush2.msra.mxu0 0.0
        %2651 = vmatprep.subr.mxu0 0.0
        %2652 = vmatpush2.msra.mxu0 0.0
        %2653 = vmatprep.subr.mxu0 0.0
        %2654 = vmatpush2.msra.mxu0 0.0
        %2655 = vmatprep.subr.mxu0 0.0
        %2656 = vmatpush2.msra.mxu0 0.0
        %2657 = vmatprep.subr.mxu0 0.0
        %2658 = vmatpush2.msra.mxu0 0.0
        %2659 = vmatprep.subr.mxu0 0.0
        %2660 = vmatpush2.msra.mxu0 0.0
        %2661 = vmatprep.subr.mxu0 0.0
        %2662 = vmatpush2.msra.mxu0 0.0
        %2663 = vmatprep.mubr.f32.mxu0 0.0
        %2664 = vmatmul.mubr.f32.gmra.mxu0 %v2594
        %v2665 = vpop.f32.mrf.mxu0
        %v2666 = vadd.f32 0.0, %v2665
        %v2667 = vpop.f32.mrf.mxu0
        %2668 = vmatprep.mubr.f32.mxu0 0.0
        %2669 = vmatmul.mubr.f32.gmra.mxu0 %v2597
        %v2670 = vpop.f32.mrf.mxu0
        %v2671 = vpop.f32.mrf.mxu0
        %2672 = vdwg.mxu0
        %s2673 = scalar_lea.vmem [#allocation8], 352
        %v2674 = vld [vmem:[%s2673] sm:$0xff]
        %v2675 = vld [vmem:[%s2673 + $0x8] sm:$0xff]
        %v2676 = vld [vmem:[%s2673 + $0x10] sm:$0xff]
        %v2677 = vld [vmem:[%s2673 + $0x18] sm:$0xff]
        %2678 = vmatprep.subr.mxu0 0.0
        %2679 = vmatpush1.msra.mxu0 0.0
        %2680 = vmatprep.subr.mxu0 0.0
        %2681 = vmatpush1.msra.mxu0 0.0
        %2682 = vmatprep.subr.mxu0 0.0
        %2683 = vmatpush1.msra.mxu0 0.0
        %2684 = vmatprep.subr.mxu0 0.0
        %2685 = vmatpush1.msra.mxu0 0.0
        %2686 = vmatprep.subr.mxu0 0.0
        %2687 = vmatpush1.msra.mxu0 0.0
        %2688 = vmatprep.subr.mxu0 0.0
        %2689 = vmatpush1.msra.mxu0 0.0
        %2690 = vmatprep.subr.mxu0 0.0
        %2691 = vmatpush1.msra.mxu0 0.0
        %2692 = vmatprep.subr.mxu0 0.0
        %2693 = vmatpush1.msra.mxu0 0.0
        %2694 = vmatprep.subr.mxu0 0.0
        %2695 = vmatpush1.msra.mxu0 0.0
        %2696 = vmatprep.subr.mxu0 0.0
        %2697 = vmatpush1.msra.mxu0 0.0
        %2698 = vmatprep.subr.mxu0 0.0
        %2699 = vmatpush1.msra.mxu0 0.0
        %2700 = vmatprep.subr.mxu0 0.0
        %2701 = vmatpush1.msra.mxu0 0.0
        %2702 = vmatprep.subr.mxu0 0.0
        %2703 = vmatpush1.msra.mxu0 %v2677
        %2704 = vmatprep.subr.mxu0 0.0
        %2705 = vmatpush1.msra.mxu0 %v2676
        %2706 = vmatprep.subr.mxu0 0.0
        %2707 = vmatpush1.msra.mxu0 %v2675
        %2708 = vmatprep.subr.mxu0 0.0
        %2709 = vmatpush1.msra.mxu0 %v2674
        %2710 = vmatprep.subr.mxu0 0.0
        %2711 = vmatpush2.msra.mxu0 0.0
        %2712 = vmatprep.subr.mxu0 0.0
        %2713 = vmatpush2.msra.mxu0 0.0
        %2714 = vmatprep.subr.mxu0 0.0
        %2715 = vmatpush2.msra.mxu0 0.0
        %2716 = vmatprep.subr.mxu0 0.0
        %2717 = vmatpush2.msra.mxu0 0.0
        %2718 = vmatprep.subr.mxu0 0.0
        %2719 = vmatpush2.msra.mxu0 0.0
        %2720 = vmatprep.subr.mxu0 0.0
        %2721 = vmatpush2.msra.mxu0 0.0
        %2722 = vmatprep.subr.mxu0 0.0
        %2723 = vmatpush2.msra.mxu0 0.0
        %2724 = vmatprep.subr.mxu0 0.0
        %2725 = vmatpush2.msra.mxu0 0.0
        %2726 = vmatprep.subr.mxu0 0.0
        %2727 = vmatpush2.msra.mxu0 0.0
        %2728 = vmatprep.subr.mxu0 0.0
        %2729 = vmatpush2.msra.mxu0 0.0
        %2730 = vmatprep.subr.mxu0 0.0
        %2731 = vmatpush2.msra.mxu0 0.0
        %2732 = vmatprep.subr.mxu0 0.0
        %2733 = vmatpush2.msra.mxu0 0.0
        %2734 = vmatprep.subr.mxu0 0.0
        %2735 = vmatpush2.msra.mxu0 0.0
        %2736 = vmatprep.subr.mxu0 0.0
        %2737 = vmatpush2.msra.mxu0 0.0
        %2738 = vmatprep.subr.mxu0 0.0
        %2739 = vmatpush2.msra.mxu0 0.0
        %2740 = vmatprep.subr.mxu0 0.0
        %2741 = vmatpush2.msra.mxu0 0.0
        %2742 = vmatprep.mubr.f32.mxu0 0.0
        %2743 = vmatmul.mubr.f32.gmra.mxu0 %v2594
        %v2744 = vpop.f32.mrf.mxu0
        %v2745 = vadd.f32 0.0, %v2744
        %v2746 = vpop.f32.mrf.mxu0
        %2747 = vmatprep.mubr.f32.mxu0 0.0
        %2748 = vmatmul.mubr.f32.gmra.mxu0 %v2597
        %v2749 = vpop.f32.mrf.mxu0
        %v2750 = vadd.f32 0.0, %v2749
        %v2751 = vpop.f32.mrf.mxu0
        %2752 = vdwg.mxu0
        %v2755 = vrot.slane %v2745, 1
        %v2756 = vrot.slane %v2750, 1
        %v2757 = vsel %vm471, %v2755, %v2756
        %v2759 = vadd.f32 %v2666, %v2757
        %s2760 = scalar_lea.vmem [#allocation8], 384
        %v2761 = vld [vmem:[%s2760] sm:$0xff]
        %v2762 = vld [vmem:[%s2760 + $0x8] sm:$0xff]
        %v2763 = vld [vmem:[%s2760 + $0x10] sm:$0xff]
        %v2764 = vld [vmem:[%s2760 + $0x18] sm:$0xff]
        %2765 = vmatprep.subr.mxu0 0.0
        %2766 = vmatpush1.msra.mxu0 0.0
        %2767 = vmatprep.subr.mxu0 0.0
        %2768 = vmatpush1.msra.mxu0 0.0
        %2769 = vmatprep.subr.mxu0 0.0
        %2770 = vmatpush1.msra.mxu0 0.0
        %2771 = vmatprep.subr.mxu0 0.0
        %2772 = vmatpush1.msra.mxu0 0.0
        %2773 = vmatprep.subr.mxu0 0.0
        %2774 = vmatpush1.msra.mxu0 0.0
        %2775 = vmatprep.subr.mxu0 0.0
        %2776 = vmatpush1.msra.mxu0 0.0
        %2777 = vmatprep.subr.mxu0 0.0
        %2778 = vmatpush1.msra.mxu0 0.0
        %2779 = vmatprep.subr.mxu0 0.0
        %2780 = vmatpush1.msra.mxu0 0.0
        %2781 = vmatprep.subr.mxu0 0.0
        %2782 = vmatpush1.msra.mxu0 0.0
        %2783 = vmatprep.subr.mxu0 0.0
        %2784 = vmatpush1.msra.mxu0 0.0
        %2785 = vmatprep.subr.mxu0 0.0
        %2786 = vmatpush1.msra.mxu0 0.0
        %2787 = vmatprep.subr.mxu0 0.0
        %2788 = vmatpush1.msra.mxu0 0.0
        %2789 = vmatprep.subr.mxu0 0.0
        %2790 = vmatpush1.msra.mxu0 %v2764
        %2791 = vmatprep.subr.mxu0 0.0
        %2792 = vmatpush1.msra.mxu0 %v2763
        %2793 = vmatprep.subr.mxu0 0.0
        %2794 = vmatpush1.msra.mxu0 %v2762
        %2795 = vmatprep.subr.mxu0 0.0
        %2796 = vmatpush1.msra.mxu0 %v2761
        %2797 = vmatprep.subr.mxu0 0.0
        %2798 = vmatpush2.msra.mxu0 0.0
        %2799 = vmatprep.subr.mxu0 0.0
        %2800 = vmatpush2.msra.mxu0 0.0
        %2801 = vmatprep.subr.mxu0 0.0
        %2802 = vmatpush2.msra.mxu0 0.0
        %2803 = vmatprep.subr.mxu0 0.0
        %2804 = vmatpush2.msra.mxu0 0.0
        %2805 = vmatprep.subr.mxu0 0.0
        %2806 = vmatpush2.msra.mxu0 0.0
        %2807 = vmatprep.subr.mxu0 0.0
        %2808 = vmatpush2.msra.mxu0 0.0
        %2809 = vmatprep.subr.mxu0 0.0
        %2810 = vmatpush2.msra.mxu0 0.0
        %2811 = vmatprep.subr.mxu0 0.0
        %2812 = vmatpush2.msra.mxu0 0.0
        %2813 = vmatprep.subr.mxu0 0.0
        %2814 = vmatpush2.msra.mxu0 0.0
        %2815 = vmatprep.subr.mxu0 0.0
        %2816 = vmatpush2.msra.mxu0 0.0
        %2817 = vmatprep.subr.mxu0 0.0
        %2818 = vmatpush2.msra.mxu0 0.0
        %2819 = vmatprep.subr.mxu0 0.0
        %2820 = vmatpush2.msra.mxu0 0.0
        %2821 = vmatprep.subr.mxu0 0.0
        %2822 = vmatpush2.msra.mxu0 0.0
        %2823 = vmatprep.subr.mxu0 0.0
        %2824 = vmatpush2.msra.mxu0 0.0
        %2825 = vmatprep.subr.mxu0 0.0
        %2826 = vmatpush2.msra.mxu0 0.0
        %2827 = vmatprep.subr.mxu0 0.0
        %2828 = vmatpush2.msra.mxu0 0.0
        %2829 = vmatprep.mubr.f32.mxu0 0.0
        %2830 = vmatmul.mubr.f32.gmra.mxu0 %v2594
        %v2831 = vpop.f32.mrf.mxu0
        %v2832 = vadd.f32 0.0, %v2831
        %v2833 = vpop.f32.mrf.mxu0
        %2834 = vmatprep.mubr.f32.mxu0 0.0
        %2835 = vmatmul.mubr.f32.gmra.mxu0 %v2597
        %v2836 = vpop.f32.mrf.mxu0
        %v2837 = vadd.f32 0.0, %v2836
        %v2838 = vpop.f32.mrf.mxu0
        %2839 = vdwg.mxu0
        %v2842 = vrot.slane %v2832, 2
        %v2843 = vrot.slane %v2837, 2
        %v2844 = vsel %vm561, %v2842, %v2843
        %v2846 = vadd.f32 %v2759, %v2844
        %s2847 = scalar_lea.vmem [#allocation8], 416
        %v2848 = vld [vmem:[%s2847] sm:$0xff]
        %v2849 = vld [vmem:[%s2847 + $0x8] sm:$0xff]
        %v2850 = vld [vmem:[%s2847 + $0x10] sm:$0xff]
        %v2851 = vld [vmem:[%s2847 + $0x18] sm:$0xff]
        %2852 = vmatprep.subr.mxu0 0.0
        %2853 = vmatpush1.msra.mxu0 0.0
        %2854 = vmatprep.subr.mxu0 0.0
        %2855 = vmatpush1.msra.mxu0 0.0
        %2856 = vmatprep.subr.mxu0 0.0
        %2857 = vmatpush1.msra.mxu0 0.0
        %2858 = vmatprep.subr.mxu0 0.0
        %2859 = vmatpush1.msra.mxu0 0.0
        %2860 = vmatprep.subr.mxu0 0.0
        %2861 = vmatpush1.msra.mxu0 0.0
        %2862 = vmatprep.subr.mxu0 0.0
        %2863 = vmatpush1.msra.mxu0 0.0
        %2864 = vmatprep.subr.mxu0 0.0
        %2865 = vmatpush1.msra.mxu0 0.0
        %2866 = vmatprep.subr.mxu0 0.0
        %2867 = vmatpush1.msra.mxu0 0.0
        %2868 = vmatprep.subr.mxu0 0.0
        %2869 = vmatpush1.msra.mxu0 0.0
        %2870 = vmatprep.subr.mxu0 0.0
        %2871 = vmatpush1.msra.mxu0 0.0
        %2872 = vmatprep.subr.mxu0 0.0
        %2873 = vmatpush1.msra.mxu0 0.0
        %2874 = vmatprep.subr.mxu0 0.0
        %2875 = vmatpush1.msra.mxu0 0.0
        %2876 = vmatprep.subr.mxu0 0.0
        %2877 = vmatpush1.msra.mxu0 %v2851
        %2878 = vmatprep.subr.mxu0 0.0
        %2879 = vmatpush1.msra.mxu0 %v2850
        %2880 = vmatprep.subr.mxu0 0.0
        %2881 = vmatpush1.msra.mxu0 %v2849
        %2882 = vmatprep.subr.mxu0 0.0
        %2883 = vmatpush1.msra.mxu0 %v2848
        %2884 = vmatprep.subr.mxu0 0.0
        %2885 = vmatpush2.msra.mxu0 0.0
        %2886 = vmatprep.subr.mxu0 0.0
        %2887 = vmatpush2.msra.mxu0 0.0
        %2888 = vmatprep.subr.mxu0 0.0
        %2889 = vmatpush2.msra.mxu0 0.0
        %2890 = vmatprep.subr.mxu0 0.0
        %2891 = vmatpush2.msra.mxu0 0.0
        %2892 = vmatprep.subr.mxu0 0.0
        %2893 = vmatpush2.msra.mxu0 0.0
        %2894 = vmatprep.subr.mxu0 0.0
        %2895 = vmatpush2.msra.mxu0 0.0
        %2896 = vmatprep.subr.mxu0 0.0
        %2897 = vmatpush2.msra.mxu0 0.0
        %2898 = vmatprep.subr.mxu0 0.0
        %2899 = vmatpush2.msra.mxu0 0.0
        %2900 = vmatprep.subr.mxu0 0.0
        %2901 = vmatpush2.msra.mxu0 0.0
        %2902 = vmatprep.subr.mxu0 0.0
        %2903 = vmatpush2.msra.mxu0 0.0
        %2904 = vmatprep.subr.mxu0 0.0
        %2905 = vmatpush2.msra.mxu0 0.0
        %2906 = vmatprep.subr.mxu0 0.0
        %2907 = vmatpush2.msra.mxu0 0.0
        %2908 = vmatprep.subr.mxu0 0.0
        %2909 = vmatpush2.msra.mxu0 0.0
        %2910 = vmatprep.subr.mxu0 0.0
        %2911 = vmatpush2.msra.mxu0 0.0
        %2912 = vmatprep.subr.mxu0 0.0
        %2913 = vmatpush2.msra.mxu0 0.0
        %2914 = vmatprep.subr.mxu0 0.0
        %2915 = vmatpush2.msra.mxu0 0.0
        %2916 = vmatprep.mubr.f32.mxu0 0.0
        %2917 = vmatmul.mubr.f32.gmra.mxu0 %v2594
        %v2918 = vpop.f32.mrf.mxu0
        %v2919 = vadd.f32 0.0, %v2918
        %v2920 = vpop.f32.mrf.mxu0
        %2921 = vmatprep.mubr.f32.mxu0 0.0
        %2922 = vmatmul.mubr.f32.gmra.mxu0 %v2597
        %v2923 = vpop.f32.mrf.mxu0
        %v2924 = vadd.f32 0.0, %v2923
        %v2925 = vpop.f32.mrf.mxu0
        %2926 = vdwg.mxu0
        %v2929 = vrot.slane %v2919, 3
        %v2930 = vrot.slane %v2924, 3
        %v2931 = vsel %vm651, %v2929, %v2930
        %v2933 = vadd.f32 %v2846, %v2931
        %s2934 = scalar_lea.vmem [#allocation8], 448
        %v2935 = vld [vmem:[%s2934] sm:$0xff]
        %v2936 = vld [vmem:[%s2934 + $0x8] sm:$0xff]
        %v2937 = vld [vmem:[%s2934 + $0x10] sm:$0xff]
        %v2938 = vld [vmem:[%s2934 + $0x18] sm:$0xff]
        %2939 = vmatprep.subr.mxu0 0.0
        %2940 = vmatpush1.msra.mxu0 0.0
        %2941 = vmatprep.subr.mxu0 0.0
        %2942 = vmatpush1.msra.mxu0 0.0
        %2943 = vmatprep.subr.mxu0 0.0
        %2944 = vmatpush1.msra.mxu0 0.0
        %2945 = vmatprep.subr.mxu0 0.0
        %2946 = vmatpush1.msra.mxu0 0.0
        %2947 = vmatprep.subr.mxu0 0.0
        %2948 = vmatpush1.msra.mxu0 0.0
        %2949 = vmatprep.subr.mxu0 0.0
        %2950 = vmatpush1.msra.mxu0 0.0
        %2951 = vmatprep.subr.mxu0 0.0
        %2952 = vmatpush1.msra.mxu0 0.0
        %2953 = vmatprep.subr.mxu0 0.0
        %2954 = vmatpush1.msra.mxu0 0.0
        %2955 = vmatprep.subr.mxu0 0.0
        %2956 = vmatpush1.msra.mxu0 0.0
        %2957 = vmatprep.subr.mxu0 0.0
        %2958 = vmatpush1.msra.mxu0 0.0
        %2959 = vmatprep.subr.mxu0 0.0
        %2960 = vmatpush1.msra.mxu0 0.0
        %2961 = vmatprep.subr.mxu0 0.0
        %2962 = vmatpush1.msra.mxu0 0.0
        %2963 = vmatprep.subr.mxu0 0.0
        %2964 = vmatpush1.msra.mxu0 %v2938
        %2965 = vmatprep.subr.mxu0 0.0
        %2966 = vmatpush1.msra.mxu0 %v2937
        %2967 = vmatprep.subr.mxu0 0.0
        %2968 = vmatpush1.msra.mxu0 %v2936
        %2969 = vmatprep.subr.mxu0 0.0
        %2970 = vmatpush1.msra.mxu0 %v2935
        %2971 = vmatprep.subr.mxu0 0.0
        %2972 = vmatpush2.msra.mxu0 0.0
        %2973 = vmatprep.subr.mxu0 0.0
        %2974 = vmatpush2.msra.mxu0 0.0
        %2975 = vmatprep.subr.mxu0 0.0
        %2976 = vmatpush2.msra.mxu0 0.0
        %2977 = vmatprep.subr.mxu0 0.0
        %2978 = vmatpush2.msra.mxu0 0.0
        %2979 = vmatprep.subr.mxu0 0.0
        %2980 = vmatpush2.msra.mxu0 0.0
        %2981 = vmatprep.subr.mxu0 0.0
        %2982 = vmatpush2.msra.mxu0 0.0
        %2983 = vmatprep.subr.mxu0 0.0
        %2984 = vmatpush2.msra.mxu0 0.0
        %2985 = vmatprep.subr.mxu0 0.0
        %2986 = vmatpush2.msra.mxu0 0.0
        %2987 = vmatprep.subr.mxu0 0.0
        %2988 = vmatpush2.msra.mxu0 0.0
        %2989 = vmatprep.subr.mxu0 0.0
        %2990 = vmatpush2.msra.mxu0 0.0
        %2991 = vmatprep.subr.mxu0 0.0
        %2992 = vmatpush2.msra.mxu0 0.0
        %2993 = vmatprep.subr.mxu0 0.0
        %2994 = vmatpush2.msra.mxu0 0.0
        %2995 = vmatprep.subr.mxu0 0.0
        %2996 = vmatpush2.msra.mxu0 0.0
        %2997 = vmatprep.subr.mxu0 0.0
        %2998 = vmatpush2.msra.mxu0 0.0
        %2999 = vmatprep.subr.mxu0 0.0
        %3000 = vmatpush2.msra.mxu0 0.0
        %3001 = vmatprep.subr.mxu0 0.0
        %3002 = vmatpush2.msra.mxu0 0.0
        %3003 = vmatprep.mubr.f32.mxu0 0.0
        %3004 = vmatmul.mubr.f32.gmra.mxu0 %v2594
        %v3005 = vpop.f32.mrf.mxu0
        %v3006 = vadd.f32 0.0, %v3005
        %v3007 = vpop.f32.mrf.mxu0
        %3008 = vmatprep.mubr.f32.mxu0 0.0
        %3009 = vmatmul.mubr.f32.gmra.mxu0 %v2597
        %v3010 = vpop.f32.mrf.mxu0
        %v3011 = vadd.f32 0.0, %v3010
        %v3012 = vpop.f32.mrf.mxu0
        %3013 = vdwg.mxu0
        %v3016 = vrot.slane %v3006, 4
        %v3017 = vrot.slane %v3011, 4
        %v3018 = vsel %vm296, %v3016, %v3017
        %v3020 = vadd.f32 %v2933, %v3018
        %s3021 = scalar_lea.vmem %s4, 2
        %v3022 = vld [vmem:[%s3021] sm:$0x1]
        %v3024 = vlaneseq
        %v3025 = vshrl.u32 %v3024, 7
        %v3026 = vsub.s32 0, %v3025
        %v3027 = vrot.slane %v3022, %v3026
        %v3029 = vadd.f32 %v3020, %v3027
        %v3030 = vtanh.pop %v3029
        %v3031 = vadd.f32 %v1206, %v3030
        %v3032 = vlaneseq
        %v3033 = vshrl.u32 %v3032, 7
        %v3034 = vsub.s32 0, %v3033
        %v3035 = vrot.slane %v1206, %v3034
        %v3036 = vlaneseq
        %v3037 = vshrl.u32 %v3036, 7
        %v3038 = vsub.s32 7, %v3037
        %v3039 = vrot.slane %v1206, %v3038
        %v3041 = vrot.slane %v1206, 4
        %v3043 = vsel %vm296, %v3035, %v3041
        %v3044 = vsel %vm296, %v3041, %v3039
        %s3045 = scalar_lea.vmem [#allocation5], 480
        %v3046 = vld [vmem:[%s3045] sm:$0xff]
        %v3047 = vld [vmem:[%s3045 + $0x8] sm:$0xff]
        %v3048 = vld [vmem:[%s3045 + $0x10] sm:$0xff]
        %v3049 = vld [vmem:[%s3045 + $0x18] sm:$0xff]
        %v3051 = vsel %vm309, %v3043, 0
        %v3054 = vsel %vm309, %v3044, 0
        %3056 = vmatprep.subr.mxu0 0.0
        %3057 = vmatpush1.msra.mxu0 0.0
        %3058 = vmatprep.subr.mxu0 0.0
        %3059 = vmatpush1.msra.mxu0 0.0
        %3060 = vmatprep.subr.mxu0 0.0
        %3061 = vmatpush1.msra.mxu0 0.0
        %3062 = vmatprep.subr.mxu0 0.0
        %3063 = vmatpush1.msra.mxu0 0.0
        %3064 = vmatprep.subr.mxu0 0.0
        %3065 = vmatpush1.msra.mxu0 0.0
        %3066 = vmatprep.subr.mxu0 0.0
        %3067 = vmatpush1.msra.mxu0 0.0
        %3068 = vmatprep.subr.mxu0 0.0
        %3069 = vmatpush1.msra.mxu0 0.0
        %3070 = vmatprep.subr.mxu0 0.0
        %3071 = vmatpush1.msra.mxu0 0.0
        %3072 = vmatprep.subr.mxu0 0.0
        %3073 = vmatpush1.msra.mxu0 0.0
        %3074 = vmatprep.subr.mxu0 0.0
        %3075 = vmatpush1.msra.mxu0 0.0
        %3076 = vmatprep.subr.mxu0 0.0
        %3077 = vmatpush1.msra.mxu0 0.0
        %3078 = vmatprep.subr.mxu0 0.0
        %3079 = vmatpush1.msra.mxu0 0.0
        %3080 = vmatprep.subr.mxu0 0.0
        %3081 = vmatpush1.msra.mxu0 %v3049
        %3082 = vmatprep.subr.mxu0 0.0
        %3083 = vmatpush1.msra.mxu0 %v3048
        %3084 = vmatprep.subr.mxu0 0.0
        %3085 = vmatpush1.msra.mxu0 %v3047
        %3086 = vmatprep.subr.mxu0 0.0
        %3087 = vmatpush1.msra.mxu0 %v3046
        %3088 = vmatprep.subr.mxu0 0.0
        %3089 = vmatpush2.msra.mxu0 0.0
        %3090 = vmatprep.subr.mxu0 0.0
        %3091 = vmatpush2.msra.mxu0 0.0
        %3092 = vmatprep.subr.mxu0 0.0
        %3093 = vmatpush2.msra.mxu0 0.0
        %3094 = vmatprep.subr.mxu0 0.0
        %3095 = vmatpush2.msra.mxu0 0.0
        %3096 = vmatprep.subr.mxu0 0.0
        %3097 = vmatpush2.msra.mxu0 0.0
        %3098 = vmatprep.subr.mxu0 0.0
        %3099 = vmatpush2.msra.mxu0 0.0
        %3100 = vmatprep.subr.mxu0 0.0
        %3101 = vmatpush2.msra.mxu0 0.0
        %3102 = vmatprep.subr.mxu0 0.0
        %3103 = vmatpush2.msra.mxu0 0.0
        %3104 = vmatprep.subr.mxu0 0.0
        %3105 = vmatpush2.msra.mxu0 0.0
        %3106 = vmatprep.subr.mxu0 0.0
        %3107 = vmatpush2.msra.mxu0 0.0
        %3108 = vmatprep.subr.mxu0 0.0
        %3109 = vmatpush2.msra.mxu0 0.0
        %3110 = vmatprep.subr.mxu0 0.0
        %3111 = vmatpush2.msra.mxu0 0.0
        %3112 = vmatprep.subr.mxu0 0.0
        %3113 = vmatpush2.msra.mxu0 0.0
        %3114 = vmatprep.subr.mxu0 0.0
        %3115 = vmatpush2.msra.mxu0 0.0
        %3116 = vmatprep.subr.mxu0 0.0
        %3117 = vmatpush2.msra.mxu0 0.0
        %3118 = vmatprep.subr.mxu0 0.0
        %3119 = vmatpush2.msra.mxu0 0.0
        %3120 = vmatprep.mubr.f32.mxu0 0.0
        %3121 = vmatmul.mubr.f32.gmra.mxu0 %v3051
        %v3122 = vpop.f32.mrf.mxu0
        %v3123 = vadd.f32 0.0, %v3122
        %v3124 = vpop.f32.mrf.mxu0
        %3125 = vmatprep.mubr.f32.mxu0 0.0
        %3126 = vmatmul.mubr.f32.gmra.mxu0 %v3054
        %v3127 = vpop.f32.mrf.mxu0
        %v3128 = vadd.f32 0.0, %v3127
        %v3129 = vpop.f32.mrf.mxu0
        %3130 = vdwg.mxu0
        %s3131 = scalar_lea.vmem [#allocation5], 512
        %v3132 = vld [vmem:[%s3131] sm:$0xff]
        %v3133 = vld [vmem:[%s3131 + $0x8] sm:$0xff]
        %v3134 = vld [vmem:[%s3131 + $0x10] sm:$0xff]
        %v3135 = vld [vmem:[%s3131 + $0x18] sm:$0xff]
        %3136 = vmatprep.subr.mxu0 0.0
        %3137 = vmatpush1.msra.mxu0 0.0
        %3138 = vmatprep.subr.mxu0 0.0
        %3139 = vmatpush1.msra.mxu0 0.0
        %3140 = vmatprep.subr.mxu0 0.0
        %3141 = vmatpush1.msra.mxu0 0.0
        %3142 = vmatprep.subr.mxu0 0.0
        %3143 = vmatpush1.msra.mxu0 0.0
        %3144 = vmatprep.subr.mxu0 0.0
        %3145 = vmatpush1.msra.mxu0 0.0
        %3146 = vmatprep.subr.mxu0 0.0
        %3147 = vmatpush1.msra.mxu0 0.0
        %3148 = vmatprep.subr.mxu0 0.0
        %3149 = vmatpush1.msra.mxu0 0.0
        %3150 = vmatprep.subr.mxu0 0.0
        %3151 = vmatpush1.msra.mxu0 0.0
        %3152 = vmatprep.subr.mxu0 0.0
        %3153 = vmatpush1.msra.mxu0 0.0
        %3154 = vmatprep.subr.mxu0 0.0
        %3155 = vmatpush1.msra.mxu0 0.0
        %3156 = vmatprep.subr.mxu0 0.0
        %3157 = vmatpush1.msra.mxu0 0.0
        %3158 = vmatprep.subr.mxu0 0.0
        %3159 = vmatpush1.msra.mxu0 0.0
        %3160 = vmatprep.subr.mxu0 0.0
        %3161 = vmatpush1.msra.mxu0 %v3135
        %3162 = vmatprep.subr.mxu0 0.0
        %3163 = vmatpush1.msra.mxu0 %v3134
        %3164 = vmatprep.subr.mxu0 0.0
        %3165 = vmatpush1.msra.mxu0 %v3133
        %3166 = vmatprep.subr.mxu0 0.0
        %3167 = vmatpush1.msra.mxu0 %v3132
        %3168 = vmatprep.subr.mxu0 0.0
        %3169 = vmatpush2.msra.mxu0 0.0
        %3170 = vmatprep.subr.mxu0 0.0
        %3171 = vmatpush2.msra.mxu0 0.0
        %3172 = vmatprep.subr.mxu0 0.0
        %3173 = vmatpush2.msra.mxu0 0.0
        %3174 = vmatprep.subr.mxu0 0.0
        %3175 = vmatpush2.msra.mxu0 0.0
        %3176 = vmatprep.subr.mxu0 0.0
        %3177 = vmatpush2.msra.mxu0 0.0
        %3178 = vmatprep.subr.mxu0 0.0
        %3179 = vmatpush2.msra.mxu0 0.0
        %3180 = vmatprep.subr.mxu0 0.0
        %3181 = vmatpush2.msra.mxu0 0.0
        %3182 = vmatprep.subr.mxu0 0.0
        %3183 = vmatpush2.msra.mxu0 0.0
        %3184 = vmatprep.subr.mxu0 0.0
        %3185 = vmatpush2.msra.mxu0 0.0
        %3186 = vmatprep.subr.mxu0 0.0
        %3187 = vmatpush2.msra.mxu0 0.0
        %3188 = vmatprep.subr.mxu0 0.0
        %3189 = vmatpush2.msra.mxu0 0.0
        %3190 = vmatprep.subr.mxu0 0.0
        %3191 = vmatpush2.msra.mxu0 0.0
        %3192 = vmatprep.subr.mxu0 0.0
        %3193 = vmatpush2.msra.mxu0 0.0
        %3194 = vmatprep.subr.mxu0 0.0
        %3195 = vmatpush2.msra.mxu0 0.0
        %3196 = vmatprep.subr.mxu0 0.0
        %3197 = vmatpush2.msra.mxu0 0.0
        %3198 = vmatprep.subr.mxu0 0.0
        %3199 = vmatpush2.msra.mxu0 0.0
        %3200 = vmatprep.mubr.f32.mxu0 0.0
        %3201 = vmatmul.mubr.f32.gmra.mxu0 %v3051
        %v3202 = vpop.f32.mrf.mxu0
        %v3203 = vadd.f32 0.0, %v3202
        %v3204 = vpop.f32.mrf.mxu0
        %3205 = vmatprep.mubr.f32.mxu0 0.0
        %3206 = vmatmul.mubr.f32.gmra.mxu0 %v3054
        %v3207 = vpop.f32.mrf.mxu0
        %v3208 = vadd.f32 0.0, %v3207
        %v3209 = vpop.f32.mrf.mxu0
        %3210 = vdwg.mxu0
        %v3213 = vrot.slane %v3203, 1
        %v3214 = vrot.slane %v3208, 1
        %v3215 = vsel %vm471, %v3213, %v3214
        %v3218 = vadd.f32 %v3123, %v3215
        %v3219 = vadd.f32 %v3128, %v3214
        %s3220 = scalar_lea.vmem [#allocation5], 544
        %v3221 = vld [vmem:[%s3220] sm:$0xff]
        %v3222 = vld [vmem:[%s3220 + $0x8] sm:$0xff]
        %v3223 = vld [vmem:[%s3220 + $0x10] sm:$0xff]
        %v3224 = vld [vmem:[%s3220 + $0x18] sm:$0xff]
        %3225 = vmatprep.subr.mxu0 0.0
        %3226 = vmatpush1.msra.mxu0 0.0
        %3227 = vmatprep.subr.mxu0 0.0
        %3228 = vmatpush1.msra.mxu0 0.0
        %3229 = vmatprep.subr.mxu0 0.0
        %3230 = vmatpush1.msra.mxu0 0.0
        %3231 = vmatprep.subr.mxu0 0.0
        %3232 = vmatpush1.msra.mxu0 0.0
        %3233 = vmatprep.subr.mxu0 0.0
        %3234 = vmatpush1.msra.mxu0 0.0
        %3235 = vmatprep.subr.mxu0 0.0
        %3236 = vmatpush1.msra.mxu0 0.0
        %3237 = vmatprep.subr.mxu0 0.0
        %3238 = vmatpush1.msra.mxu0 0.0
        %3239 = vmatprep.subr.mxu0 0.0
        %3240 = vmatpush1.msra.mxu0 0.0
        %3241 = vmatprep.subr.mxu0 0.0
        %3242 = vmatpush1.msra.mxu0 0.0
        %3243 = vmatprep.subr.mxu0 0.0
        %3244 = vmatpush1.msra.mxu0 0.0
        %3245 = vmatprep.subr.mxu0 0.0
        %3246 = vmatpush1.msra.mxu0 0.0
        %3247 = vmatprep.subr.mxu0 0.0
        %3248 = vmatpush1.msra.mxu0 0.0
        %3249 = vmatprep.subr.mxu0 0.0
        %3250 = vmatpush1.msra.mxu0 %v3224
        %3251 = vmatprep.subr.mxu0 0.0
        %3252 = vmatpush1.msra.mxu0 %v3223
        %3253 = vmatprep.subr.mxu0 0.0
        %3254 = vmatpush1.msra.mxu0 %v3222
        %3255 = vmatprep.subr.mxu0 0.0
        %3256 = vmatpush1.msra.mxu0 %v3221
        %3257 = vmatprep.subr.mxu0 0.0
        %3258 = vmatpush2.msra.mxu0 0.0
        %3259 = vmatprep.subr.mxu0 0.0
        %3260 = vmatpush2.msra.mxu0 0.0
        %3261 = vmatprep.subr.mxu0 0.0
        %3262 = vmatpush2.msra.mxu0 0.0
        %3263 = vmatprep.subr.mxu0 0.0
        %3264 = vmatpush2.msra.mxu0 0.0
        %3265 = vmatprep.subr.mxu0 0.0
        %3266 = vmatpush2.msra.mxu0 0.0
        %3267 = vmatprep.subr.mxu0 0.0
        %3268 = vmatpush2.msra.mxu0 0.0
        %3269 = vmatprep.subr.mxu0 0.0
        %3270 = vmatpush2.msra.mxu0 0.0
        %3271 = vmatprep.subr.mxu0 0.0
        %3272 = vmatpush2.msra.mxu0 0.0
        %3273 = vmatprep.subr.mxu0 0.0
        %3274 = vmatpush2.msra.mxu0 0.0
        %3275 = vmatprep.subr.mxu0 0.0
        %3276 = vmatpush2.msra.mxu0 0.0
        %3277 = vmatprep.subr.mxu0 0.0
        %3278 = vmatpush2.msra.mxu0 0.0
        %3279 = vmatprep.subr.mxu0 0.0
        %3280 = vmatpush2.msra.mxu0 0.0
        %3281 = vmatprep.subr.mxu0 0.0
        %3282 = vmatpush2.msra.mxu0 0.0
        %3283 = vmatprep.subr.mxu0 0.0
        %3284 = vmatpush2.msra.mxu0 0.0
        %3285 = vmatprep.subr.mxu0 0.0
        %3286 = vmatpush2.msra.mxu0 0.0
        %3287 = vmatprep.subr.mxu0 0.0
        %3288 = vmatpush2.msra.mxu0 0.0
        %3289 = vmatprep.mubr.f32.mxu0 0.0
        %3290 = vmatmul.mubr.f32.gmra.mxu0 %v3051
        %v3291 = vpop.f32.mrf.mxu0
        %v3292 = vadd.f32 0.0, %v3291
        %v3293 = vpop.f32.mrf.mxu0
        %3294 = vmatprep.mubr.f32.mxu0 0.0
        %3295 = vmatmul.mubr.f32.gmra.mxu0 %v3054
        %v3296 = vpop.f32.mrf.mxu0
        %v3297 = vadd.f32 0.0, %v3296
        %v3298 = vpop.f32.mrf.mxu0
        %3299 = vdwg.mxu0
        %v3302 = vrot.slane %v3292, 2
        %v3303 = vrot.slane %v3297, 2
        %v3304 = vsel %vm561, %v3302, %v3303
        %v3307 = vadd.f32 %v3218, %v3304
        %v3308 = vadd.f32 %v3219, %v3303
        %s3309 = scalar_lea.vmem [#allocation5], 576
        %v3310 = vld [vmem:[%s3309] sm:$0xff]
        %v3311 = vld [vmem:[%s3309 + $0x8] sm:$0xff]
        %v3312 = vld [vmem:[%s3309 + $0x10] sm:$0xff]
        %v3313 = vld [vmem:[%s3309 + $0x18] sm:$0xff]
        %3314 = vmatprep.subr.mxu0 0.0
        %3315 = vmatpush1.msra.mxu0 0.0
        %3316 = vmatprep.subr.mxu0 0.0
        %3317 = vmatpush1.msra.mxu0 0.0
        %3318 = vmatprep.subr.mxu0 0.0
        %3319 = vmatpush1.msra.mxu0 0.0
        %3320 = vmatprep.subr.mxu0 0.0
        %3321 = vmatpush1.msra.mxu0 0.0
        %3322 = vmatprep.subr.mxu0 0.0
        %3323 = vmatpush1.msra.mxu0 0.0
        %3324 = vmatprep.subr.mxu0 0.0
        %3325 = vmatpush1.msra.mxu0 0.0
        %3326 = vmatprep.subr.mxu0 0.0
        %3327 = vmatpush1.msra.mxu0 0.0
        %3328 = vmatprep.subr.mxu0 0.0
        %3329 = vmatpush1.msra.mxu0 0.0
        %3330 = vmatprep.subr.mxu0 0.0
        %3331 = vmatpush1.msra.mxu0 0.0
        %3332 = vmatprep.subr.mxu0 0.0
        %3333 = vmatpush1.msra.mxu0 0.0
        %3334 = vmatprep.subr.mxu0 0.0
        %3335 = vmatpush1.msra.mxu0 0.0
        %3336 = vmatprep.subr.mxu0 0.0
        %3337 = vmatpush1.msra.mxu0 0.0
        %3338 = vmatprep.subr.mxu0 0.0
        %3339 = vmatpush1.msra.mxu0 %v3313
        %3340 = vmatprep.subr.mxu0 0.0
        %3341 = vmatpush1.msra.mxu0 %v3312
        %3342 = vmatprep.subr.mxu0 0.0
        %3343 = vmatpush1.msra.mxu0 %v3311
        %3344 = vmatprep.subr.mxu0 0.0
        %3345 = vmatpush1.msra.mxu0 %v3310
        %3346 = vmatprep.subr.mxu0 0.0
        %3347 = vmatpush2.msra.mxu0 0.0
        %3348 = vmatprep.subr.mxu0 0.0
        %3349 = vmatpush2.msra.mxu0 0.0
        %3350 = vmatprep.subr.mxu0 0.0
        %3351 = vmatpush2.msra.mxu0 0.0
        %3352 = vmatprep.subr.mxu0 0.0
        %3353 = vmatpush2.msra.mxu0 0.0
        %3354 = vmatprep.subr.mxu0 0.0
        %3355 = vmatpush2.msra.mxu0 0.0
        %3356 = vmatprep.subr.mxu0 0.0
        %3357 = vmatpush2.msra.mxu0 0.0
        %3358 = vmatprep.subr.mxu0 0.0
        %3359 = vmatpush2.msra.mxu0 0.0
        %3360 = vmatprep.subr.mxu0 0.0
        %3361 = vmatpush2.msra.mxu0 0.0
        %3362 = vmatprep.subr.mxu0 0.0
        %3363 = vmatpush2.msra.mxu0 0.0
        %3364 = vmatprep.subr.mxu0 0.0
        %3365 = vmatpush2.msra.mxu0 0.0
        %3366 = vmatprep.subr.mxu0 0.0
        %3367 = vmatpush2.msra.mxu0 0.0
        %3368 = vmatprep.subr.mxu0 0.0
        %3369 = vmatpush2.msra.mxu0 0.0
        %3370 = vmatprep.subr.mxu0 0.0
        %3371 = vmatpush2.msra.mxu0 0.0
        %3372 = vmatprep.subr.mxu0 0.0
        %3373 = vmatpush2.msra.mxu0 0.0
        %3374 = vmatprep.subr.mxu0 0.0
        %3375 = vmatpush2.msra.mxu0 0.0
        %3376 = vmatprep.subr.mxu0 0.0
        %3377 = vmatpush2.msra.mxu0 0.0
        %3378 = vmatprep.mubr.f32.mxu0 0.0
        %3379 = vmatmul.mubr.f32.gmra.mxu0 %v3051
        %v3380 = vpop.f32.mrf.mxu0
        %v3381 = vadd.f32 0.0, %v3380
        %v3382 = vpop.f32.mrf.mxu0
        %3383 = vmatprep.mubr.f32.mxu0 0.0
        %3384 = vmatmul.mubr.f32.gmra.mxu0 %v3054
        %v3385 = vpop.f32.mrf.mxu0
        %v3386 = vadd.f32 0.0, %v3385
        %v3387 = vpop.f32.mrf.mxu0
        %3388 = vdwg.mxu0
        %v3391 = vrot.slane %v3381, 3
        %v3392 = vrot.slane %v3386, 3
        %v3393 = vsel %vm651, %v3391, %v3392
        %v3396 = vadd.f32 %v3307, %v3393
        %v3397 = vadd.f32 %v3308, %v3392
        %s3398 = scalar_lea.vmem [#allocation5], 608
        %v3399 = vld [vmem:[%s3398] sm:$0xff]
        %v3400 = vld [vmem:[%s3398 + $0x8] sm:$0xff]
        %v3401 = vld [vmem:[%s3398 + $0x10] sm:$0xff]
        %v3402 = vld [vmem:[%s3398 + $0x18] sm:$0xff]
        %3403 = vmatprep.subr.mxu0 0.0
        %3404 = vmatpush1.msra.mxu0 0.0
        %3405 = vmatprep.subr.mxu0 0.0
        %3406 = vmatpush1.msra.mxu0 0.0
        %3407 = vmatprep.subr.mxu0 0.0
        %3408 = vmatpush1.msra.mxu0 0.0
        %3409 = vmatprep.subr.mxu0 0.0
        %3410 = vmatpush1.msra.mxu0 0.0
        %3411 = vmatprep.subr.mxu0 0.0
        %3412 = vmatpush1.msra.mxu0 0.0
        %3413 = vmatprep.subr.mxu0 0.0
        %3414 = vmatpush1.msra.mxu0 0.0
        %3415 = vmatprep.subr.mxu0 0.0
        %3416 = vmatpush1.msra.mxu0 0.0
        %3417 = vmatprep.subr.mxu0 0.0
        %3418 = vmatpush1.msra.mxu0 0.0
        %3419 = vmatprep.subr.mxu0 0.0
        %3420 = vmatpush1.msra.mxu0 0.0
        %3421 = vmatprep.subr.mxu0 0.0
        %3422 = vmatpush1.msra.mxu0 0.0
        %3423 = vmatprep.subr.mxu0 0.0
        %3424 = vmatpush1.msra.mxu0 0.0
        %3425 = vmatprep.subr.mxu0 0.0
        %3426 = vmatpush1.msra.mxu0 0.0
        %3427 = vmatprep.subr.mxu0 0.0
        %3428 = vmatpush1.msra.mxu0 %v3402
        %3429 = vmatprep.subr.mxu0 0.0
        %3430 = vmatpush1.msra.mxu0 %v3401
        %3431 = vmatprep.subr.mxu0 0.0
        %3432 = vmatpush1.msra.mxu0 %v3400
        %3433 = vmatprep.subr.mxu0 0.0
        %3434 = vmatpush1.msra.mxu0 %v3399
        %3435 = vmatprep.subr.mxu0 0.0
        %3436 = vmatpush2.msra.mxu0 0.0
        %3437 = vmatprep.subr.mxu0 0.0
        %3438 = vmatpush2.msra.mxu0 0.0
        %3439 = vmatprep.subr.mxu0 0.0
        %3440 = vmatpush2.msra.mxu0 0.0
        %3441 = vmatprep.subr.mxu0 0.0
        %3442 = vmatpush2.msra.mxu0 0.0
        %3443 = vmatprep.subr.mxu0 0.0
        %3444 = vmatpush2.msra.mxu0 0.0
        %3445 = vmatprep.subr.mxu0 0.0
        %3446 = vmatpush2.msra.mxu0 0.0
        %3447 = vmatprep.subr.mxu0 0.0
        %3448 = vmatpush2.msra.mxu0 0.0
        %3449 = vmatprep.subr.mxu0 0.0
        %3450 = vmatpush2.msra.mxu0 0.0
        %3451 = vmatprep.subr.mxu0 0.0
        %3452 = vmatpush2.msra.mxu0 0.0
        %3453 = vmatprep.subr.mxu0 0.0
        %3454 = vmatpush2.msra.mxu0 0.0
        %3455 = vmatprep.subr.mxu0 0.0
        %3456 = vmatpush2.msra.mxu0 0.0
        %3457 = vmatprep.subr.mxu0 0.0
        %3458 = vmatpush2.msra.mxu0 0.0
        %3459 = vmatprep.subr.mxu0 0.0
        %3460 = vmatpush2.msra.mxu0 0.0
        %3461 = vmatprep.subr.mxu0 0.0
        %3462 = vmatpush2.msra.mxu0 0.0
        %3463 = vmatprep.subr.mxu0 0.0
        %3464 = vmatpush2.msra.mxu0 0.0
        %3465 = vmatprep.subr.mxu0 0.0
        %3466 = vmatpush2.msra.mxu0 0.0
        %3467 = vmatprep.mubr.f32.mxu0 0.0
        %3468 = vmatmul.mubr.f32.gmra.mxu0 %v3051
        %v3469 = vpop.f32.mrf.mxu0
        %v3470 = vadd.f32 0.0, %v3469
        %v3471 = vpop.f32.mrf.mxu0
        %3472 = vmatprep.mubr.f32.mxu0 0.0
        %3473 = vmatmul.mubr.f32.gmra.mxu0 %v3054
        %v3474 = vpop.f32.mrf.mxu0
        %v3475 = vadd.f32 0.0, %v3474
        %v3476 = vpop.f32.mrf.mxu0
        %3477 = vdwg.mxu0
        %v3480 = vrot.slane %v3470, 4
        %v3481 = vrot.slane %v3475, 4
        %v3482 = vsel %vm296, %v3480, %v3481
        %v3485 = vadd.f32 %v3396, %v3482
        %v3486 = vadd.f32 %v3397, %v3481
        %s3487 = scalar_lea.vmem [#allocation7], 3
        %v3488 = vld [vmem:[%s3487] sm:$0x1]
        %v3490 = vlaneseq
        %v3491 = vshrl.u32 %v3490, 7
        %v3492 = vsub.s32 0, %v3491
        %v3493 = vrot.slane %v3488, %v3492
        %v3495 = vadd.f32 %v3485, %v3493
        %v3496 = vadd.f32 %v3486, %v3493
        %vm3497 = vcmp.ge.f32.partialorder %v3495, 0.0
        %vm3498 = vcmp.ge.f32.partialorder %v3496, 0.0
        %v3499 = vmul.f32 %v3495, 0.01
        %v3500 = vmul.f32 %v3496, 0.01
        %v3501 = vsel %vm3497, %v3495, %v3499
        %v3502 = vsel %vm3498, %v3496, %v3500
        %s3503 = scalar_lea.vmem [#allocation8], 480
        %v3504 = vld [vmem:[%s3503] sm:$0xff]
        %v3505 = vld [vmem:[%s3503 + $0x8] sm:$0xff]
        %v3506 = vld [vmem:[%s3503 + $0x10] sm:$0xff]
        %v3507 = vld [vmem:[%s3503 + $0x18] sm:$0xff]
        %v3509 = vsel %vm309, %v3501, 0
        %v3512 = vsel %vm309, %v3502, 0
        %3514 = vmatprep.subr.mxu0 0.0
        %3515 = vmatpush1.msra.mxu0 0.0
        %3516 = vmatprep.subr.mxu0 0.0
        %3517 = vmatpush1.msra.mxu0 0.0
        %3518 = vmatprep.subr.mxu0 0.0
        %3519 = vmatpush1.msra.mxu0 0.0
        %3520 = vmatprep.subr.mxu0 0.0
        %3521 = vmatpush1.msra.mxu0 0.0
        %3522 = vmatprep.subr.mxu0 0.0
        %3523 = vmatpush1.msra.mxu0 0.0
        %3524 = vmatprep.subr.mxu0 0.0
        %3525 = vmatpush1.msra.mxu0 0.0
        %3526 = vmatprep.subr.mxu0 0.0
        %3527 = vmatpush1.msra.mxu0 0.0
        %3528 = vmatprep.subr.mxu0 0.0
        %3529 = vmatpush1.msra.mxu0 0.0
        %3530 = vmatprep.subr.mxu0 0.0
        %3531 = vmatpush1.msra.mxu0 0.0
        %3532 = vmatprep.subr.mxu0 0.0
        %3533 = vmatpush1.msra.mxu0 0.0
        %3534 = vmatprep.subr.mxu0 0.0
        %3535 = vmatpush1.msra.mxu0 0.0
        %3536 = vmatprep.subr.mxu0 0.0
        %3537 = vmatpush1.msra.mxu0 0.0
        %3538 = vmatprep.subr.mxu0 0.0
        %3539 = vmatpush1.msra.mxu0 %v3507
        %3540 = vmatprep.subr.mxu0 0.0
        %3541 = vmatpush1.msra.mxu0 %v3506
        %3542 = vmatprep.subr.mxu0 0.0
        %3543 = vmatpush1.msra.mxu0 %v3505
        %3544 = vmatprep.subr.mxu0 0.0
        %3545 = vmatpush1.msra.mxu0 %v3504
        %3546 = vmatprep.subr.mxu0 0.0
        %3547 = vmatpush2.msra.mxu0 0.0
        %3548 = vmatprep.subr.mxu0 0.0
        %3549 = vmatpush2.msra.mxu0 0.0
        %3550 = vmatprep.subr.mxu0 0.0
        %3551 = vmatpush2.msra.mxu0 0.0
        %3552 = vmatprep.subr.mxu0 0.0
        %3553 = vmatpush2.msra.mxu0 0.0
        %3554 = vmatprep.subr.mxu0 0.0
        %3555 = vmatpush2.msra.mxu0 0.0
        %3556 = vmatprep.subr.mxu0 0.0
        %3557 = vmatpush2.msra.mxu0 0.0
        %3558 = vmatprep.subr.mxu0 0.0
        %3559 = vmatpush2.msra.mxu0 0.0
        %3560 = vmatprep.subr.mxu0 0.0
        %3561 = vmatpush2.msra.mxu0 0.0
        %3562 = vmatprep.subr.mxu0 0.0
        %3563 = vmatpush2.msra.mxu0 0.0
        %3564 = vmatprep.subr.mxu0 0.0
        %3565 = vmatpush2.msra.mxu0 0.0
        %3566 = vmatprep.subr.mxu0 0.0
        %3567 = vmatpush2.msra.mxu0 0.0
        %3568 = vmatprep.subr.mxu0 0.0
        %3569 = vmatpush2.msra.mxu0 0.0
        %3570 = vmatprep.subr.mxu0 0.0
        %3571 = vmatpush2.msra.mxu0 0.0
        %3572 = vmatprep.subr.mxu0 0.0
        %3573 = vmatpush2.msra.mxu0 0.0
        %3574 = vmatprep.subr.mxu0 0.0
        %3575 = vmatpush2.msra.mxu0 0.0
        %3576 = vmatprep.subr.mxu0 0.0
        %3577 = vmatpush2.msra.mxu0 0.0
        %3578 = vmatprep.mubr.f32.mxu0 0.0
        %3579 = vmatmul.mubr.f32.gmra.mxu0 %v3509
        %v3580 = vpop.f32.mrf.mxu0
        %v3581 = vadd.f32 0.0, %v3580
        %v3582 = vpop.f32.mrf.mxu0
        %3583 = vmatprep.mubr.f32.mxu0 0.0
        %3584 = vmatmul.mubr.f32.gmra.mxu0 %v3512
        %v3585 = vpop.f32.mrf.mxu0
        %v3586 = vpop.f32.mrf.mxu0
        %3587 = vdwg.mxu0
        %s3588 = scalar_lea.vmem [#allocation8], 512
        %v3589 = vld [vmem:[%s3588] sm:$0xff]
        %v3590 = vld [vmem:[%s3588 + $0x8] sm:$0xff]
        %v3591 = vld [vmem:[%s3588 + $0x10] sm:$0xff]
        %v3592 = vld [vmem:[%s3588 + $0x18] sm:$0xff]
        %3593 = vmatprep.subr.mxu0 0.0
        %3594 = vmatpush1.msra.mxu0 0.0
        %3595 = vmatprep.subr.mxu0 0.0
        %3596 = vmatpush1.msra.mxu0 0.0
        %3597 = vmatprep.subr.mxu0 0.0
        %3598 = vmatpush1.msra.mxu0 0.0
        %3599 = vmatprep.subr.mxu0 0.0
        %3600 = vmatpush1.msra.mxu0 0.0
        %3601 = vmatprep.subr.mxu0 0.0
        %3602 = vmatpush1.msra.mxu0 0.0
        %3603 = vmatprep.subr.mxu0 0.0
        %3604 = vmatpush1.msra.mxu0 0.0
        %3605 = vmatprep.subr.mxu0 0.0
        %3606 = vmatpush1.msra.mxu0 0.0
        %3607 = vmatprep.subr.mxu0 0.0
        %3608 = vmatpush1.msra.mxu0 0.0
        %3609 = vmatprep.subr.mxu0 0.0
        %3610 = vmatpush1.msra.mxu0 0.0
        %3611 = vmatprep.subr.mxu0 0.0
        %3612 = vmatpush1.msra.mxu0 0.0
        %3613 = vmatprep.subr.mxu0 0.0
        %3614 = vmatpush1.msra.mxu0 0.0
        %3615 = vmatprep.subr.mxu0 0.0
        %3616 = vmatpush1.msra.mxu0 0.0
        %3617 = vmatprep.subr.mxu0 0.0
        %3618 = vmatpush1.msra.mxu0 %v3592
        %3619 = vmatprep.subr.mxu0 0.0
        %3620 = vmatpush1.msra.mxu0 %v3591
        %3621 = vmatprep.subr.mxu0 0.0
        %3622 = vmatpush1.msra.mxu0 %v3590
        %3623 = vmatprep.subr.mxu0 0.0
        %3624 = vmatpush1.msra.mxu0 %v3589
        %3625 = vmatprep.subr.mxu0 0.0
        %3626 = vmatpush2.msra.mxu0 0.0
        %3627 = vmatprep.subr.mxu0 0.0
        %3628 = vmatpush2.msra.mxu0 0.0
        %3629 = vmatprep.subr.mxu0 0.0
        %3630 = vmatpush2.msra.mxu0 0.0
        %3631 = vmatprep.subr.mxu0 0.0
        %3632 = vmatpush2.msra.mxu0 0.0
        %3633 = vmatprep.subr.mxu0 0.0
        %3634 = vmatpush2.msra.mxu0 0.0
        %3635 = vmatprep.subr.mxu0 0.0
        %3636 = vmatpush2.msra.mxu0 0.0
        %3637 = vmatprep.subr.mxu0 0.0
        %3638 = vmatpush2.msra.mxu0 0.0
        %3639 = vmatprep.subr.mxu0 0.0
        %3640 = vmatpush2.msra.mxu0 0.0
        %3641 = vmatprep.subr.mxu0 0.0
        %3642 = vmatpush2.msra.mxu0 0.0
        %3643 = vmatprep.subr.mxu0 0.0
        %3644 = vmatpush2.msra.mxu0 0.0
        %3645 = vmatprep.subr.mxu0 0.0
        %3646 = vmatpush2.msra.mxu0 0.0
        %3647 = vmatprep.subr.mxu0 0.0
        %3648 = vmatpush2.msra.mxu0 0.0
        %3649 = vmatprep.subr.mxu0 0.0
        %3650 = vmatpush2.msra.mxu0 0.0
        %3651 = vmatprep.subr.mxu0 0.0
        %3652 = vmatpush2.msra.mxu0 0.0
        %3653 = vmatprep.subr.mxu0 0.0
        %3654 = vmatpush2.msra.mxu0 0.0
        %3655 = vmatprep.subr.mxu0 0.0
        %3656 = vmatpush2.msra.mxu0 0.0
        %3657 = vmatprep.mubr.f32.mxu0 0.0
        %3658 = vmatmul.mubr.f32.gmra.mxu0 %v3509
        %v3659 = vpop.f32.mrf.mxu0
        %v3660 = vadd.f32 0.0, %v3659
        %v3661 = vpop.f32.mrf.mxu0
        %3662 = vmatprep.mubr.f32.mxu0 0.0
        %3663 = vmatmul.mubr.f32.gmra.mxu0 %v3512
        %v3664 = vpop.f32.mrf.mxu0
        %v3665 = vadd.f32 0.0, %v3664
        %v3666 = vpop.f32.mrf.mxu0
        %3667 = vdwg.mxu0
        %v3670 = vrot.slane %v3660, 1
        %v3671 = vrot.slane %v3665, 1
        %v3672 = vsel %vm471, %v3670, %v3671
        %v3674 = vadd.f32 %v3581, %v3672
        %s3675 = scalar_lea.vmem [#allocation8], 544
        %v3676 = vld [vmem:[%s3675] sm:$0xff]
        %v3677 = vld [vmem:[%s3675 + $0x8] sm:$0xff]
        %v3678 = vld [vmem:[%s3675 + $0x10] sm:$0xff]
        %v3679 = vld [vmem:[%s3675 + $0x18] sm:$0xff]
        %3680 = vmatprep.subr.mxu0 0.0
        %3681 = vmatpush1.msra.mxu0 0.0
        %3682 = vmatprep.subr.mxu0 0.0
        %3683 = vmatpush1.msra.mxu0 0.0
        %3684 = vmatprep.subr.mxu0 0.0
        %3685 = vmatpush1.msra.mxu0 0.0
        %3686 = vmatprep.subr.mxu0 0.0
        %3687 = vmatpush1.msra.mxu0 0.0
        %3688 = vmatprep.subr.mxu0 0.0
        %3689 = vmatpush1.msra.mxu0 0.0
        %3690 = vmatprep.subr.mxu0 0.0
        %3691 = vmatpush1.msra.mxu0 0.0
        %3692 = vmatprep.subr.mxu0 0.0
        %3693 = vmatpush1.msra.mxu0 0.0
        %3694 = vmatprep.subr.mxu0 0.0
        %3695 = vmatpush1.msra.mxu0 0.0
        %3696 = vmatprep.subr.mxu0 0.0
        %3697 = vmatpush1.msra.mxu0 0.0
        %3698 = vmatprep.subr.mxu0 0.0
        %3699 = vmatpush1.msra.mxu0 0.0
        %3700 = vmatprep.subr.mxu0 0.0
        %3701 = vmatpush1.msra.mxu0 0.0
        %3702 = vmatprep.subr.mxu0 0.0
        %3703 = vmatpush1.msra.mxu0 0.0
        %3704 = vmatprep.subr.mxu0 0.0
        %3705 = vmatpush1.msra.mxu0 %v3679
        %3706 = vmatprep.subr.mxu0 0.0
        %3707 = vmatpush1.msra.mxu0 %v3678
        %3708 = vmatprep.subr.mxu0 0.0
        %3709 = vmatpush1.msra.mxu0 %v3677
        %3710 = vmatprep.subr.mxu0 0.0
        %3711 = vmatpush1.msra.mxu0 %v3676
        %3712 = vmatprep.subr.mxu0 0.0
        %3713 = vmatpush2.msra.mxu0 0.0
        %3714 = vmatprep.subr.mxu0 0.0
        %3715 = vmatpush2.msra.mxu0 0.0
        %3716 = vmatprep.subr.mxu0 0.0
        %3717 = vmatpush2.msra.mxu0 0.0
        %3718 = vmatprep.subr.mxu0 0.0
        %3719 = vmatpush2.msra.mxu0 0.0
        %3720 = vmatprep.subr.mxu0 0.0
        %3721 = vmatpush2.msra.mxu0 0.0
        %3722 = vmatprep.subr.mxu0 0.0
        %3723 = vmatpush2.msra.mxu0 0.0
        %3724 = vmatprep.subr.mxu0 0.0
        %3725 = vmatpush2.msra.mxu0 0.0
        %3726 = vmatprep.subr.mxu0 0.0
        %3727 = vmatpush2.msra.mxu0 0.0
        %3728 = vmatprep.subr.mxu0 0.0
        %3729 = vmatpush2.msra.mxu0 0.0
        %3730 = vmatprep.subr.mxu0 0.0
        %3731 = vmatpush2.msra.mxu0 0.0
        %3732 = vmatprep.subr.mxu0 0.0
        %3733 = vmatpush2.msra.mxu0 0.0
        %3734 = vmatprep.subr.mxu0 0.0
        %3735 = vmatpush2.msra.mxu0 0.0
        %3736 = vmatprep.subr.mxu0 0.0
        %3737 = vmatpush2.msra.mxu0 0.0
        %3738 = vmatprep.subr.mxu0 0.0
        %3739 = vmatpush2.msra.mxu0 0.0
        %3740 = vmatprep.subr.mxu0 0.0
        %3741 = vmatpush2.msra.mxu0 0.0
        %3742 = vmatprep.subr.mxu0 0.0
        %3743 = vmatpush2.msra.mxu0 0.0
        %3744 = vmatprep.mubr.f32.mxu0 0.0
        %3745 = vmatmul.mubr.f32.gmra.mxu0 %v3509
        %v3746 = vpop.f32.mrf.mxu0
        %v3747 = vadd.f32 0.0, %v3746
        %v3748 = vpop.f32.mrf.mxu0
        %3749 = vmatprep.mubr.f32.mxu0 0.0
        %3750 = vmatmul.mubr.f32.gmra.mxu0 %v3512
        %v3751 = vpop.f32.mrf.mxu0
        %v3752 = vadd.f32 0.0, %v3751
        %v3753 = vpop.f32.mrf.mxu0
        %3754 = vdwg.mxu0
        %v3757 = vrot.slane %v3747, 2
        %v3758 = vrot.slane %v3752, 2
        %v3759 = vsel %vm561, %v3757, %v3758
        %v3761 = vadd.f32 %v3674, %v3759
        %s3762 = scalar_lea.vmem [#allocation8], 576
        %v3763 = vld [vmem:[%s3762] sm:$0xff]
        %v3764 = vld [vmem:[%s3762 + $0x8] sm:$0xff]
        %v3765 = vld [vmem:[%s3762 + $0x10] sm:$0xff]
        %v3766 = vld [vmem:[%s3762 + $0x18] sm:$0xff]
        %3767 = vmatprep.subr.mxu0 0.0
        %3768 = vmatpush1.msra.mxu0 0.0
        %3769 = vmatprep.subr.mxu0 0.0
        %3770 = vmatpush1.msra.mxu0 0.0
        %3771 = vmatprep.subr.mxu0 0.0
        %3772 = vmatpush1.msra.mxu0 0.0
        %3773 = vmatprep.subr.mxu0 0.0
        %3774 = vmatpush1.msra.mxu0 0.0
        %3775 = vmatprep.subr.mxu0 0.0
        %3776 = vmatpush1.msra.mxu0 0.0
        %3777 = vmatprep.subr.mxu0 0.0
        %3778 = vmatpush1.msra.mxu0 0.0
        %3779 = vmatprep.subr.mxu0 0.0
        %3780 = vmatpush1.msra.mxu0 0.0
        %3781 = vmatprep.subr.mxu0 0.0
        %3782 = vmatpush1.msra.mxu0 0.0
        %3783 = vmatprep.subr.mxu0 0.0
        %3784 = vmatpush1.msra.mxu0 0.0
        %3785 = vmatprep.subr.mxu0 0.0
        %3786 = vmatpush1.msra.mxu0 0.0
        %3787 = vmatprep.subr.mxu0 0.0
        %3788 = vmatpush1.msra.mxu0 0.0
        %3789 = vmatprep.subr.mxu0 0.0
        %3790 = vmatpush1.msra.mxu0 0.0
        %3791 = vmatprep.subr.mxu0 0.0
        %3792 = vmatpush1.msra.mxu0 %v3766
        %3793 = vmatprep.subr.mxu0 0.0
        %3794 = vmatpush1.msra.mxu0 %v3765
        %3795 = vmatprep.subr.mxu0 0.0
        %3796 = vmatpush1.msra.mxu0 %v3764
        %3797 = vmatprep.subr.mxu0 0.0
        %3798 = vmatpush1.msra.mxu0 %v3763
        %3799 = vmatprep.subr.mxu0 0.0
        %3800 = vmatpush2.msra.mxu0 0.0
        %3801 = vmatprep.subr.mxu0 0.0
        %3802 = vmatpush2.msra.mxu0 0.0
        %3803 = vmatprep.subr.mxu0 0.0
        %3804 = vmatpush2.msra.mxu0 0.0
        %3805 = vmatprep.subr.mxu0 0.0
        %3806 = vmatpush2.msra.mxu0 0.0
        %3807 = vmatprep.subr.mxu0 0.0
        %3808 = vmatpush2.msra.mxu0 0.0
        %3809 = vmatprep.subr.mxu0 0.0
        %3810 = vmatpush2.msra.mxu0 0.0
        %3811 = vmatprep.subr.mxu0 0.0
        %3812 = vmatpush2.msra.mxu0 0.0
        %3813 = vmatprep.subr.mxu0 0.0
        %3814 = vmatpush2.msra.mxu0 0.0
        %3815 = vmatprep.subr.mxu0 0.0
        %3816 = vmatpush2.msra.mxu0 0.0
        %3817 = vmatprep.subr.mxu0 0.0
        %3818 = vmatpush2.msra.mxu0 0.0
        %3819 = vmatprep.subr.mxu0 0.0
        %3820 = vmatpush2.msra.mxu0 0.0
        %3821 = vmatprep.subr.mxu0 0.0
        %3822 = vmatpush2.msra.mxu0 0.0
        %3823 = vmatprep.subr.mxu0 0.0
        %3824 = vmatpush2.msra.mxu0 0.0
        %3825 = vmatprep.subr.mxu0 0.0
        %3826 = vmatpush2.msra.mxu0 0.0
        %3827 = vmatprep.subr.mxu0 0.0
        %3828 = vmatpush2.msra.mxu0 0.0
        %3829 = vmatprep.subr.mxu0 0.0
        %3830 = vmatpush2.msra.mxu0 0.0
        %3831 = vmatprep.mubr.f32.mxu0 0.0
        %3832 = vmatmul.mubr.f32.gmra.mxu0 %v3509
        %v3833 = vpop.f32.mrf.mxu0
        %v3834 = vadd.f32 0.0, %v3833
        %v3835 = vpop.f32.mrf.mxu0
        %3836 = vmatprep.mubr.f32.mxu0 0.0
        %3837 = vmatmul.mubr.f32.gmra.mxu0 %v3512
        %v3838 = vpop.f32.mrf.mxu0
        %v3839 = vadd.f32 0.0, %v3838
        %v3840 = vpop.f32.mrf.mxu0
        %3841 = vdwg.mxu0
        %v3844 = vrot.slane %v3834, 3
        %v3845 = vrot.slane %v3839, 3
        %v3846 = vsel %vm651, %v3844, %v3845
        %v3848 = vadd.f32 %v3761, %v3846
        %s3849 = scalar_lea.vmem [#allocation8], 608
        %v3850 = vld [vmem:[%s3849] sm:$0xff]
        %v3851 = vld [vmem:[%s3849 + $0x8] sm:$0xff]
        %v3852 = vld [vmem:[%s3849 + $0x10] sm:$0xff]
        %v3853 = vld [vmem:[%s3849 + $0x18] sm:$0xff]
        %3854 = vmatprep.subr.mxu0 0.0
        %3855 = vmatpush1.msra.mxu0 0.0
        %3856 = vmatprep.subr.mxu0 0.0
        %3857 = vmatpush1.msra.mxu0 0.0
        %3858 = vmatprep.subr.mxu0 0.0
        %3859 = vmatpush1.msra.mxu0 0.0
        %3860 = vmatprep.subr.mxu0 0.0
        %3861 = vmatpush1.msra.mxu0 0.0
        %3862 = vmatprep.subr.mxu0 0.0
        %3863 = vmatpush1.msra.mxu0 0.0
        %3864 = vmatprep.subr.mxu0 0.0
        %3865 = vmatpush1.msra.mxu0 0.0
        %3866 = vmatprep.subr.mxu0 0.0
        %3867 = vmatpush1.msra.mxu0 0.0
        %3868 = vmatprep.subr.mxu0 0.0
        %3869 = vmatpush1.msra.mxu0 0.0
        %3870 = vmatprep.subr.mxu0 0.0
        %3871 = vmatpush1.msra.mxu0 0.0
        %3872 = vmatprep.subr.mxu0 0.0
        %3873 = vmatpush1.msra.mxu0 0.0
        %3874 = vmatprep.subr.mxu0 0.0
        %3875 = vmatpush1.msra.mxu0 0.0
        %3876 = vmatprep.subr.mxu0 0.0
        %3877 = vmatpush1.msra.mxu0 0.0
        %3878 = vmatprep.subr.mxu0 0.0
        %3879 = vmatpush1.msra.mxu0 %v3853
        %3880 = vmatprep.subr.mxu0 0.0
        %3881 = vmatpush1.msra.mxu0 %v3852
        %3882 = vmatprep.subr.mxu0 0.0
        %3883 = vmatpush1.msra.mxu0 %v3851
        %3884 = vmatprep.subr.mxu0 0.0
        %3885 = vmatpush1.msra.mxu0 %v3850
        %3886 = vmatprep.subr.mxu0 0.0
        %3887 = vmatpush2.msra.mxu0 0.0
        %3888 = vmatprep.subr.mxu0 0.0
        %3889 = vmatpush2.msra.mxu0 0.0
        %3890 = vmatprep.subr.mxu0 0.0
        %3891 = vmatpush2.msra.mxu0 0.0
        %3892 = vmatprep.subr.mxu0 0.0
        %3893 = vmatpush2.msra.mxu0 0.0
        %3894 = vmatprep.subr.mxu0 0.0
        %3895 = vmatpush2.msra.mxu0 0.0
        %3896 = vmatprep.subr.mxu0 0.0
        %3897 = vmatpush2.msra.mxu0 0.0
        %3898 = vmatprep.subr.mxu0 0.0
        %3899 = vmatpush2.msra.mxu0 0.0
        %3900 = vmatprep.subr.mxu0 0.0
        %3901 = vmatpush2.msra.mxu0 0.0
        %3902 = vmatprep.subr.mxu0 0.0
        %3903 = vmatpush2.msra.mxu0 0.0
        %3904 = vmatprep.subr.mxu0 0.0
        %3905 = vmatpush2.msra.mxu0 0.0
        %3906 = vmatprep.subr.mxu0 0.0
        %3907 = vmatpush2.msra.mxu0 0.0
        %3908 = vmatprep.subr.mxu0 0.0
        %3909 = vmatpush2.msra.mxu0 0.0
        %3910 = vmatprep.subr.mxu0 0.0
        %3911 = vmatpush2.msra.mxu0 0.0
        %3912 = vmatprep.subr.mxu0 0.0
        %3913 = vmatpush2.msra.mxu0 0.0
        %3914 = vmatprep.subr.mxu0 0.0
        %3915 = vmatpush2.msra.mxu0 0.0
        %3916 = vmatprep.subr.mxu0 0.0
        %3917 = vmatpush2.msra.mxu0 0.0
        %3918 = vmatprep.mubr.f32.mxu0 0.0
        %3919 = vmatmul.mubr.f32.gmra.mxu0 %v3509
        %v3920 = vpop.f32.mrf.mxu0
        %v3921 = vadd.f32 0.0, %v3920
        %v3922 = vpop.f32.mrf.mxu0
        %3923 = vmatprep.mubr.f32.mxu0 0.0
        %3924 = vmatmul.mubr.f32.gmra.mxu0 %v3512
        %v3925 = vpop.f32.mrf.mxu0
        %v3926 = vadd.f32 0.0, %v3925
        %v3927 = vpop.f32.mrf.mxu0
        %3928 = vdwg.mxu0
        %v3931 = vrot.slane %v3921, 4
        %v3932 = vrot.slane %v3926, 4
        %v3933 = vsel %vm296, %v3931, %v3932
        %v3935 = vadd.f32 %v3848, %v3933
        %s3936 = scalar_lea.vmem %s4, 3
        %v3937 = vld [vmem:[%s3936] sm:$0x1]
        %v3939 = vlaneseq
        %v3940 = vshrl.u32 %v3939, 7
        %v3941 = vsub.s32 0, %v3940
        %v3942 = vrot.slane %v3937, %v3941
        %v3944 = vadd.f32 %v3935, %v3942
        %v3945 = vtanh.pop %v3944
        %3947 = vrot.lane.b32.xlu0 %v3945, 32
        %v3948 = vpop.permute.xlu0 %3947
        %v3950 = vsub.f32 %v2112, %v3948
        %v3951 = vsel %vm309, %v3031, %v3950
        %vm3952 = vcmask 523264
        %3953 = vst.msk [vmem:[%s283] sm:$0xff] %vm3952, %v3951
        %s3954 = sand.u32 %s142, 1
        %s3955 = scalar_lea.sflag [#allocation4], %s3954
        %s3956 = sand.u32 %s142, 1
        %s3957 = smul.addr %s3956, 8
        %s3958 = scalar_lea.vmem [#allocation10], %s3957
        // Predicated region
        $region57: #{tpu_custom_call.1} parent=39 // pred_check
          %p3959 = pneg %p152
        $region58: #{tpu_custom_call.1} parent=39 // pred_check_branch
          %3961 = sbr.rel (%p3959) target = $region60
        $region59: #{tpu_custom_call.1} parent=39 // pred_region
          %s3963 = ssub.s32 128, 128
          %3964 = vsyncadd %s3955, %s3963
          %s3965 = smul.addr %s24, 128
          %s3966 = scalar_lea.hbm %s5, %s3965
          %s3968 = sshll.u32 %s3958, 4
          %s3969 = int_to_ptr.vmem [resolvable:$true] %s3968
          %3971 = dma.vmem_to_hbm [thread:$0]  %s3969, 128, %s3966, %s3955
        $region60: #{tpu_custom_call.1} parent=39 // pred_fallthru
          _
      $region40: #{tpu_custom_call.1} parent=5 // pred_fallthru
        _
      %p3972 = scmp.le.s32.totalorder 2, %s19
      // Predicated region
      $region61: #{tpu_custom_call.1} parent=5 // pred_check
        %p3973 = pneg %p3972
      $region62: #{tpu_custom_call.1} parent=5 // pred_check_branch
        %3975 = sbr.rel (%p3973) target = $region64
      $region63: #{tpu_custom_call.1} parent=5 // pred_region
        %s3976 = ssub.s32 %s19, 2
        // Predicated region
        $region65: #{tpu_custom_call.1} parent=63 // pred_check
          %p3977 = pneg %p158
        $region66: #{tpu_custom_call.1} parent=63 // pred_check_branch
          %3979 = sbr.rel (%p3977) target = $region68
        $region67: #{tpu_custom_call.1} parent=63 // pred_region
          %s3980 = sand.u32 %s143, 1
          %s3981 = scalar_lea.sflag [#allocation4], %s3980
          %s3982 = sand.u32 %s143, 1
          %s3983 = smul.addr %s3982, 8
          %s3984 = scalar_lea.vmem [#allocation10], %s3983
          %3985 = dma.done %s3981, 128
        $region68: #{tpu_custom_call.1} parent=63 // pred_fallthru
          _
      $region64: #{tpu_custom_call.1} parent=5 // pred_fallthru
        _
    $region6: #{tpu_custom_call.1} parent=1 // loop_footer
      %s23 = sadd.s32 1, %s19
    $region7: #{tpu_custom_call.1} parent=1 // loop_footer_branch
      %18 = sbr.rel target = $region3
    $region8: #{tpu_custom_call.1} parent=1 // loop_exit
      _
    %3986 = vsyncpa [#allocation3], 1
    %s3987 = scalar_lea.sflag [#allocation3], 1
    %3988 = vsyncpa %s3987, 1
    %3989 = vsyncpa [#allocation6], 1
    %3990 = vsyncpa [#allocation9], 1
    %3991 = vsyncpa [#allocation4], 1
    %s3992 = scalar_lea.sflag [#allocation4], 1
    %3993 = vsyncpa %s3992, 1

</llo_original>
